<compile_context>
chip_gen: v5e
topology: v5e:2x2
jax: 0.10.0
libtpu: 0.0.40
codegen_flags: <defaults>
</compile_context>

<pallas_src>
import functools

import jax
import jax.numpy as jnp
from jax.experimental import pallas as pl
from jax.experimental.pallas import tpu as pltpu


def _round_up(x, m):
    return ((x + m - 1) // m) * m


def _itemsize(dt):
    return jnp.dtype(dt).itemsize


def _default_vmem_budget():
    """Generation-aware VMEM budget (also used as vmem_limit_bytes)."""
    cap = 64 << 20                      # conservative floor (v7x physical VMEM)
    try:
        info = pltpu.get_tpu_info()
        cap = int(getattr(info, "vmem_capacity_bytes", cap)) or cap
    except Exception:
        pass
    # ~75% of physical, capped at 100 MiB: 48 MiB on v7x, 96 MiB on v5e/v6e.
    return max(16 << 20, min(cap * 3 // 4, 100 << 20))


def _multi_tensorcore_chip():
    """True on dual-TensorCore chips (v7x) -> aim for >=4 token tiles."""
    try:
        kind = jax.devices()[0].device_kind.lower()
        return ("v7" in kind) or ("7x" in kind)
    except Exception:
        return False


# ----------------------------------------------------------------------------
# Kernels
# ----------------------------------------------------------------------------
def _mlp_res_kernel(x_ref, gamma_ref, beta_ref, w1_ref, b1_ref, w2_ref, b2_ref,
                    o_ref, *, eps):
    """Weights-resident path: one grid axis over token tiles."""
    # LayerNorm over the feature dim (f32, biased variance -> matches nn.LayerNorm).
    x = x_ref[...].astype(jnp.float32)
    mean = jnp.mean(x, axis=-1, keepdims=True)
    centered = x - mean
    var = jnp.mean(centered * centered, axis=-1, keepdims=True)
    xn = centered * jax.lax.rsqrt(var + eps)
    xn = xn * gamma_ref[...] + beta_ref[...]                       # (TM, D) f32

    # fc1 + ReLU (bf16 operands, f32 MXU accumulation); dropout1 = identity (eval).
    h = jnp.dot(xn.astype(w1_ref.dtype), w1_ref[...],
                preferred_element_type=jnp.float32) + b1_ref[...]
    h = jnp.maximum(h, 0.0)                                        # (TM, H)

    # fc2; dropout2 = identity (eval).
    y = jnp.dot(h.astype(w2_ref.dtype), w2_ref[...],
                preferred_element_type=jnp.float32) + b2_ref[...]  # (TM, D)

    # Residual: re-read x from the ref (keeps the f32 copy's live range short).
    o_ref[...] = (x_ref[...].astype(jnp.float32) + y).astype(o_ref.dtype)


def _mlp_res_kernel_hid(x_ref, gamma_ref, beta_ref, w1_ref, b1_ref, w2_ref, b2_ref,
                        o_ref, xn_ref, acc_ref, *, eps):
    """Hidden-dim tiled path: grid = (token tiles, hid tiles); accumulate fc2 in f32."""
    k = pl.program_id(1)

    @pl.when(k == 0)
    def _():
        x = x_ref[...].astype(jnp.float32)
        mean = jnp.mean(x, axis=-1, keepdims=True)
        centered = x - mean
        var = jnp.mean(centered * centered, axis=-1, keepdims=True)
        xn = centered * jax.lax.rsqrt(var + eps) * gamma_ref[...] + beta_ref[...]
        xn_ref[...] = xn.astype(xn_ref.dtype)
        acc_ref[...] = jnp.zeros_like(acc_ref)

    h = jnp.dot(xn_ref[...], w1_ref[...],
                preferred_element_type=jnp.float32) + b1_ref[...]
    h = jnp.maximum(h, 0.0)                                        # (TM, TH)
    acc_ref[...] += jnp.dot(h.astype(w2_ref.dtype), w2_ref[...],
                            preferred_element_type=jnp.float32)

    @pl.when(k == pl.num_programs(1) - 1)
    def _():
        y = acc_ref[...] + b2_ref[...]
        o_ref[...] = (x_ref[...].astype(jnp.float32) + y).astype(o_ref.dtype)


# ----------------------------------------------------------------------------
# Tile sizing (accounts for resident weights, bf16 temporaries, double buffers)
# ----------------------------------------------------------------------------
def _pick_tm(T, D, H, xb, ob, wb, budget, *, want=512, multi_tc=False):
    """Token-tile rows for the weights-resident path; None if it does not fit."""
    weights = D * H * wb + H * D * wb + 3 * D * 4 + H * 4          # single-buffered residents
    per_row = (2 * D * xb + 2 * D * ob                             # double-buffered x / out blocks
               + 3 * D * 4 + D * wb                                # f32 LN temps + bf16 xn
               + H * 4 + H * wb                                    # f32 + bf16 hidden
               + D * 4)                                            # f32 y
    avail = budget - weights
    if avail < 8 * per_row:
        return None
    tm = min(want, avail // per_row)
    tm = max(8, (tm // 8) * 8)
    # Keep >=2 pipelined grid steps per TensorCore (>=4 total on dual-TC v7x),
    # while keeping the MXU M dimension >=128.
    steps = 4 if multi_tc else 2
    if T > steps * 128:
        tm = min(tm, max(128, _round_up(pl.cdiv(T, steps), 8)))
    return min(tm, _round_up(T, 8))


def _pick_hid_tiling(T, D, H, xb, ob, wb, budget, *, hid_tile=None):
    """(tm, th) for the hidden-dim tiled path; (None, None) if nothing fits."""
    th_cands = [hid_tile] if hid_tile is not None else [1024, 512, 256, 128]
    tm_cands = [512, 256, 128, 64, 32, 16, 8]
    t_cap = _round_up(T, 8)
    h_cap = _round_up(H, 128)
    for tm0 in tm_cands:
        tm = min(tm0, t_cap)
        for th0 in th_cands:
            th = min(th0, h_cap)
            resident = 3 * D * 4                                        # gamma, beta, b2
            weights_step = 2 * (D * th * wb + th * D * wb + th * 4)     # w1/w2/b1 tiles (x2 buffers)
            scratch = tm * D * wb + tm * D * 4                          # xn scratch + f32 accumulator
            io = 2 * tm * D * xb + 2 * tm * D * ob                      # x / out blocks
            temps = tm * (2 * D * 4 + th * 4 + th * wb)                 # LN temps + hidden tile
            if resident + weights_step + scratch + io + temps <= budget:
                return tm, th
    return None, None


# ----------------------------------------------------------------------------
# pallas_call builders
# ----------------------------------------------------------------------------
def _single_axis_call(x2d, gamma2, beta2, w1c, b1_2, w2c, b2_2, *,
                      tm, eps, vmem_limit, single_buffer_params):
    T, D = x2d.shape
    H = w1c.shape[1]
    grid = (pl.cdiv(T, tm),)

    def const_spec(shape):
        if single_buffer_params:
            return pl.BlockSpec(shape, lambda i: (0, 0), pipeline_mode=pl.Buffered(1))
        return pl.BlockSpec(shape, lambda i: (0, 0))

    return pl.pallas_call(
        functools.partial(_mlp_res_kernel, eps=eps),
        out_shape=jax.ShapeDtypeStruct((T, D), x2d.dtype),
        grid_spec=pl.GridSpec(
            grid=grid,
            in_specs=[
                pl.BlockSpec((tm, D), lambda i: (i, 0)),   # x (token-tiled)
                const_spec((1, D)),                        # gamma   (resident)
                const_spec((1, D)),                        # beta    (resident)
                const_spec((D, H)),                        # w1      (resident)
                const_spec((1, H)),                        # b1      (resident)
                const_spec((H, D)),                        # w2      (resident)
                const_spec((1, D)),                        # b2      (resident)
            ],
            out_specs=pl.BlockSpec((tm, D), lambda i: (i, 0)),
        ),
        compiler_params=pltpu.CompilerParams(
            dimension_semantics=("parallel",),
            vmem_limit_bytes=int(vmem_limit),
        ),
    )(x2d, gamma2, beta2, w1c, b1_2, w2c, b2_2)


def _hid_tiled_call(x2d, gamma2, beta2, w1c, b1_2, w2c, b2_2, *,
                    tm, th, eps, matmul_dtype, vmem_limit, single_buffer_params):
    T, D = x2d.shape
    Hp = w1c.shape[1]
    grid = (pl.cdiv(T, tm), Hp // th)

    def const_spec(shape):
        if single_buffer_params:
            return pl.BlockSpec(shape, lambda i, k: (0, 0), pipeline_mode=pl.Buffered(1))
        return pl.BlockSpec(shape, lambda i, k: (0, 0))

    return pl.pallas_call(
        functools.partial(_mlp_res_kernel_hid, eps=eps),
        out_shape=jax.ShapeDtypeStruct((T, D), x2d.dtype),
        grid_spec=pltpu.PrefetchScalarGridSpec(
            num_scalar_prefetch=0,
            grid=grid,
            in_specs=[
                pl.BlockSpec((tm, D), lambda i, k: (i, 0)),   # x (re-used across k)
                const_spec((1, D)),                           # gamma
                const_spec((1, D)),                           # beta
                pl.BlockSpec((D, th), lambda i, k: (0, k)),   # w1 column tile
                pl.BlockSpec((1, th), lambda i, k: (0, k)),   # b1 tile
                pl.BlockSpec((th, D), lambda i, k: (k, 0)),   # w2 row tile
                const_spec((1, D)),                           # b2
            ],
            out_specs=pl.BlockSpec((tm, D), lambda i, k: (i, 0)),
            scratch_shapes=[
                pltpu.VMEM((tm, D), matmul_dtype),            # normalized activations
                pltpu.VMEM((tm, D), jnp.float32),             # fc2 accumulator
            ],
        ),
        compiler_params=pltpu.CompilerParams(
            dimension_semantics=("parallel", "arbitrary"),
            vmem_limit_bytes=int(vmem_limit),
        ),
    )(x2d, gamma2, beta2, w1c, b1_2, w2c, b2_2)


# ----------------------------------------------------------------------------
# Public wrapper
# ----------------------------------------------------------------------------
def mlp_res_block(x, gamma, beta, w1, b1, w2, b2, *, eps=1e-6,
                  matmul_dtype=jnp.bfloat16, hid_tile=None, vmem_budget_bytes=None):
    """x: (..., in_dim). gamma/beta: (in_dim,), w1: (in_dim, hid), b1: (hid,),
    w2: (hid, in_dim), b2: (in_dim,). Returns same shape/dtype as x.

    For best store throughput keep in_dim (the lane axis) a multiple of 128; the
    IntagHand config (in_dim=256, hid=1024) already is."""
    orig_shape = x.shape
    D = orig_shape[-1]
    H = w1.shape[1]
    x2d = x.reshape(-1, D)
    T = x2d.shape[0]

    budget = int(vmem_budget_bytes) if vmem_budget_bytes is not None else _default_vmem_budget()
    fit_budget = int(budget * 0.9)          # headroom for Mosaic internal scratch
    wb = _itemsize(matmul_dtype)
    xb = _itemsize(x2d.dtype)
    ob = xb                                 # output dtype mirrors the input

    # LN/bias params stay f32 (broadcast as (1, dim) resident blocks); weights feed
    # the MXU in matmul_dtype (bf16 by default).
    gamma2 = gamma.reshape(1, D).astype(jnp.float32)
    beta2 = beta.reshape(1, D).astype(jnp.float32)
    b1_2 = b1.reshape(1, H).astype(jnp.float32)
    b2_2 = b2.reshape(1, D).astype(jnp.float32)
    w1c = w1.astype(matmul_dtype)
    w2c = w2.astype(matmul_dtype)

    multi_tc = _multi_tensorcore_chip()
    tm = None if hid_tile is not None else _pick_tm(
        T, D, H, xb, ob, wb, fit_budget, multi_tc=multi_tc)

    if tm is not None:
        call = functools.partial(_single_axis_call, x2d, gamma2, beta2, w1c, b1_2,
                                 w2c, b2_2, tm=tm, eps=eps, vmem_limit=budget)
    else:
        tm, th = _pick_hid_tiling(T, D, H, xb, ob, wb, fit_budget, hid_tile=hid_tile)
        if tm is None:
            # TODO(synk): add a third grid axis over in_dim (output columns) for
            # feature sizes whose per-step weight tiles still exceed the VMEM budget.
            raise ValueError("MLP_res_block: shapes too large for VMEM budget "
                             f"{budget} B even with hidden-dim tiling.")
        # Pad hid so every hid tile is full: zero columns of w1/b1 give relu(0)=0,
        # which contributes exactly 0 through the zero rows of w2 -> bit-exact.
        Hp = _round_up(H, th)
        if Hp != H:
            w1c = jnp.pad(w1c, ((0, 0), (0, Hp - H)))
            b1_2 = jnp.pad(b1_2, ((0, 0), (0, Hp - H)))
            w2c = jnp.pad(w2c, ((0, Hp - H), (0, 0)))
        call = functools.partial(_hid_tiled_call, x2d, gamma2, beta2, w1c, b1_2,
                                 w2c, b2_2, tm=tm, th=th, eps=eps,
                                 matmul_dtype=matmul_dtype, vmem_limit=budget)

    try:
        out = call(single_buffer_params=True)
    except Exception:
        # This JAX build rejected pipeline_mode=pl.Buffered(1); fall back to the
        # default double-buffered resident params (correctness unaffected).
        out = call(single_buffer_params=False)

    return out.reshape(orig_shape)


# ----------------------------------------------------------------------------
# Precision-matched pure-JAX reference
# ----------------------------------------------------------------------------
def _reference(x, gamma, beta, w1, b1, w2, b2, *, eps=1e-6, matmul_dtype=jnp.bfloat16):
    xf = x.astype(jnp.float32)
    mean = jnp.mean(xf, axis=-1, keepdims=True)
    var = jnp.mean((xf - mean) ** 2, axis=-1, keepdims=True)
    xn = (xf - mean) * jax.lax.rsqrt(var + eps) * gamma + beta
    h = jnp.dot(xn.astype(matmul_dtype), w1.astype(matmul_dtype),
                preferred_element_type=jnp.float32) + b1
    h = jnp.maximum(h, 0.0)
    y = jnp.dot(h.astype(matmul_dtype), w2.astype(matmul_dtype),
                preferred_element_type=jnp.float32) + b2
    return (xf + y).astype(x.dtype)


if __name__ == "__main__":
    # Small shapes consistent with the module: tokens (B, S, in_dim), lane-dense dims.
    B, S, in_dim, hid_dim = 2, 256, 128, 256
    key = jax.random.PRNGKey(0)
    kx, kg, kb, kw1, kb1, kw2, kb2 = jax.random.split(key, 7)

    x = jax.random.normal(kx, (B, S, in_dim), dtype=jnp.float32)
    gamma = jnp.ones((in_dim,), jnp.float32) + 0.01 * jax.random.normal(kg, (in_dim,))
    beta = 0.01 * jax.random.normal(kb, (in_dim,))
    w1 = jax.random.normal(kw1, (in_dim, hid_dim), jnp.float32) / jnp.sqrt(in_dim)
    b1 = 0.01 * jax.random.normal(kb1, (hid_dim,))
    w2 = jax.random.normal(kw2, (hid_dim, in_dim), jnp.float32) / jnp.sqrt(hid_dim)
    b2 = 0.01 * jax.random.normal(kb2, (in_dim,))

    ref = _reference(x, gamma, beta, w1, b1, w2, b2)

    # Path 1: weights-resident, token-tiled grid.
    out = jax.block_until_ready(mlp_res_block(x, gamma, beta, w1, b1, w2, b2))
    assert out.shape == x.shape and out.dtype == x.dtype
    err = jnp.max(jnp.abs(out - ref))
    assert jnp.allclose(out, ref, atol=2e-2, rtol=2e-2), (
        f"single-axis path mismatch vs reference: max abs err {err:.3e}")

    # Path 2: hidden-dim tiled fallback (forced) — validates the accumulator path
    # used when production shapes exceed the VMEM budget (e.g. v7x's 64 MiB).
    out_hid = jax.block_until_ready(
        mlp_res_block(x, gamma, beta, w1, b1, w2, b2, hid_tile=128))
    err_hid = jnp.max(jnp.abs(out_hid - ref))
    assert jnp.allclose(out_hid, ref, atol=2e-2, rtol=2e-2), (
        f"hid-tiled path mismatch vs reference: max abs err {err_hid:.3e}")

    print("KERNEL_OK")
</pallas_src>

<mosaic_0001>
module attributes {stable_mosaic.version = 11 : i64} {
  func.func @_mlp_res_kernel(%arg0: i32, %arg1: memref<256x128xf32, #tpu.memory_space<vmem>>, %arg2: memref<1x128xf32, #tpu.memory_space<vmem>>, %arg3: memref<1x128xf32, #tpu.memory_space<vmem>>, %arg4: memref<128x256xbf16, #tpu.memory_space<vmem>>, %arg5: memref<1x256xf32, #tpu.memory_space<vmem>>, %arg6: memref<256x128xbf16, #tpu.memory_space<vmem>>, %arg7: memref<1x128xf32, #tpu.memory_space<vmem>>, %arg8: memref<256x128xf32, #tpu.memory_space<vmem>>) attributes {dimension_semantics = [#tpu.dimension_semantics<parallel>], iteration_bounds = array<i64: 2>, scalar_prefetch = 0 : i64, scratch_operands = 0 : i64, tpu.core_type = #tpu.core_type<tc>, window_params = [{transform_indices = @transform_0, window_bounds = array<i64: 256, 128>}, {pipeline_mode = #tpu.pipeline_mode<synchronous>, transform_indices = @transform_1, window_bounds = array<i64: 1, 128>}, {pipeline_mode = #tpu.pipeline_mode<synchronous>, transform_indices = @transform_2, window_bounds = array<i64: 1, 128>}, {pipeline_mode = #tpu.pipeline_mode<synchronous>, transform_indices = @transform_3, window_bounds = array<i64: 128, 256>}, {pipeline_mode = #tpu.pipeline_mode<synchronous>, transform_indices = @transform_4, window_bounds = array<i64: 1, 256>}, {pipeline_mode = #tpu.pipeline_mode<synchronous>, transform_indices = @transform_5, window_bounds = array<i64: 256, 128>}, {pipeline_mode = #tpu.pipeline_mode<synchronous>, transform_indices = @transform_6, window_bounds = array<i64: 1, 128>}, {transform_indices = @transform_7, window_bounds = array<i64: 256, 128>}]} {
    %c0 = arith.constant 0 : index
    %c0_0 = arith.constant 0 : index
    %0 = vector.load %arg1[%c0, %c0_0] : memref<256x128xf32, #tpu.memory_space<vmem>>, vector<256x128xf32>
    %cst = arith.constant dense<0.000000e+00> : vector<256xf32>
    %1 = vector.multi_reduction <add>, %0, %cst [1] : vector<256x128xf32> to vector<256xf32>
    %2 = vector.shape_cast %1 : vector<256xf32> to vector<256x1xf32>
    %cst_1 = arith.constant 1.280000e+02 : f32
    %3 = vector.broadcast %cst_1 : f32 to vector<256x1xf32>
    %4 = arith.divf %2, %3 : vector<256x1xf32>
    %5 = vector.broadcast %4 : vector<256x1xf32> to vector<256x128xf32>
    %6 = arith.subf %0, %5 : vector<256x128xf32>
    %7 = arith.mulf %6, %6 : vector<256x128xf32>
    %cst_2 = arith.constant dense<0.000000e+00> : vector<256xf32>
    %8 = vector.multi_reduction <add>, %7, %cst_2 [1] : vector<256x128xf32> to vector<256xf32>
    %9 = vector.shape_cast %8 : vector<256xf32> to vector<256x1xf32>
    %cst_3 = arith.constant 1.280000e+02 : f32
    %10 = vector.broadcast %cst_3 : f32 to vector<256x1xf32>
    %11 = arith.divf %9, %10 : vector<256x1xf32>
    %cst_4 = arith.constant 9.99999997E-7 : f32
    %12 = vector.broadcast %cst_4 : f32 to vector<256x1xf32>
    %13 = arith.addf %11, %12 : vector<256x1xf32>
    %14 = math.rsqrt %13 : vector<256x1xf32>
    %15 = vector.broadcast %14 : vector<256x1xf32> to vector<256x128xf32>
    %16 = arith.mulf %6, %15 : vector<256x128xf32>
    %c0_5 = arith.constant 0 : index
    %c0_6 = arith.constant 0 : index
    %17 = vector.load %arg2[%c0_5, %c0_6] : memref<1x128xf32, #tpu.memory_space<vmem>>, vector<1x128xf32>
    %18 = vector.broadcast %17 : vector<1x128xf32> to vector<256x128xf32>
    %19 = arith.mulf %16, %18 : vector<256x128xf32>
    %c0_7 = arith.constant 0 : index
    %c0_8 = arith.constant 0 : index
    %20 = vector.load %arg3[%c0_7, %c0_8] : memref<1x128xf32, #tpu.memory_space<vmem>>, vector<1x128xf32>
    %21 = vector.broadcast %20 : vector<1x128xf32> to vector<256x128xf32>
    %22 = arith.addf %19, %21 : vector<256x128xf32>
    %23 = arith.truncf %22 : vector<256x128xf32> to vector<256x128xbf16>
    %c0_9 = arith.constant 0 : index
    %c0_10 = arith.constant 0 : index
    %24 = vector.load %arg4[%c0_9, %c0_10] : memref<128x256xbf16, #tpu.memory_space<vmem>>, vector<128x256xbf16>
    %cst_11 = arith.constant dense<0.000000e+00> : vector<256x256xf32>
    %25 = tpu.matmul %23, %24, %cst_11 {dimension_numbers = #tpu.dot_dimension_numbers<[1], [0], [0], [1], [0, 0, 1, 1], [], []>} : vector<256x128xbf16>, vector<128x256xbf16>, vector<256x256xf32> -> vector<256x256xf32>
    %c0_12 = arith.constant 0 : index
    %c0_13 = arith.constant 0 : index
    %26 = vector.load %arg5[%c0_12, %c0_13] : memref<1x256xf32, #tpu.memory_space<vmem>>, vector<1x256xf32>
    %27 = vector.broadcast %26 : vector<1x256xf32> to vector<256x256xf32>
    %28 = arith.addf %25, %27 : vector<256x256xf32>
    %cst_14 = arith.constant 0.000000e+00 : f32
    %29 = vector.broadcast %cst_14 : f32 to vector<256x256xf32>
    %30 = arith.maximumf %28, %29 : vector<256x256xf32>
    %31 = arith.truncf %30 : vector<256x256xf32> to vector<256x256xbf16>
    %c0_15 = arith.constant 0 : index
    %c0_16 = arith.constant 0 : index
    %32 = vector.load %arg6[%c0_15, %c0_16] : memref<256x128xbf16, #tpu.memory_space<vmem>>, vector<256x128xbf16>
    %cst_17 = arith.constant dense<0.000000e+00> : vector<256x128xf32>
    %33 = tpu.matmul %31, %32, %cst_17 {dimension_numbers = #tpu.dot_dimension_numbers<[1], [0], [0], [1], [0, 0, 1, 1], [], []>} : vector<256x256xbf16>, vector<256x128xbf16>, vector<256x128xf32> -> vector<256x128xf32>
    %c0_18 = arith.constant 0 : index
    %c0_19 = arith.constant 0 : index
    %34 = vector.load %arg7[%c0_18, %c0_19] : memref<1x128xf32, #tpu.memory_space<vmem>>, vector<1x128xf32>
    %35 = vector.broadcast %34 : vector<1x128xf32> to vector<256x128xf32>
    %36 = arith.addf %33, %35 : vector<256x128xf32>
    %c0_20 = arith.constant 0 : index
    %c0_21 = arith.constant 0 : index
    %37 = vector.load %arg1[%c0_20, %c0_21] : memref<256x128xf32, #tpu.memory_space<vmem>>, vector<256x128xf32>
    %38 = arith.addf %37, %36 : vector<256x128xf32>
    %c0_22 = arith.constant 0 : index
    %c0_23 = arith.constant 0 : index
    %39 = vector.load %arg8[%c0_22, %c0_23] : memref<256x128xf32, #tpu.memory_space<vmem>>, vector<256x128xf32>
    tpu.vector_store %arg8[%c0_22, %c0_23], %38 {strides = array<i32>} : memref<256x128xf32, #tpu.memory_space<vmem>>, vector<256x128xf32>,
    return
  }
  func.func @transform_0(%arg0: i32) -> (i32, i32) {
    %c0_i32 = arith.constant 0 : i32
    %c0_i32_0 = arith.constant 0 : i32
    return %arg0, %c0_i32 : i32, i32
  }
  func.func @transform_1(%arg0: i32) -> (i32, i32) {
    %c0_i32 = arith.constant 0 : i32
    %c0_i32_0 = arith.constant 0 : i32
    %c0_i32_1 = arith.constant 0 : i32
    return %c0_i32, %c0_i32_0 : i32, i32
  }
  func.func @transform_2(%arg0: i32) -> (i32, i32) {
    %c0_i32 = arith.constant 0 : i32
    %c0_i32_0 = arith.constant 0 : i32
    %c0_i32_1 = arith.constant 0 : i32
    return %c0_i32, %c0_i32_0 : i32, i32
  }
  func.func @transform_3(%arg0: i32) -> (i32, i32) {
    %c0_i32 = arith.constant 0 : i32
    %c0_i32_0 = arith.constant 0 : i32
    %c0_i32_1 = arith.constant 0 : i32
    return %c0_i32, %c0_i32_0 : i32, i32
  }
  func.func @transform_4(%arg0: i32) -> (i32, i32) {
    %c0_i32 = arith.constant 0 : i32
    %c0_i32_0 = arith.constant 0 : i32
    %c0_i32_1 = arith.constant 0 : i32
    return %c0_i32, %c0_i32_0 : i32, i32
  }
  func.func @transform_5(%arg0: i32) -> (i32, i32) {
    %c0_i32 = arith.constant 0 : i32
    %c0_i32_0 = arith.constant 0 : i32
    %c0_i32_1 = arith.constant 0 : i32
    return %c0_i32, %c0_i32_0 : i32, i32
  }
  func.func @transform_6(%arg0: i32) -> (i32, i32) {
    %c0_i32 = arith.constant 0 : i32
    %c0_i32_0 = arith.constant 0 : i32
    %c0_i32_1 = arith.constant 0 : i32
    return %c0_i32, %c0_i32_0 : i32, i32
  }
  func.func @transform_7(%arg0: i32) -> (i32, i32) {
    %c0_i32 = arith.constant 0 : i32
    %c0_i32_0 = arith.constant 0 : i32
    return %arg0, %c0_i32 : i32, i32
  }
}

module attributes {stable_mosaic.version = 11 : i64} {
  func.func @_mlp_res_kernel(%arg0: i32, %arg1: memref<256x128xf32, #tpu.memory_space<vmem>>, %arg2: memref<1x128xf32, #tpu.memory_space<vmem>>, %arg3: memref<1x128xf32, #tpu.memory_space<vmem>>, %arg4: memref<128x256xbf16, #tpu.memory_space<vmem>>, %arg5: memref<1x256xf32, #tpu.memory_space<vmem>>, %arg6: memref<256x128xbf16, #tpu.memory_space<vmem>>, %arg7: memref<1x128xf32, #tpu.memory_space<vmem>>, %arg8: memref<256x128xf32, #tpu.memory_space<vmem>>) attributes {dimension_semantics = [#tpu.dimension_semantics<parallel>], iteration_bounds = array<i64: 2>, scalar_prefetch = 0 : i64, scratch_operands = 0 : i64, tpu.core_type = #tpu.core_type<tc>, window_params = [{transform_indices = @transform_0, window_bounds = array<i64: 256, 128>}, {pipeline_mode = #tpu.pipeline_mode<synchronous>, transform_indices = @transform_1, window_bounds = array<i64: 1, 128>}, {pipeline_mode = #tpu.pipeline_mode<synchronous>, transform_indices = @transform_2, window_bounds = array<i64: 1, 128>}, {pipeline_mode = #tpu.pipeline_mode<synchronous>, transform_indices = @transform_3, window_bounds = array<i64: 128, 256>}, {pipeline_mode = #tpu.pipeline_mode<synchronous>, transform_indices = @transform_4, window_bounds = array<i64: 1, 256>}, {pipeline_mode = #tpu.pipeline_mode<synchronous>, transform_indices = @transform_5, window_bounds = array<i64: 256, 128>}, {pipeline_mode = #tpu.pipeline_mode<synchronous>, transform_indices = @transform_6, window_bounds = array<i64: 1, 128>}, {transform_indices = @transform_7, window_bounds = array<i64: 256, 128>}]} {
    %c0 = arith.constant 0 : index
    %c0_0 = arith.constant 0 : index
    %0 = vector.load %arg1[%c0, %c0_0] : memref<256x128xf32, #tpu.memory_space<vmem>>, vector<256x128xf32>
    %cst = arith.constant dense<0.000000e+00> : vector<256xf32>
    %1 = vector.multi_reduction <add>, %0, %cst [1] : vector<256x128xf32> to vector<256xf32>
    %2 = vector.shape_cast %1 : vector<256xf32> to vector<256x1xf32>
    %cst_1 = arith.constant 1.280000e+02 : f32
    %3 = vector.broadcast %cst_1 : f32 to vector<256x1xf32>
    %4 = arith.divf %2, %3 : vector<256x1xf32>
    %5 = vector.broadcast %4 : vector<256x1xf32> to vector<256x128xf32>
    %6 = arith.subf %0, %5 : vector<256x128xf32>
    %7 = arith.mulf %6, %6 : vector<256x128xf32>
    %cst_2 = arith.constant dense<0.000000e+00> : vector<256xf32>
    %8 = vector.multi_reduction <add>, %7, %cst_2 [1] : vector<256x128xf32> to vector<256xf32>
    %9 = vector.shape_cast %8 : vector<256xf32> to vector<256x1xf32>
    %cst_3 = arith.constant 1.280000e+02 : f32
    %10 = vector.broadcast %cst_3 : f32 to vector<256x1xf32>
    %11 = arith.divf %9, %10 : vector<256x1xf32>
    %cst_4 = arith.constant 9.99999997E-7 : f32
    %12 = vector.broadcast %cst_4 : f32 to vector<256x1xf32>
    %13 = arith.addf %11, %12 : vector<256x1xf32>
    %14 = math.rsqrt %13 : vector<256x1xf32>
    %15 = vector.broadcast %14 : vector<256x1xf32> to vector<256x128xf32>
    %16 = arith.mulf %6, %15 : vector<256x128xf32>
    %c0_5 = arith.constant 0 : index
    %c0_6 = arith.constant 0 : index
    %17 = vector.load %arg2[%c0_5, %c0_6] : memref<1x128xf32, #tpu.memory_space<vmem>>, vector<1x128xf32>
    %18 = vector.broadcast %17 : vector<1x128xf32> to vector<256x128xf32>
    %19 = arith.mulf %16, %18 : vector<256x128xf32>
    %c0_7 = arith.constant 0 : index
    %c0_8 = arith.constant 0 : index
    %20 = vector.load %arg3[%c0_7, %c0_8] : memref<1x128xf32, #tpu.memory_space<vmem>>, vector<1x128xf32>
    %21 = vector.broadcast %20 : vector<1x128xf32> to vector<256x128xf32>
    %22 = arith.addf %19, %21 : vector<256x128xf32>
    %23 = arith.truncf %22 : vector<256x128xf32> to vector<256x128xbf16>
    %c0_9 = arith.constant 0 : index
    %c0_10 = arith.constant 0 : index
    %24 = vector.load %arg4[%c0_9, %c0_10] : memref<128x256xbf16, #tpu.memory_space<vmem>>, vector<128x256xbf16>
    %cst_11 = arith.constant dense<0.000000e+00> : vector<256x256xf32>
    %25 = tpu.matmul %23, %24, %cst_11 {dimension_numbers = #tpu.dot_dimension_numbers<[1], [0], [0], [1], [0, 0, 1, 1], [], []>} : vector<256x128xbf16>, vector<128x256xbf16>, vector<256x256xf32> -> vector<256x256xf32>
    %c0_12 = arith.constant 0 : index
    %c0_13 = arith.constant 0 : index
    %26 = vector.load %arg5[%c0_12, %c0_13] : memref<1x256xf32, #tpu.memory_space<vmem>>, vector<1x256xf32>
    %27 = vector.broadcast %26 : vector<1x256xf32> to vector<256x256xf32>
    %28 = arith.addf %25, %27 : vector<256x256xf32>
    %cst_14 = arith.constant 0.000000e+00 : f32
    %29 = vector.broadcast %cst_14 : f32 to vector<256x256xf32>
    %30 = arith.maximumf %28, %29 : vector<256x256xf32>
    %31 = arith.truncf %30 : vector<256x256xf32> to vector<256x256xbf16>
    %c0_15 = arith.constant 0 : index
    %c0_16 = arith.constant 0 : index
    %32 = vector.load %arg6[%c0_15, %c0_16] : memref<256x128xbf16, #tpu.memory_space<vmem>>, vector<256x128xbf16>
    %cst_17 = arith.constant dense<0.000000e+00> : vector<256x128xf32>
    %33 = tpu.matmul %31, %32, %cst_17 {dimension_numbers = #tpu.dot_dimension_numbers<[1], [0], [0], [1], [0, 0, 1, 1], [], []>} : vector<256x256xbf16>, vector<256x128xbf16>, vector<256x128xf32> -> vector<256x128xf32>
    %c0_18 = arith.constant 0 : index
    %c0_19 = arith.constant 0 : index
    %34 = vector.load %arg7[%c0_18, %c0_19] : memref<1x128xf32, #tpu.memory_space<vmem>>, vector<1x128xf32>
    %35 = vector.broadcast %34 : vector<1x128xf32> to vector<256x128xf32>
    %36 = arith.addf %33, %35 : vector<256x128xf32>
    %c0_20 = arith.constant 0 : index
    %c0_21 = arith.constant 0 : index
    %37 = vector.load %arg1[%c0_20, %c0_21] : memref<256x128xf32, #tpu.memory_space<vmem>>, vector<256x128xf32>
    %38 = arith.addf %37, %36 : vector<256x128xf32>
    %c0_22 = arith.constant 0 : index
    %c0_23 = arith.constant 0 : index
    %39 = vector.load %arg8[%c0_22, %c0_23] : memref<256x128xf32, #tpu.memory_space<vmem>>, vector<256x128xf32>
    tpu.vector_store %arg8[%c0_22, %c0_23], %38 {strides = array<i32>} : memref<256x128xf32, #tpu.memory_space<vmem>>, vector<256x128xf32>,
    return
  }
  func.func @transform_0(%arg0: i32) -> (i32, i32) {
    %c0_i32 = arith.constant 0 : i32
    %c0_i32_0 = arith.constant 0 : i32
    return %arg0, %c0_i32 : i32, i32
  }
  func.func @transform_1(%arg0: i32) -> (i32, i32) {
    %c0_i32 = arith.constant 0 : i32
    %c0_i32_0 = arith.constant 0 : i32
    %c0_i32_1 = arith.constant 0 : i32
    return %c0_i32, %c0_i32_0 : i32, i32
  }
  func.func @transform_2(%arg0: i32) -> (i32, i32) {
    %c0_i32 = arith.constant 0 : i32
    %c0_i32_0 = arith.constant 0 : i32
    %c0_i32_1 = arith.constant 0 : i32
    return %c0_i32, %c0_i32_0 : i32, i32
  }
  func.func @transform_3(%arg0: i32) -> (i32, i32) {
    %c0_i32 = arith.constant 0 : i32
    %c0_i32_0 = arith.constant 0 : i32
    %c0_i32_1 = arith.constant 0 : i32
    return %c0_i32, %c0_i32_0 : i32, i32
  }
  func.func @transform_4(%arg0: i32) -> (i32, i32) {
    %c0_i32 = arith.constant 0 : i32
    %c0_i32_0 = arith.constant 0 : i32
    %c0_i32_1 = arith.constant 0 : i32
    return %c0_i32, %c0_i32_0 : i32, i32
  }
  func.func @transform_5(%arg0: i32) -> (i32, i32) {
    %c0_i32 = arith.constant 0 : i32
    %c0_i32_0 = arith.constant 0 : i32
    %c0_i32_1 = arith.constant 0 : i32
    return %c0_i32, %c0_i32_0 : i32, i32
  }
  func.func @transform_6(%arg0: i32) -> (i32, i32) {
    %c0_i32 = arith.constant 0 : i32
    %c0_i32_0 = arith.constant 0 : i32
    %c0_i32_1 = arith.constant 0 : i32
    return %c0_i32, %c0_i32_0 : i32, i32
  }
  func.func @transform_7(%arg0: i32) -> (i32, i32) {
    %c0_i32 = arith.constant 0 : i32
    %c0_i32_0 = arith.constant 0 : i32
    return %arg0, %c0_i32 : i32, i32
  }
}

</mosaic_0001>

<llo_original>
// kernel: tpu_custom_call.1
$region0: #{tpu_custom_call.1}
  #allocation0 [shape = 'u32[]', space=smem, size = 0x4, offset = 0x4, fixed_abs, tag = 'smem constant byte address 0x4 - core index']
  #allocation1 [shape = 'u32[72,128]{1,0:T(1,128)}', space=vmem, size = 0x9000, scoped, tag = 'internal scratch']
  %s0 = inlined_call_operand.hbm [shape: f32[512,128], index: 0, kind: input, shape index: {}]
  %s1 = inlined_call_operand.hbm [shape: f32[1,128], index: 1, kind: input, shape index: {}]
  %s2 = inlined_call_operand.vmem [shape: f32[1,128], index: 2, kind: input, shape index: {}]
  %s3 = inlined_call_operand.hbm [shape: bf16[128,256], index: 3, kind: input, shape index: {}]
  %s4 = inlined_call_operand.vmem [shape: f32[1,256], index: 4, kind: input, shape index: {}]
  %s5 = inlined_call_operand.hbm [shape: bf16[256,128], index: 5, kind: input, shape index: {}]
  %s6 = inlined_call_operand.vmem [shape: f32[1,128], index: 6, kind: input, shape index: {}]
  %s7 = inlined_call_operand.hbm [shape: f32[512,128], index: 7, kind: output, shape index: {}]
  %s8 = sld [smem:[#allocation0]]
  $region77: #{tpu_custom_call.1} parent=0
    _
  %s10 = ssub.s32 1, %s8
  %s11 = scalar_select 0, %s10, %s8
  $region1: #{tpu_custom_call.1} parent=0
    #allocation2 [shape = 'u8[262144]{0}', space=vmem, size = 0x40000, scoped, tag = 'input window, operand 0']
    #allocation3 [shape = 's32[2]{0}', space=sflag, size = 0x8, scoped, tag = 'scoped memory for tpu_custom_call.1']
    #allocation4 [shape = 's32[2]{0}', space=sflag, size = 0x8, scoped, tag = 'scoped memory for tpu_custom_call.1']
    #allocation5 [shape = 'u8[512]{0}', space=vmem, size = 0x400, scoped, tag = 'input window, operand 1, single buffered']
    #allocation6 [shape = 's32[1]{0}', space=sflag, size = 0x4, scoped, tag = 'scoped memory for tpu_custom_call.1']
    #allocation7 [shape = 'u8[65536]{0}', space=vmem, size = 0x10000, scoped, tag = 'input window, operand 3, single buffered']
    #allocation8 [shape = 'u8[65536]{0}', space=vmem, size = 0x10000, scoped, tag = 'input window, operand 5, single buffered']
    #allocation9 [shape = 's32[1]{0}', space=sflag, size = 0x4, scoped, tag = 'scoped memory for tpu_custom_call.1']
    #allocation10 [shape = 'u8[262144]{0}', space=vmem, size = 0x40000, scoped, tag = 'output window, operand 0']
    %12 = vsyncpa [#allocation3], 0
    %s13 = scalar_lea.sflag [#allocation3], 1
    %14 = vsyncpa %s13, 0
    %15 = vsyncpa [#allocation6], 0
    %16 = vsyncpa [#allocation9], 0
    %17 = vsyncpa [#allocation4], 0
    %s18 = scalar_lea.sflag [#allocation4], 1
    %19 = vsyncpa %s18, 0
    loop: start=0, step=1, limit=4
    $region2: #{tpu_custom_call.1} parent=1 // loop_pre_header
      _
    $region3: #{tpu_custom_call.1} parent=1 // loop_header
      %s21 = sphi 0, %s25
      %p22 = scmp.ge.s32.totalorder %s21, 4
      %s31 = sphi 0, %s33
      %s34 = sphi 0, %s31
      %s35 = sphi 0, %s34
      %s51 = sphi 0, %s35
      %s55 = sphi 0, %s55
      %s57 = sphi 0, %s55
      %s58 = sphi 0, %s57
      %s72 = sphi 0, %s58
      %s76 = sphi 0, %s76
      %s78 = sphi 0, %s76
      %s79 = sphi 0, %s78
      %s93 = sphi 0, %s79
      %s97 = sphi 0, %s97
      %s99 = sphi 0, %s97
      %s100 = sphi 0, %s99
      %s114 = sphi 0, %s100
      %s118 = sphi 0, %s118
      %s120 = sphi 0, %s118
      %s121 = sphi 0, %s120
      %s135 = sphi 0, %s121
      %s139 = sphi 0, %s139
      %s141 = sphi 0, %s139
      %s142 = sphi 0, %s141
      %s156 = sphi 0, %s142
      %s160 = sphi 0, %s160
      %s162 = sphi 0, %s160
      %s163 = sphi 0, %s162
      %s177 = sphi 0, %s163
      %s183 = sphi 0, %s185
      %s186 = sphi 0, %s183
      %s187 = sphi 0, %s186
      %s203 = sphi 0, %s187
    $region4: #{tpu_custom_call.1} parent=1 // loop_header_branch
      %24 = sbr.rel (%p22) target = $region8
    $region5: #{tpu_custom_call.1} parent=1 // loop_body
      %s26 = ssub.s32 %s21, 1
      %s27 = ssub.s32 %s21, 2
      %s28 = sadd.s32 %s21, 1
      %s29 = ssub.s32 %s21, %s28
      %p30 = scmp.eq.s32.totalorder %s29, 0
      %s32 = sadd.s32 %s31, 1
      %s33 = scalar_select %p30, %s31, %s32
      %p36 = pneg %p30
      %p37 = scmp.eq.s32.totalorder %s21, 1
      %p38 = por %p36, %p37
      %p39 = scmp.ne.s32.totalorder %s31, %s34
      %p40 = scmp.eq.s32.totalorder %s21, 0
      %p41 = por %p39, %p40
      %p42 = scmp.ne.s32.totalorder %s31, %s34
      %p43 = scmp.eq.s32.totalorder %s26, 1
      %p44 = por %p42, %p43
      %p45 = scmp.ne.s32.totalorder %s34, %s35
      %p46 = scmp.eq.s32.totalorder %s26, 0
      %p47 = por %p45, %p46
      %p48 = scmp.ne.s32.totalorder %s34, %s35
      %p49 = scmp.eq.s32.totalorder %s27, 1
      %p50 = por %p48, %p49
      %p52 = scmp.ne.s32.totalorder %s35, %s51
      %p53 = scmp.eq.s32.totalorder %s27, 0
      %p54 = por %p52, %p53
      %s56 = sadd.s32 %s55, 1
      %p59 = scmp.eq.s32.totalorder %s21, 1
      %p60 = scmp.ne.s32.totalorder %s55, %s57
      %p61 = scmp.eq.s32.totalorder %s21, 0
      %p62 = por %p60, %p61
      %p63 = scmp.ne.s32.totalorder %s55, %s57
      %p64 = scmp.eq.s32.totalorder %s26, 1
      %p65 = por %p63, %p64
      %p66 = scmp.ne.s32.totalorder %s57, %s58
      %p67 = scmp.eq.s32.totalorder %s26, 0
      %p68 = por %p66, %p67
      %p69 = scmp.ne.s32.totalorder %s57, %s58
      %p70 = scmp.eq.s32.totalorder %s27, 1
      %p71 = por %p69, %p70
      %p73 = scmp.ne.s32.totalorder %s58, %s72
      %p74 = scmp.eq.s32.totalorder %s27, 0
      %p75 = por %p73, %p74
      %s77 = sadd.s32 %s76, 1
      %p80 = scmp.eq.s32.totalorder %s21, 1
      %p81 = scmp.ne.s32.totalorder %s76, %s78
      %p82 = scmp.eq.s32.totalorder %s21, 0
      %p83 = por %p81, %p82
      %p84 = scmp.ne.s32.totalorder %s76, %s78
      %p85 = scmp.eq.s32.totalorder %s26, 1
      %p86 = por %p84, %p85
      %p87 = scmp.ne.s32.totalorder %s78, %s79
      %p88 = scmp.eq.s32.totalorder %s26, 0
      %p89 = por %p87, %p88
      %p90 = scmp.ne.s32.totalorder %s78, %s79
      %p91 = scmp.eq.s32.totalorder %s27, 1
      %p92 = por %p90, %p91
      %p94 = scmp.ne.s32.totalorder %s79, %s93
      %p95 = scmp.eq.s32.totalorder %s27, 0
      %p96 = por %p94, %p95
      %s98 = sadd.s32 %s97, 1
      %p101 = scmp.eq.s32.totalorder %s21, 1
      %p102 = scmp.ne.s32.totalorder %s97, %s99
      %p103 = scmp.eq.s32.totalorder %s21, 0
      %p104 = por %p102, %p103
      %p105 = scmp.ne.s32.totalorder %s97, %s99
      %p106 = scmp.eq.s32.totalorder %s26, 1
      %p107 = por %p105, %p106
      %p108 = scmp.ne.s32.totalorder %s99, %s100
      %p109 = scmp.eq.s32.totalorder %s26, 0
      %p110 = por %p108, %p109
      %p111 = scmp.ne.s32.totalorder %s99, %s100
      %p112 = scmp.eq.s32.totalorder %s27, 1
      %p113 = por %p111, %p112
      %p115 = scmp.ne.s32.totalorder %s100, %s114
      %p116 = scmp.eq.s32.totalorder %s27, 0
      %p117 = por %p115, %p116
      %s119 = sadd.s32 %s118, 1
      %p122 = scmp.eq.s32.totalorder %s21, 1
      %p123 = scmp.ne.s32.totalorder %s118, %s120
      %p124 = scmp.eq.s32.totalorder %s21, 0
      %p125 = por %p123, %p124
      %p126 = scmp.ne.s32.totalorder %s118, %s120
      %p127 = scmp.eq.s32.totalorder %s26, 1
      %p128 = por %p126, %p127
      %p129 = scmp.ne.s32.totalorder %s120, %s121
      %p130 = scmp.eq.s32.totalorder %s26, 0
      %p131 = por %p129, %p130
      %p132 = scmp.ne.s32.totalorder %s120, %s121
      %p133 = scmp.eq.s32.totalorder %s27, 1
      %p134 = por %p132, %p133
      %p136 = scmp.ne.s32.totalorder %s121, %s135
      %p137 = scmp.eq.s32.totalorder %s27, 0
      %p138 = por %p136, %p137
      %s140 = sadd.s32 %s139, 1
      %p143 = scmp.eq.s32.totalorder %s21, 1
      %p144 = scmp.ne.s32.totalorder %s139, %s141
      %p145 = scmp.eq.s32.totalorder %s21, 0
      %p146 = por %p144, %p145
      %p147 = scmp.ne.s32.totalorder %s139, %s141
      %p148 = scmp.eq.s32.totalorder %s26, 1
      %p149 = por %p147, %p148
      %p150 = scmp.ne.s32.totalorder %s141, %s142
      %p151 = scmp.eq.s32.totalorder %s26, 0
      %p152 = por %p150, %p151
      %p153 = scmp.ne.s32.totalorder %s141, %s142
      %p154 = scmp.eq.s32.totalorder %s27, 1
      %p155 = por %p153, %p154
      %p157 = scmp.ne.s32.totalorder %s142, %s156
      %p158 = scmp.eq.s32.totalorder %s27, 0
      %p159 = por %p157, %p158
      %s161 = sadd.s32 %s160, 1
      %p164 = scmp.eq.s32.totalorder %s21, 1
      %p165 = scmp.ne.s32.totalorder %s160, %s162
      %p166 = scmp.eq.s32.totalorder %s21, 0
      %p167 = por %p165, %p166
      %p168 = scmp.ne.s32.totalorder %s160, %s162
      %p169 = scmp.eq.s32.totalorder %s26, 1
      %p170 = por %p168, %p169
      %p171 = scmp.ne.s32.totalorder %s162, %s163
      %p172 = scmp.eq.s32.totalorder %s26, 0
      %p173 = por %p171, %p172
      %p174 = scmp.ne.s32.totalorder %s162, %s163
      %p175 = scmp.eq.s32.totalorder %s27, 1
      %p176 = por %p174, %p175
      %p178 = scmp.ne.s32.totalorder %s163, %s177
      %p179 = scmp.eq.s32.totalorder %s27, 0
      %p180 = por %p178, %p179
      %s181 = ssub.s32 %s21, %s28
      %p182 = scmp.eq.s32.totalorder %s181, 0
      %s184 = sadd.s32 %s183, 1
      %s185 = scalar_select %p182, %s183, %s184
      %p188 = pneg %p182
      %p189 = scmp.eq.s32.totalorder %s21, 1
      %p190 = por %p188, %p189
      %p191 = scmp.ne.s32.totalorder %s183, %s186
      %p192 = scmp.eq.s32.totalorder %s21, 0
      %p193 = por %p191, %p192
      %p194 = scmp.ne.s32.totalorder %s183, %s186
      %p195 = scmp.eq.s32.totalorder %s26, 1
      %p196 = por %p194, %p195
      %p197 = scmp.ne.s32.totalorder %s186, %s187
      %p198 = scmp.eq.s32.totalorder %s26, 0
      %p199 = por %p197, %p198
      %p200 = scmp.ne.s32.totalorder %s186, %s187
      %p201 = scmp.eq.s32.totalorder %s27, 1
      %p202 = por %p200, %p201
      %p204 = scmp.ne.s32.totalorder %s187, %s203
      %p205 = scmp.eq.s32.totalorder %s27, 0
      %p206 = por %p204, %p205
      %p207 = scmp.le.s32.totalorder 1, %s21
      %p208 = scmp.lt.s32.totalorder %s21, 3
      %p209 = pnand %p207, %p208
      %p210 = pneg %p209
      // Predicated region
      $region9: #{tpu_custom_call.1} parent=5 // pred_check
        _
      $region10: #{tpu_custom_call.1} parent=5 // pred_check_branch
        %212 = sbr.rel (%p209) target = $region12
      $region11: #{tpu_custom_call.1} parent=5 // pred_region
        %s213 = ssub.s32 %s21, 1
        // Predicated region
        $region13: #{tpu_custom_call.1} parent=11 // pred_check
          %p214 = pneg %p68
        $region14: #{tpu_custom_call.1} parent=11 // pred_check_branch
          %216 = sbr.rel (%p214) target = $region16
        $region15: #{tpu_custom_call.1} parent=11 // pred_region
          %218 = vsyncadd [#allocation6], 0
          %s220 = sshll.u32 %s1, 4
          %s221 = int_to_ptr.hbm [resolvable:$true] %s220
          %s222 = sshll.u32 [#allocation5], 4
          %s223 = int_to_ptr.vmem [resolvable:$true] %s222
          %225 = dma.hbm_to_vmem [thread:$0]  %s221, 16, %s223, [#allocation6]
        $region16: #{tpu_custom_call.1} parent=11 // pred_fallthru
          _
        // Predicated region
        $region17: #{tpu_custom_call.1} parent=11 // pred_check
          %p226 = pneg %p89
        $region18: #{tpu_custom_call.1} parent=11 // pred_check_branch
          %228 = sbr.rel (%p226) target = $region20
        $region19: #{tpu_custom_call.1} parent=11 // pred_region
          _
        $region20: #{tpu_custom_call.1} parent=11 // pred_fallthru
          _
        // Predicated region
        $region21: #{tpu_custom_call.1} parent=11 // pred_check
          %p229 = pneg %p110
        $region22: #{tpu_custom_call.1} parent=11 // pred_check_branch
          %231 = sbr.rel (%p229) target = $region24
        $region23: #{tpu_custom_call.1} parent=11 // pred_region
          %233 = vsyncadd [#allocation6], 0
          %s234 = sshll.u32 %s3, 4
          %s235 = int_to_ptr.hbm [resolvable:$true] %s234
          %s236 = sshll.u32 [#allocation7], 4
          %s237 = int_to_ptr.vmem [resolvable:$true] %s236
          %242 = dma.hbm_to_vmem [thread:$0]  %s235, 2048, %s237, [#allocation6], 128, 128, 8
        $region24: #{tpu_custom_call.1} parent=11 // pred_fallthru
          _
        // Predicated region
        $region25: #{tpu_custom_call.1} parent=11 // pred_check
          %p243 = pneg %p131
        $region26: #{tpu_custom_call.1} parent=11 // pred_check_branch
          %245 = sbr.rel (%p243) target = $region28
        $region27: #{tpu_custom_call.1} parent=11 // pred_region
          _
        $region28: #{tpu_custom_call.1} parent=11 // pred_fallthru
          _
        // Predicated region
        $region29: #{tpu_custom_call.1} parent=11 // pred_check
          %p246 = pneg %p152
        $region30: #{tpu_custom_call.1} parent=11 // pred_check_branch
          %248 = sbr.rel (%p246) target = $region32
        $region31: #{tpu_custom_call.1} parent=11 // pred_region
          %250 = vsyncadd [#allocation9], 0
          %s251 = sshll.u32 %s5, 4
          %s252 = int_to_ptr.hbm [resolvable:$true] %s251
          %s253 = sshll.u32 [#allocation8], 4
          %s254 = int_to_ptr.vmem [resolvable:$true] %s253
          %259 = dma.hbm_to_vmem [thread:$0]  %s252, 2048, %s254, [#allocation9], 64, 64, 4
        $region32: #{tpu_custom_call.1} parent=11 // pred_fallthru
          _
        // Predicated region
        $region33: #{tpu_custom_call.1} parent=11 // pred_check
          %p260 = pneg %p173
        $region34: #{tpu_custom_call.1} parent=11 // pred_check_branch
          %262 = sbr.rel (%p260) target = $region36
        $region35: #{tpu_custom_call.1} parent=11 // pred_region
          _
        $region36: #{tpu_custom_call.1} parent=11 // pred_fallthru
          _
      $region12: #{tpu_custom_call.1} parent=5 // pred_fallthru
        _
      %p263 = scmp.lt.s32.totalorder %s21, 2
      // Predicated region
      $region37: #{tpu_custom_call.1} parent=5 // pred_check
        %p264 = pneg %p263
      $region38: #{tpu_custom_call.1} parent=5 // pred_check_branch
        %266 = sbr.rel (%p264) target = $region40
      $region39: #{tpu_custom_call.1} parent=5 // pred_region
        // Predicated region
        $region41: #{tpu_custom_call.1} parent=39 // pred_check
          %p267 = pneg %p41
        $region42: #{tpu_custom_call.1} parent=39 // pred_check_branch
          %269 = sbr.rel (%p267) target = $region44
        $region43: #{tpu_custom_call.1} parent=39 // pred_region
          %s270 = sand.u32 %s31, 1
          %s271 = scalar_lea.sflag [#allocation3], %s270
          %s272 = sand.u32 %s31, 1
          %s273 = smul.addr %s272, 256
          %s274 = scalar_lea.vmem [#allocation2], %s273
          %s275 = smul.u32 32, %s21
          %277 = vsyncadd %s271, 0
          %s278 = smul.addr %s275, 8
          %s279 = scalar_lea.hbm %s0, %s278
          %s280 = sshll.u32 %s279, 4
          %s281 = int_to_ptr.hbm [resolvable:$true] %s280
          %s282 = sshll.u32 %s274, 4
          %s283 = int_to_ptr.vmem [resolvable:$true] %s282
          %288 = dma.hbm_to_vmem [thread:$0]  %s281, 4096, %s283, %s271, 128, 128, 8
        $region44: #{tpu_custom_call.1} parent=39 // pred_fallthru
          _
      $region40: #{tpu_custom_call.1} parent=5 // pred_fallthru
        _
      %p289 = scmp.le.s32.totalorder 1, %s21
      %p290 = scmp.lt.s32.totalorder %s21, 3
      %p291 = pnand %p289, %p290
      %p292 = pneg %p291
      // Predicated region
      $region45: #{tpu_custom_call.1} parent=5 // pred_check
        _
      $region46: #{tpu_custom_call.1} parent=5 // pred_check_branch
        %294 = sbr.rel (%p291) target = $region48
      $region47: #{tpu_custom_call.1} parent=5 // pred_region
        %s295 = ssub.s32 %s21, 1
        %s296 = sand.u32 %s34, 1
        %s297 = scalar_lea.sflag [#allocation3], %s296
        %s298 = sand.u32 %s34, 1
        %s299 = smul.addr %s298, 256
        %s300 = scalar_lea.vmem [#allocation2], %s299
        // Predicated region
        $region49: #{tpu_custom_call.1} parent=47 // pred_check
          %p301 = pneg %p47
        $region50: #{tpu_custom_call.1} parent=47 // pred_check_branch
          %303 = sbr.rel (%p301) target = $region52
        $region51: #{tpu_custom_call.1} parent=47 // pred_region
          %305 = dma.done %s297, 4096
        $region52: #{tpu_custom_call.1} parent=47 // pred_fallthru
          _
        // Predicated region
        $region53: #{tpu_custom_call.1} parent=47 // pred_check
          %p306 = pneg %p68
        $region54: #{tpu_custom_call.1} parent=47 // pred_check_branch
          %308 = sbr.rel (%p306) target = $region56
        $region55: #{tpu_custom_call.1} parent=47 // pred_region
          %310 = dma.done [#allocation6], 16
        $region56: #{tpu_custom_call.1} parent=47 // pred_fallthru
          _
        // Predicated region
        $region57: #{tpu_custom_call.1} parent=47 // pred_check
          %p311 = pneg %p110
        $region58: #{tpu_custom_call.1} parent=47 // pred_check_branch
          %313 = sbr.rel (%p311) target = $region60
        $region59: #{tpu_custom_call.1} parent=47 // pred_region
          %315 = dma.done [#allocation6], 2048
        $region60: #{tpu_custom_call.1} parent=47 // pred_fallthru
          _
        // Predicated region
        $region61: #{tpu_custom_call.1} parent=47 // pred_check
          %p316 = pneg %p152
        $region62: #{tpu_custom_call.1} parent=47 // pred_check_branch
          %318 = sbr.rel (%p316) target = $region64
        $region63: #{tpu_custom_call.1} parent=47 // pred_region
          %320 = dma.done [#allocation9], 2048
        $region64: #{tpu_custom_call.1} parent=47 // pred_fallthru
          _
        %s321 = sand.u32 %s34, 1
        %s322 = scalar_lea.sflag [#allocation3], %s321
        %s323 = sand.u32 %s34, 1
        %s324 = smul.addr %s323, 256
        %s325 = scalar_lea.vmem [#allocation2], %s324
        %p326 = pneg %p47
        %p327 = pneg %p44
        %p328 = pneg %p68
        %p329 = pneg %p65
        %p330 = pneg %p89
        %p331 = pneg %p86
        %p332 = pneg %p110
        %p333 = pneg %p107
        %p334 = pneg %p131
        %p335 = pneg %p128
        %p336 = pneg %p152
        %p337 = pneg %p149
        %p338 = pneg %p173
        %p339 = pneg %p170
        %p340 = pneg %p199
        %p341 = pneg %p196
        %s342 = sand.u32 %s186, 1
        %s343 = scalar_lea.sflag [#allocation4], %s342
        %s344 = sand.u32 %s186, 1
        %s345 = smul.addr %s344, 256
        %s346 = scalar_lea.vmem [#allocation10], %s345
        %s347 = smul.u32 32, %s26
        %s348 = smul.u32 32, %s26
        %v349 = vld [vmem:[%s300] sm:$0xff]
        %v350 = vld [vmem:[%s300 + $0x8] sm:$0xff]
        %v351 = vld [vmem:[%s300 + $0x10] sm:$0xff]
        %v352 = vld [vmem:[%s300 + $0x18] sm:$0xff]
        %v353 = vld [vmem:[%s300 + $0x20] sm:$0xff]
        %v354 = vld [vmem:[%s300 + $0x28] sm:$0xff]
        %v355 = vld [vmem:[%s300 + $0x30] sm:$0xff]
        %v356 = vld [vmem:[%s300 + $0x38] sm:$0xff]
        %v357 = vld [vmem:[%s300 + $0x40] sm:$0xff]
        %v358 = vld [vmem:[%s300 + $0x48] sm:$0xff]
        %v359 = vld [vmem:[%s300 + $0x50] sm:$0xff]
        %v360 = vld [vmem:[%s300 + $0x58] sm:$0xff]
        %v361 = vld [vmem:[%s300 + $0x60] sm:$0xff]
        %v362 = vld [vmem:[%s300 + $0x68] sm:$0xff]
        %v363 = vld [vmem:[%s300 + $0x70] sm:$0xff]
        %v364 = vld [vmem:[%s300 + $0x78] sm:$0xff]
        %v365 = vld [vmem:[%s300 + $0x80] sm:$0xff]
        %v366 = vld [vmem:[%s300 + $0x88] sm:$0xff]
        %v367 = vld [vmem:[%s300 + $0x90] sm:$0xff]
        %v368 = vld [vmem:[%s300 + $0x98] sm:$0xff]
        %v369 = vld [vmem:[%s300 + $0xa0] sm:$0xff]
        %v370 = vld [vmem:[%s300 + $0xa8] sm:$0xff]
        %v371 = vld [vmem:[%s300 + $0xb0] sm:$0xff]
        %v372 = vld [vmem:[%s300 + $0xb8] sm:$0xff]
        %v373 = vld [vmem:[%s300 + $0xc0] sm:$0xff]
        %v374 = vld [vmem:[%s300 + $0xc8] sm:$0xff]
        %v375 = vld [vmem:[%s300 + $0xd0] sm:$0xff]
        %v376 = vld [vmem:[%s300 + $0xd8] sm:$0xff]
        %v377 = vld [vmem:[%s300 + $0xe0] sm:$0xff]
        %v378 = vld [vmem:[%s300 + $0xe8] sm:$0xff]
        %v379 = vld [vmem:[%s300 + $0xf0] sm:$0xff]
        %v380 = vld [vmem:[%s300 + $0xf8] sm:$0xff]
        %381 = vadd.xlane.f32.xlu0 %v349
        %v382 = vpop.xlane.xlu0 %381
        %383 = vadd.xlane.f32.xlu0 %v350
        %v384 = vpop.xlane.xlu0 %383
        %385 = vadd.xlane.f32.xlu0 %v351
        %v386 = vpop.xlane.xlu0 %385
        %387 = vadd.xlane.f32.xlu0 %v352
        %v388 = vpop.xlane.xlu0 %387
        %389 = vadd.xlane.f32.xlu0 %v353
        %v390 = vpop.xlane.xlu0 %389
        %391 = vadd.xlane.f32.xlu0 %v354
        %v392 = vpop.xlane.xlu0 %391
        %393 = vadd.xlane.f32.xlu0 %v355
        %v394 = vpop.xlane.xlu0 %393
        %395 = vadd.xlane.f32.xlu0 %v356
        %v396 = vpop.xlane.xlu0 %395
        %397 = vadd.xlane.f32.xlu0 %v357
        %v398 = vpop.xlane.xlu0 %397
        %399 = vadd.xlane.f32.xlu0 %v358
        %v400 = vpop.xlane.xlu0 %399
        %401 = vadd.xlane.f32.xlu0 %v359
        %v402 = vpop.xlane.xlu0 %401
        %403 = vadd.xlane.f32.xlu0 %v360
        %v404 = vpop.xlane.xlu0 %403
        %405 = vadd.xlane.f32.xlu0 %v361
        %v406 = vpop.xlane.xlu0 %405
        %407 = vadd.xlane.f32.xlu0 %v362
        %v408 = vpop.xlane.xlu0 %407
        %409 = vadd.xlane.f32.xlu0 %v363
        %v410 = vpop.xlane.xlu0 %409
        %411 = vadd.xlane.f32.xlu0 %v364
        %v412 = vpop.xlane.xlu0 %411
        %413 = vadd.xlane.f32.xlu0 %v365
        %v414 = vpop.xlane.xlu0 %413
        %415 = vadd.xlane.f32.xlu0 %v366
        %v416 = vpop.xlane.xlu0 %415
        %417 = vadd.xlane.f32.xlu0 %v367
        %v418 = vpop.xlane.xlu0 %417
        %419 = vadd.xlane.f32.xlu0 %v368
        %v420 = vpop.xlane.xlu0 %419
        %421 = vadd.xlane.f32.xlu0 %v369
        %v422 = vpop.xlane.xlu0 %421
        %423 = vadd.xlane.f32.xlu0 %v370
        %v424 = vpop.xlane.xlu0 %423
        %425 = vadd.xlane.f32.xlu0 %v371
        %v426 = vpop.xlane.xlu0 %425
        %427 = vadd.xlane.f32.xlu0 %v372
        %v428 = vpop.xlane.xlu0 %427
        %429 = vadd.xlane.f32.xlu0 %v373
        %v430 = vpop.xlane.xlu0 %429
        %431 = vadd.xlane.f32.xlu0 %v374
        %v432 = vpop.xlane.xlu0 %431
        %433 = vadd.xlane.f32.xlu0 %v375
        %v434 = vpop.xlane.xlu0 %433
        %435 = vadd.xlane.f32.xlu0 %v376
        %v436 = vpop.xlane.xlu0 %435
        %437 = vadd.xlane.f32.xlu0 %v377
        %v438 = vpop.xlane.xlu0 %437
        %439 = vadd.xlane.f32.xlu0 %v378
        %v440 = vpop.xlane.xlu0 %439
        %441 = vadd.xlane.f32.xlu0 %v379
        %v442 = vpop.xlane.xlu0 %441
        %443 = vadd.xlane.f32.xlu0 %v380
        %v444 = vpop.xlane.xlu0 %443
        %v445 = vrcp.pop 128.0
        %v446 = vmul.f32 128.0, %v445
        %v447 = vsub.f32 1.0, %v446
        %v448 = vmul.f32 %v445, %v447
        %v449 = vadd.f32 %v445, %v448
        %vm450 = vweird.f32 %v445
        %v451 = vsel %vm450, %v445, %v449
        %v452 = vmul.f32 %v382, %v451
        %v453 = vmul.f32 %v384, %v451
        %v454 = vmul.f32 %v386, %v451
        %v455 = vmul.f32 %v388, %v451
        %v456 = vmul.f32 %v390, %v451
        %v457 = vmul.f32 %v392, %v451
        %v458 = vmul.f32 %v394, %v451
        %v459 = vmul.f32 %v396, %v451
        %v460 = vmul.f32 %v398, %v451
        %v461 = vmul.f32 %v400, %v451
        %v462 = vmul.f32 %v402, %v451
        %v463 = vmul.f32 %v404, %v451
        %v464 = vmul.f32 %v406, %v451
        %v465 = vmul.f32 %v408, %v451
        %v466 = vmul.f32 %v410, %v451
        %v467 = vmul.f32 %v412, %v451
        %v468 = vmul.f32 %v414, %v451
        %v469 = vmul.f32 %v416, %v451
        %v470 = vmul.f32 %v418, %v451
        %v471 = vmul.f32 %v420, %v451
        %v472 = vmul.f32 %v422, %v451
        %v473 = vmul.f32 %v424, %v451
        %v474 = vmul.f32 %v426, %v451
        %v475 = vmul.f32 %v428, %v451
        %v476 = vmul.f32 %v430, %v451
        %v477 = vmul.f32 %v432, %v451
        %v478 = vmul.f32 %v434, %v451
        %v479 = vmul.f32 %v436, %v451
        %v480 = vmul.f32 %v438, %v451
        %v481 = vmul.f32 %v440, %v451
        %v482 = vmul.f32 %v442, %v451
        %v483 = vmul.f32 %v444, %v451
        %v484 = vsub.f32 %v349, %v452
        %v485 = vsub.f32 %v350, %v453
        %v486 = vsub.f32 %v351, %v454
        %v487 = vsub.f32 %v352, %v455
        %v488 = vsub.f32 %v353, %v456
        %v489 = vsub.f32 %v354, %v457
        %v490 = vsub.f32 %v355, %v458
        %v491 = vsub.f32 %v356, %v459
        %v492 = vsub.f32 %v357, %v460
        %v493 = vsub.f32 %v358, %v461
        %v494 = vsub.f32 %v359, %v462
        %v495 = vsub.f32 %v360, %v463
        %v496 = vsub.f32 %v361, %v464
        %v497 = vsub.f32 %v362, %v465
        %v498 = vsub.f32 %v363, %v466
        %v499 = vsub.f32 %v364, %v467
        %v500 = vsub.f32 %v365, %v468
        %v501 = vsub.f32 %v366, %v469
        %v502 = vsub.f32 %v367, %v470
        %v503 = vsub.f32 %v368, %v471
        %v504 = vsub.f32 %v369, %v472
        %v505 = vsub.f32 %v370, %v473
        %v506 = vsub.f32 %v371, %v474
        %v507 = vsub.f32 %v372, %v475
        %v508 = vsub.f32 %v373, %v476
        %v509 = vsub.f32 %v374, %v477
        %v510 = vsub.f32 %v375, %v478
        %v511 = vsub.f32 %v376, %v479
        %v512 = vsub.f32 %v377, %v480
        %v513 = vsub.f32 %v378, %v481
        %v514 = vsub.f32 %v379, %v482
        %v515 = vsub.f32 %v380, %v483
        %v516 = vmul.f32 %v484, %v484
        %v517 = vmul.f32 %v485, %v485
        %v518 = vmul.f32 %v486, %v486
        %v519 = vmul.f32 %v487, %v487
        %v520 = vmul.f32 %v488, %v488
        %v521 = vmul.f32 %v489, %v489
        %v522 = vmul.f32 %v490, %v490
        %v523 = vmul.f32 %v491, %v491
        %v524 = vmul.f32 %v492, %v492
        %v525 = vmul.f32 %v493, %v493
        %v526 = vmul.f32 %v494, %v494
        %v527 = vmul.f32 %v495, %v495
        %v528 = vmul.f32 %v496, %v496
        %v529 = vmul.f32 %v497, %v497
        %v530 = vmul.f32 %v498, %v498
        %v531 = vmul.f32 %v499, %v499
        %v532 = vmul.f32 %v500, %v500
        %v533 = vmul.f32 %v501, %v501
        %v534 = vmul.f32 %v502, %v502
        %v535 = vmul.f32 %v503, %v503
        %v536 = vmul.f32 %v504, %v504
        %v537 = vmul.f32 %v505, %v505
        %v538 = vmul.f32 %v506, %v506
        %v539 = vmul.f32 %v507, %v507
        %v540 = vmul.f32 %v508, %v508
        %v541 = vmul.f32 %v509, %v509
        %v542 = vmul.f32 %v510, %v510
        %v543 = vmul.f32 %v511, %v511
        %v544 = vmul.f32 %v512, %v512
        %v545 = vmul.f32 %v513, %v513
        %v546 = vmul.f32 %v514, %v514
        %v547 = vmul.f32 %v515, %v515
        %548 = vadd.xlane.f32.xlu0 %v516
        %v549 = vpop.xlane.xlu0 %548
        %550 = vadd.xlane.f32.xlu0 %v517
        %v551 = vpop.xlane.xlu0 %550
        %552 = vadd.xlane.f32.xlu0 %v518
        %v553 = vpop.xlane.xlu0 %552
        %554 = vadd.xlane.f32.xlu0 %v519
        %v555 = vpop.xlane.xlu0 %554
        %556 = vadd.xlane.f32.xlu0 %v520
        %v557 = vpop.xlane.xlu0 %556
        %558 = vadd.xlane.f32.xlu0 %v521
        %v559 = vpop.xlane.xlu0 %558
        %560 = vadd.xlane.f32.xlu0 %v522
        %v561 = vpop.xlane.xlu0 %560
        %562 = vadd.xlane.f32.xlu0 %v523
        %v563 = vpop.xlane.xlu0 %562
        %564 = vadd.xlane.f32.xlu0 %v524
        %v565 = vpop.xlane.xlu0 %564
        %566 = vadd.xlane.f32.xlu0 %v525
        %v567 = vpop.xlane.xlu0 %566
        %568 = vadd.xlane.f32.xlu0 %v526
        %v569 = vpop.xlane.xlu0 %568
        %570 = vadd.xlane.f32.xlu0 %v527
        %v571 = vpop.xlane.xlu0 %570
        %572 = vadd.xlane.f32.xlu0 %v528
        %v573 = vpop.xlane.xlu0 %572
        %574 = vadd.xlane.f32.xlu0 %v529
        %v575 = vpop.xlane.xlu0 %574
        %576 = vadd.xlane.f32.xlu0 %v530
        %v577 = vpop.xlane.xlu0 %576
        %578 = vadd.xlane.f32.xlu0 %v531
        %v579 = vpop.xlane.xlu0 %578
        %580 = vadd.xlane.f32.xlu0 %v532
        %v581 = vpop.xlane.xlu0 %580
        %582 = vadd.xlane.f32.xlu0 %v533
        %v583 = vpop.xlane.xlu0 %582
        %584 = vadd.xlane.f32.xlu0 %v534
        %v585 = vpop.xlane.xlu0 %584
        %586 = vadd.xlane.f32.xlu0 %v535
        %v587 = vpop.xlane.xlu0 %586
        %588 = vadd.xlane.f32.xlu0 %v536
        %v589 = vpop.xlane.xlu0 %588
        %590 = vadd.xlane.f32.xlu0 %v537
        %v591 = vpop.xlane.xlu0 %590
        %592 = vadd.xlane.f32.xlu0 %v538
        %v593 = vpop.xlane.xlu0 %592
        %594 = vadd.xlane.f32.xlu0 %v539
        %v595 = vpop.xlane.xlu0 %594
        %596 = vadd.xlane.f32.xlu0 %v540
        %v597 = vpop.xlane.xlu0 %596
        %598 = vadd.xlane.f32.xlu0 %v541
        %v599 = vpop.xlane.xlu0 %598
        %600 = vadd.xlane.f32.xlu0 %v542
        %v601 = vpop.xlane.xlu0 %600
        %602 = vadd.xlane.f32.xlu0 %v543
        %v603 = vpop.xlane.xlu0 %602
        %604 = vadd.xlane.f32.xlu0 %v544
        %v605 = vpop.xlane.xlu0 %604
        %606 = vadd.xlane.f32.xlu0 %v545
        %v607 = vpop.xlane.xlu0 %606
        %608 = vadd.xlane.f32.xlu0 %v546
        %v609 = vpop.xlane.xlu0 %608
        %610 = vadd.xlane.f32.xlu0 %v547
        %v611 = vpop.xlane.xlu0 %610
        %v612 = vmul.f32 %v549, %v451
        %v613 = vmul.f32 %v551, %v451
        %v614 = vmul.f32 %v553, %v451
        %v615 = vmul.f32 %v555, %v451
        %v616 = vmul.f32 %v557, %v451
        %v617 = vmul.f32 %v559, %v451
        %v618 = vmul.f32 %v561, %v451
        %v619 = vmul.f32 %v563, %v451
        %v620 = vmul.f32 %v565, %v451
        %v621 = vmul.f32 %v567, %v451
        %v622 = vmul.f32 %v569, %v451
        %v623 = vmul.f32 %v571, %v451
        %v624 = vmul.f32 %v573, %v451
        %v625 = vmul.f32 %v575, %v451
        %v626 = vmul.f32 %v577, %v451
        %v627 = vmul.f32 %v579, %v451
        %v628 = vmul.f32 %v581, %v451
        %v629 = vmul.f32 %v583, %v451
        %v630 = vmul.f32 %v585, %v451
        %v631 = vmul.f32 %v587, %v451
        %v632 = vmul.f32 %v589, %v451
        %v633 = vmul.f32 %v591, %v451
        %v634 = vmul.f32 %v593, %v451
        %v635 = vmul.f32 %v595, %v451
        %v636 = vmul.f32 %v597, %v451
        %v637 = vmul.f32 %v599, %v451
        %v638 = vmul.f32 %v601, %v451
        %v639 = vmul.f32 %v603, %v451
        %v640 = vmul.f32 %v605, %v451
        %v641 = vmul.f32 %v607, %v451
        %v642 = vmul.f32 %v609, %v451
        %v643 = vmul.f32 %v611, %v451
        %v644 = vadd.f32 %v612, 1e-06
        %v645 = vadd.f32 %v613, 1e-06
        %v646 = vadd.f32 %v614, 1e-06
        %v647 = vadd.f32 %v615, 1e-06
        %v648 = vadd.f32 %v616, 1e-06
        %v649 = vadd.f32 %v617, 1e-06
        %v650 = vadd.f32 %v618, 1e-06
        %v651 = vadd.f32 %v619, 1e-06
        %v652 = vadd.f32 %v620, 1e-06
        %v653 = vadd.f32 %v621, 1e-06
        %v654 = vadd.f32 %v622, 1e-06
        %v655 = vadd.f32 %v623, 1e-06
        %v656 = vadd.f32 %v624, 1e-06
        %v657 = vadd.f32 %v625, 1e-06
        %v658 = vadd.f32 %v626, 1e-06
        %v659 = vadd.f32 %v627, 1e-06
        %v660 = vadd.f32 %v628, 1e-06
        %v661 = vadd.f32 %v629, 1e-06
        %v662 = vadd.f32 %v630, 1e-06
        %v663 = vadd.f32 %v631, 1e-06
        %v664 = vadd.f32 %v632, 1e-06
        %v665 = vadd.f32 %v633, 1e-06
        %v666 = vadd.f32 %v634, 1e-06
        %v667 = vadd.f32 %v635, 1e-06
        %v668 = vadd.f32 %v636, 1e-06
        %v669 = vadd.f32 %v637, 1e-06
        %v670 = vadd.f32 %v638, 1e-06
        %v671 = vadd.f32 %v639, 1e-06
        %v672 = vadd.f32 %v640, 1e-06
        %v673 = vadd.f32 %v641, 1e-06
        %v674 = vadd.f32 %v642, 1e-06
        %v675 = vadd.f32 %v643, 1e-06
        %v676 = vrsqrt.pop %v644
        %v677 = vmul.f32 %v676, %v644
        %v678 = vmul.f32 %v677, %v676
        %v679 = vmul.f32 0.5, %v678
        %v680 = vsub.f32 1.5, %v679
        %v681 = vmul.f32 %v676, %v680
        %vm682 = vweird.f32 %v644
        %vm683 = vweird.f32 %v676
        %vm684 = vmor %vm682, %vm683
        %v685 = vsel %vm684, %v676, %v681
        %v686 = vrsqrt.pop %v645
        %v687 = vmul.f32 %v686, %v645
        %v688 = vmul.f32 %v687, %v686
        %v689 = vmul.f32 0.5, %v688
        %v690 = vsub.f32 1.5, %v689
        %v691 = vmul.f32 %v686, %v690
        %vm692 = vweird.f32 %v645
        %vm693 = vweird.f32 %v686
        %vm694 = vmor %vm692, %vm693
        %v695 = vsel %vm694, %v686, %v691
        %v696 = vrsqrt.pop %v646
        %v697 = vmul.f32 %v696, %v646
        %v698 = vmul.f32 %v697, %v696
        %v699 = vmul.f32 0.5, %v698
        %v700 = vsub.f32 1.5, %v699
        %v701 = vmul.f32 %v696, %v700
        %vm702 = vweird.f32 %v646
        %vm703 = vweird.f32 %v696
        %vm704 = vmor %vm702, %vm703
        %v705 = vsel %vm704, %v696, %v701
        %v706 = vrsqrt.pop %v647
        %v707 = vmul.f32 %v706, %v647
        %v708 = vmul.f32 %v707, %v706
        %v709 = vmul.f32 0.5, %v708
        %v710 = vsub.f32 1.5, %v709
        %v711 = vmul.f32 %v706, %v710
        %vm712 = vweird.f32 %v647
        %vm713 = vweird.f32 %v706
        %vm714 = vmor %vm712, %vm713
        %v715 = vsel %vm714, %v706, %v711
        %v716 = vrsqrt.pop %v648
        %v717 = vmul.f32 %v716, %v648
        %v718 = vmul.f32 %v717, %v716
        %v719 = vmul.f32 0.5, %v718
        %v720 = vsub.f32 1.5, %v719
        %v721 = vmul.f32 %v716, %v720
        %vm722 = vweird.f32 %v648
        %vm723 = vweird.f32 %v716
        %vm724 = vmor %vm722, %vm723
        %v725 = vsel %vm724, %v716, %v721
        %v726 = vrsqrt.pop %v649
        %v727 = vmul.f32 %v726, %v649
        %v728 = vmul.f32 %v727, %v726
        %v729 = vmul.f32 0.5, %v728
        %v730 = vsub.f32 1.5, %v729
        %v731 = vmul.f32 %v726, %v730
        %vm732 = vweird.f32 %v649
        %vm733 = vweird.f32 %v726
        %vm734 = vmor %vm732, %vm733
        %v735 = vsel %vm734, %v726, %v731
        %v736 = vrsqrt.pop %v650
        %v737 = vmul.f32 %v736, %v650
        %v738 = vmul.f32 %v737, %v736
        %v739 = vmul.f32 0.5, %v738
        %v740 = vsub.f32 1.5, %v739
        %v741 = vmul.f32 %v736, %v740
        %vm742 = vweird.f32 %v650
        %vm743 = vweird.f32 %v736
        %vm744 = vmor %vm742, %vm743
        %v745 = vsel %vm744, %v736, %v741
        %v746 = vrsqrt.pop %v651
        %v747 = vmul.f32 %v746, %v651
        %v748 = vmul.f32 %v747, %v746
        %v749 = vmul.f32 0.5, %v748
        %v750 = vsub.f32 1.5, %v749
        %v751 = vmul.f32 %v746, %v750
        %vm752 = vweird.f32 %v651
        %vm753 = vweird.f32 %v746
        %vm754 = vmor %vm752, %vm753
        %v755 = vsel %vm754, %v746, %v751
        %v756 = vrsqrt.pop %v652
        %v757 = vmul.f32 %v756, %v652
        %v758 = vmul.f32 %v757, %v756
        %v759 = vmul.f32 0.5, %v758
        %v760 = vsub.f32 1.5, %v759
        %v761 = vmul.f32 %v756, %v760
        %vm762 = vweird.f32 %v652
        %vm763 = vweird.f32 %v756
        %vm764 = vmor %vm762, %vm763
        %v765 = vsel %vm764, %v756, %v761
        %v766 = vrsqrt.pop %v653
        %v767 = vmul.f32 %v766, %v653
        %v768 = vmul.f32 %v767, %v766
        %v769 = vmul.f32 0.5, %v768
        %v770 = vsub.f32 1.5, %v769
        %v771 = vmul.f32 %v766, %v770
        %vm772 = vweird.f32 %v653
        %vm773 = vweird.f32 %v766
        %vm774 = vmor %vm772, %vm773
        %v775 = vsel %vm774, %v766, %v771
        %v776 = vrsqrt.pop %v654
        %v777 = vmul.f32 %v776, %v654
        %v778 = vmul.f32 %v777, %v776
        %v779 = vmul.f32 0.5, %v778
        %v780 = vsub.f32 1.5, %v779
        %v781 = vmul.f32 %v776, %v780
        %vm782 = vweird.f32 %v654
        %vm783 = vweird.f32 %v776
        %vm784 = vmor %vm782, %vm783
        %v785 = vsel %vm784, %v776, %v781
        %v786 = vrsqrt.pop %v655
        %v787 = vmul.f32 %v786, %v655
        %v788 = vmul.f32 %v787, %v786
        %v789 = vmul.f32 0.5, %v788
        %v790 = vsub.f32 1.5, %v789
        %v791 = vmul.f32 %v786, %v790
        %vm792 = vweird.f32 %v655
        %vm793 = vweird.f32 %v786
        %vm794 = vmor %vm792, %vm793
        %v795 = vsel %vm794, %v786, %v791
        %v796 = vrsqrt.pop %v656
        %v797 = vmul.f32 %v796, %v656
        %v798 = vmul.f32 %v797, %v796
        %v799 = vmul.f32 0.5, %v798
        %v800 = vsub.f32 1.5, %v799
        %v801 = vmul.f32 %v796, %v800
        %vm802 = vweird.f32 %v656
        %vm803 = vweird.f32 %v796
        %vm804 = vmor %vm802, %vm803
        %v805 = vsel %vm804, %v796, %v801
        %v806 = vrsqrt.pop %v657
        %v807 = vmul.f32 %v806, %v657
        %v808 = vmul.f32 %v807, %v806
        %v809 = vmul.f32 0.5, %v808
        %v810 = vsub.f32 1.5, %v809
        %v811 = vmul.f32 %v806, %v810
        %vm812 = vweird.f32 %v657
        %vm813 = vweird.f32 %v806
        %vm814 = vmor %vm812, %vm813
        %v815 = vsel %vm814, %v806, %v811
        %v816 = vrsqrt.pop %v658
        %v817 = vmul.f32 %v816, %v658
        %v818 = vmul.f32 %v817, %v816
        %v819 = vmul.f32 0.5, %v818
        %v820 = vsub.f32 1.5, %v819
        %v821 = vmul.f32 %v816, %v820
        %vm822 = vweird.f32 %v658
        %vm823 = vweird.f32 %v816
        %vm824 = vmor %vm822, %vm823
        %v825 = vsel %vm824, %v816, %v821
        %v826 = vrsqrt.pop %v659
        %v827 = vmul.f32 %v826, %v659
        %v828 = vmul.f32 %v827, %v826
        %v829 = vmul.f32 0.5, %v828
        %v830 = vsub.f32 1.5, %v829
        %v831 = vmul.f32 %v826, %v830
        %vm832 = vweird.f32 %v659
        %vm833 = vweird.f32 %v826
        %vm834 = vmor %vm832, %vm833
        %v835 = vsel %vm834, %v826, %v831
        %v836 = vrsqrt.pop %v660
        %v837 = vmul.f32 %v836, %v660
        %v838 = vmul.f32 %v837, %v836
        %v839 = vmul.f32 0.5, %v838
        %v840 = vsub.f32 1.5, %v839
        %v841 = vmul.f32 %v836, %v840
        %vm842 = vweird.f32 %v660
        %vm843 = vweird.f32 %v836
        %vm844 = vmor %vm842, %vm843
        %v845 = vsel %vm844, %v836, %v841
        %v846 = vrsqrt.pop %v661
        %v847 = vmul.f32 %v846, %v661
        %v848 = vmul.f32 %v847, %v846
        %v849 = vmul.f32 0.5, %v848
        %v850 = vsub.f32 1.5, %v849
        %v851 = vmul.f32 %v846, %v850
        %vm852 = vweird.f32 %v661
        %vm853 = vweird.f32 %v846
        %vm854 = vmor %vm852, %vm853
        %v855 = vsel %vm854, %v846, %v851
        %v856 = vrsqrt.pop %v662
        %v857 = vmul.f32 %v856, %v662
        %v858 = vmul.f32 %v857, %v856
        %v859 = vmul.f32 0.5, %v858
        %v860 = vsub.f32 1.5, %v859
        %v861 = vmul.f32 %v856, %v860
        %vm862 = vweird.f32 %v662
        %vm863 = vweird.f32 %v856
        %vm864 = vmor %vm862, %vm863
        %v865 = vsel %vm864, %v856, %v861
        %v866 = vrsqrt.pop %v663
        %v867 = vmul.f32 %v866, %v663
        %v868 = vmul.f32 %v867, %v866
        %v869 = vmul.f32 0.5, %v868
        %v870 = vsub.f32 1.5, %v869
        %v871 = vmul.f32 %v866, %v870
        %vm872 = vweird.f32 %v663
        %vm873 = vweird.f32 %v866
        %vm874 = vmor %vm872, %vm873
        %v875 = vsel %vm874, %v866, %v871
        %v876 = vrsqrt.pop %v664
        %v877 = vmul.f32 %v876, %v664
        %v878 = vmul.f32 %v877, %v876
        %v879 = vmul.f32 0.5, %v878
        %v880 = vsub.f32 1.5, %v879
        %v881 = vmul.f32 %v876, %v880
        %vm882 = vweird.f32 %v664
        %vm883 = vweird.f32 %v876
        %vm884 = vmor %vm882, %vm883
        %v885 = vsel %vm884, %v876, %v881
        %v886 = vrsqrt.pop %v665
        %v887 = vmul.f32 %v886, %v665
        %v888 = vmul.f32 %v887, %v886
        %v889 = vmul.f32 0.5, %v888
        %v890 = vsub.f32 1.5, %v889
        %v891 = vmul.f32 %v886, %v890
        %vm892 = vweird.f32 %v665
        %vm893 = vweird.f32 %v886
        %vm894 = vmor %vm892, %vm893
        %v895 = vsel %vm894, %v886, %v891
        %v896 = vrsqrt.pop %v666
        %v897 = vmul.f32 %v896, %v666
        %v898 = vmul.f32 %v897, %v896
        %v899 = vmul.f32 0.5, %v898
        %v900 = vsub.f32 1.5, %v899
        %v901 = vmul.f32 %v896, %v900
        %vm902 = vweird.f32 %v666
        %vm903 = vweird.f32 %v896
        %vm904 = vmor %vm902, %vm903
        %v905 = vsel %vm904, %v896, %v901
        %v906 = vrsqrt.pop %v667
        %v907 = vmul.f32 %v906, %v667
        %v908 = vmul.f32 %v907, %v906
        %v909 = vmul.f32 0.5, %v908
        %v910 = vsub.f32 1.5, %v909
        %v911 = vmul.f32 %v906, %v910
        %vm912 = vweird.f32 %v667
        %vm913 = vweird.f32 %v906
        %vm914 = vmor %vm912, %vm913
        %v915 = vsel %vm914, %v906, %v911
        %v916 = vrsqrt.pop %v668
        %v917 = vmul.f32 %v916, %v668
        %v918 = vmul.f32 %v917, %v916
        %v919 = vmul.f32 0.5, %v918
        %v920 = vsub.f32 1.5, %v919
        %v921 = vmul.f32 %v916, %v920
        %vm922 = vweird.f32 %v668
        %vm923 = vweird.f32 %v916
        %vm924 = vmor %vm922, %vm923
        %v925 = vsel %vm924, %v916, %v921
        %v926 = vrsqrt.pop %v669
        %v927 = vmul.f32 %v926, %v669
        %v928 = vmul.f32 %v927, %v926
        %v929 = vmul.f32 0.5, %v928
        %v930 = vsub.f32 1.5, %v929
        %v931 = vmul.f32 %v926, %v930
        %vm932 = vweird.f32 %v669
        %vm933 = vweird.f32 %v926
        %vm934 = vmor %vm932, %vm933
        %v935 = vsel %vm934, %v926, %v931
        %v936 = vrsqrt.pop %v670
        %v937 = vmul.f32 %v936, %v670
        %v938 = vmul.f32 %v937, %v936
        %v939 = vmul.f32 0.5, %v938
        %v940 = vsub.f32 1.5, %v939
        %v941 = vmul.f32 %v936, %v940
        %vm942 = vweird.f32 %v670
        %vm943 = vweird.f32 %v936
        %vm944 = vmor %vm942, %vm943
        %v945 = vsel %vm944, %v936, %v941
        %v946 = vrsqrt.pop %v671
        %v947 = vmul.f32 %v946, %v671
        %v948 = vmul.f32 %v947, %v946
        %v949 = vmul.f32 0.5, %v948
        %v950 = vsub.f32 1.5, %v949
        %v951 = vmul.f32 %v946, %v950
        %vm952 = vweird.f32 %v671
        %vm953 = vweird.f32 %v946
        %vm954 = vmor %vm952, %vm953
        %v955 = vsel %vm954, %v946, %v951
        %v956 = vrsqrt.pop %v672
        %v957 = vmul.f32 %v956, %v672
        %v958 = vmul.f32 %v957, %v956
        %v959 = vmul.f32 0.5, %v958
        %v960 = vsub.f32 1.5, %v959
        %v961 = vmul.f32 %v956, %v960
        %vm962 = vweird.f32 %v672
        %vm963 = vweird.f32 %v956
        %vm964 = vmor %vm962, %vm963
        %v965 = vsel %vm964, %v956, %v961
        %v966 = vrsqrt.pop %v673
        %v967 = vmul.f32 %v966, %v673
        %v968 = vmul.f32 %v967, %v966
        %v969 = vmul.f32 0.5, %v968
        %v970 = vsub.f32 1.5, %v969
        %v971 = vmul.f32 %v966, %v970
        %vm972 = vweird.f32 %v673
        %vm973 = vweird.f32 %v966
        %vm974 = vmor %vm972, %vm973
        %v975 = vsel %vm974, %v966, %v971
        %v976 = vrsqrt.pop %v674
        %v977 = vmul.f32 %v976, %v674
        %v978 = vmul.f32 %v977, %v976
        %v979 = vmul.f32 0.5, %v978
        %v980 = vsub.f32 1.5, %v979
        %v981 = vmul.f32 %v976, %v980
        %vm982 = vweird.f32 %v674
        %vm983 = vweird.f32 %v976
        %vm984 = vmor %vm982, %vm983
        %v985 = vsel %vm984, %v976, %v981
        %v986 = vrsqrt.pop %v675
        %v987 = vmul.f32 %v986, %v675
        %v988 = vmul.f32 %v987, %v986
        %v989 = vmul.f32 0.5, %v988
        %v990 = vsub.f32 1.5, %v989
        %v991 = vmul.f32 %v986, %v990
        %vm992 = vweird.f32 %v675
        %vm993 = vweird.f32 %v986
        %vm994 = vmor %vm992, %vm993
        %v995 = vsel %vm994, %v986, %v991
        %v996 = vmul.f32 %v484, %v685
        %v997 = vmul.f32 %v485, %v695
        %v998 = vmul.f32 %v486, %v705
        %v999 = vmul.f32 %v487, %v715
        %v1000 = vmul.f32 %v488, %v725
        %v1001 = vmul.f32 %v489, %v735
        %v1002 = vmul.f32 %v490, %v745
        %v1003 = vmul.f32 %v491, %v755
        %v1004 = vmul.f32 %v492, %v765
        %v1005 = vmul.f32 %v493, %v775
        %v1006 = vmul.f32 %v494, %v785
        %v1007 = vmul.f32 %v495, %v795
        %v1008 = vmul.f32 %v496, %v805
        %v1009 = vmul.f32 %v497, %v815
        %v1010 = vmul.f32 %v498, %v825
        %v1011 = vmul.f32 %v499, %v835
        %v1012 = vmul.f32 %v500, %v845
        %v1013 = vmul.f32 %v501, %v855
        %v1014 = vmul.f32 %v502, %v865
        %v1015 = vmul.f32 %v503, %v875
        %v1016 = vmul.f32 %v504, %v885
        %v1017 = vmul.f32 %v505, %v895
        %v1018 = vmul.f32 %v506, %v905
        %v1019 = vmul.f32 %v507, %v915
        %v1020 = vmul.f32 %v508, %v925
        %v1021 = vmul.f32 %v509, %v935
        %v1022 = vmul.f32 %v510, %v945
        %v1023 = vmul.f32 %v511, %v955
        %v1024 = vmul.f32 %v512, %v965
        %v1025 = vmul.f32 %v513, %v975
        %v1026 = vmul.f32 %v514, %v985
        %v1027 = vmul.f32 %v515, %v995
        %v1028 = vld [vmem:[#allocation5] sm:$0x1]
        %v1030 = vperm.slane %v1028, 0
        %v1032 = vmul.f32 %v996, %v1030
        %v1033 = vmul.f32 %v997, %v1030
        %v1034 = vmul.f32 %v998, %v1030
        %v1035 = vmul.f32 %v999, %v1030
        %v1036 = vmul.f32 %v1000, %v1030
        %v1037 = vmul.f32 %v1001, %v1030
        %v1038 = vmul.f32 %v1002, %v1030
        %v1039 = vmul.f32 %v1003, %v1030
        %v1040 = vmul.f32 %v1004, %v1030
        %v1041 = vmul.f32 %v1005, %v1030
        %v1042 = vmul.f32 %v1006, %v1030
        %v1043 = vmul.f32 %v1007, %v1030
        %v1044 = vmul.f32 %v1008, %v1030
        %v1045 = vmul.f32 %v1009, %v1030
        %v1046 = vmul.f32 %v1010, %v1030
        %v1047 = vmul.f32 %v1011, %v1030
        %v1048 = vmul.f32 %v1012, %v1030
        %v1049 = vmul.f32 %v1013, %v1030
        %v1050 = vmul.f32 %v1014, %v1030
        %v1051 = vmul.f32 %v1015, %v1030
        %v1052 = vmul.f32 %v1016, %v1030
        %v1053 = vmul.f32 %v1017, %v1030
        %v1054 = vmul.f32 %v1018, %v1030
        %v1055 = vmul.f32 %v1019, %v1030
        %v1056 = vmul.f32 %v1020, %v1030
        %v1057 = vmul.f32 %v1021, %v1030
        %v1058 = vmul.f32 %v1022, %v1030
        %v1059 = vmul.f32 %v1023, %v1030
        %v1060 = vmul.f32 %v1024, %v1030
        %v1061 = vmul.f32 %v1025, %v1030
        %v1062 = vmul.f32 %v1026, %v1030
        %v1063 = vmul.f32 %v1027, %v1030
        %v1064 = vld [vmem:[%s2] sm:$0x1]
        %v1066 = vperm.slane %v1064, 0
        %v1068 = vadd.f32 %v1032, %v1066
        %v1069 = vadd.f32 %v1033, %v1066
        %v1070 = vadd.f32 %v1034, %v1066
        %v1071 = vadd.f32 %v1035, %v1066
        %v1072 = vadd.f32 %v1036, %v1066
        %v1073 = vadd.f32 %v1037, %v1066
        %v1074 = vadd.f32 %v1038, %v1066
        %v1075 = vadd.f32 %v1039, %v1066
        %v1076 = vadd.f32 %v1040, %v1066
        %v1077 = vadd.f32 %v1041, %v1066
        %v1078 = vadd.f32 %v1042, %v1066
        %v1079 = vadd.f32 %v1043, %v1066
        %v1080 = vadd.f32 %v1044, %v1066
        %v1081 = vadd.f32 %v1045, %v1066
        %v1082 = vadd.f32 %v1046, %v1066
        %v1083 = vadd.f32 %v1047, %v1066
        %v1084 = vadd.f32 %v1048, %v1066
        %v1085 = vadd.f32 %v1049, %v1066
        %v1086 = vadd.f32 %v1050, %v1066
        %v1087 = vadd.f32 %v1051, %v1066
        %v1088 = vadd.f32 %v1052, %v1066
        %v1089 = vadd.f32 %v1053, %v1066
        %v1090 = vadd.f32 %v1054, %v1066
        %v1091 = vadd.f32 %v1055, %v1066
        %v1092 = vadd.f32 %v1056, %v1066
        %v1093 = vadd.f32 %v1057, %v1066
        %v1094 = vadd.f32 %v1058, %v1066
        %v1095 = vadd.f32 %v1059, %v1066
        %v1096 = vadd.f32 %v1060, %v1066
        %v1097 = vadd.f32 %v1061, %v1066
        %v1098 = vadd.f32 %v1062, %v1066
        %v1099 = vadd.f32 %v1063, %v1066
        %v1100 = vpack.c.bf16 %v1069, %v1068
        %v1101 = vpack.c.bf16 %v1071, %v1070
        %v1102 = vpack.c.bf16 %v1073, %v1072
        %v1103 = vpack.c.bf16 %v1075, %v1074
        %v1104 = vpack.c.bf16 %v1077, %v1076
        %v1105 = vpack.c.bf16 %v1079, %v1078
        %v1106 = vpack.c.bf16 %v1081, %v1080
        %v1107 = vpack.c.bf16 %v1083, %v1082
        %v1108 = vpack.c.bf16 %v1085, %v1084
        %v1109 = vpack.c.bf16 %v1087, %v1086
        %v1110 = vpack.c.bf16 %v1089, %v1088
        %v1111 = vpack.c.bf16 %v1091, %v1090
        %v1112 = vpack.c.bf16 %v1093, %v1092
        %v1113 = vpack.c.bf16 %v1095, %v1094
        %v1114 = vpack.c.bf16 %v1097, %v1096
        %v1115 = vpack.c.bf16 %v1099, %v1098
        %v1116 = vld [vmem:[#allocation7] sm:$0xff]
        %v1117 = vld [vmem:[#allocation7 + $0x8] sm:$0xff]
        %v1118 = vld [vmem:[#allocation7 + $0x10] sm:$0xff]
        %v1119 = vld [vmem:[#allocation7 + $0x18] sm:$0xff]
        %v1120 = vld [vmem:[#allocation7 + $0x20] sm:$0xff]
        %v1121 = vld [vmem:[#allocation7 + $0x28] sm:$0xff]
        %v1122 = vld [vmem:[#allocation7 + $0x30] sm:$0xff]
        %v1123 = vld [vmem:[#allocation7 + $0x38] sm:$0xff]
        %v1124 = vld [vmem:[#allocation7 + $0x40] sm:$0xff]
        %v1125 = vld [vmem:[#allocation7 + $0x48] sm:$0xff]
        %v1126 = vld [vmem:[#allocation7 + $0x50] sm:$0xff]
        %v1127 = vld [vmem:[#allocation7 + $0x58] sm:$0xff]
        %v1128 = vld [vmem:[#allocation7 + $0x60] sm:$0xff]
        %v1129 = vld [vmem:[#allocation7 + $0x68] sm:$0xff]
        %v1130 = vld [vmem:[#allocation7 + $0x70] sm:$0xff]
        %v1131 = vld [vmem:[#allocation7 + $0x78] sm:$0xff]
        %v1132 = vld [vmem:[%s4] sm:$0x3]
        %v1134 = vperm.slane %v1132, 0
        %v1135 = vperm.slane %v1132, 1
        %v1154 = vunpack.c.l.b16 %v1116
        %v1155 = vunpack.c.h.b16 %v1116
        %v1156 = vunpack.c.l.b16 %v1117
        %v1157 = vunpack.c.h.b16 %v1117
        %v1158 = vunpack.c.l.b16 %v1118
        %v1159 = vunpack.c.h.b16 %v1118
        %v1160 = vunpack.c.l.b16 %v1119
        %v1161 = vunpack.c.h.b16 %v1119
        %v1162 = vunpack.c.l.b16 %v1120
        %v1163 = vunpack.c.h.b16 %v1120
        %v1164 = vunpack.c.l.b16 %v1121
        %v1165 = vunpack.c.h.b16 %v1121
        %v1166 = vunpack.c.l.b16 %v1122
        %v1167 = vunpack.c.h.b16 %v1122
        %v1168 = vunpack.c.l.b16 %v1123
        %v1169 = vunpack.c.h.b16 %v1123
        %v1170 = vunpack.c.l.b16 %v1124
        %v1171 = vunpack.c.h.b16 %v1124
        %v1172 = vunpack.c.l.b16 %v1125
        %v1173 = vunpack.c.h.b16 %v1125
        %v1174 = vunpack.c.l.b16 %v1126
        %v1175 = vunpack.c.h.b16 %v1126
        %v1176 = vunpack.c.l.b16 %v1127
        %v1177 = vunpack.c.h.b16 %v1127
        %v1178 = vunpack.c.l.b16 %v1128
        %v1179 = vunpack.c.h.b16 %v1128
        %v1180 = vunpack.c.l.b16 %v1129
        %v1181 = vunpack.c.h.b16 %v1129
        %v1182 = vunpack.c.l.b16 %v1130
        %v1183 = vunpack.c.h.b16 %v1130
        %v1184 = vunpack.c.l.b16 %v1131
        %v1185 = vunpack.c.h.b16 %v1131
        %v1186 = vpack.c.b16 %v1156, %v1154
        %v1187 = vpack.c.b16 %v1157, %v1155
        %v1188 = vpack.c.b16 %v1160, %v1158
        %v1189 = vpack.c.b16 %v1161, %v1159
        %v1190 = vpack.c.b16 %v1164, %v1162
        %v1191 = vpack.c.b16 %v1165, %v1163
        %v1192 = vpack.c.b16 %v1168, %v1166
        %v1193 = vpack.c.b16 %v1169, %v1167
        %v1194 = vpack.c.b16 %v1172, %v1170
        %v1195 = vpack.c.b16 %v1173, %v1171
        %v1196 = vpack.c.b16 %v1176, %v1174
        %v1197 = vpack.c.b16 %v1177, %v1175
        %v1198 = vpack.c.b16 %v1180, %v1178
        %v1199 = vpack.c.b16 %v1181, %v1179
        %v1200 = vpack.c.b16 %v1184, %v1182
        %v1201 = vpack.c.b16 %v1185, %v1183
        %1218 = vmatpush.bf16.msra.mxu0 %v1200
        %1219 = vmatpush.bf16.msra.mxu0 %v1198
        %1220 = vmatpush.bf16.msra.mxu0 %v1196
        %1221 = vmatpush.bf16.msra.mxu0 %v1194
        %1222 = vmatpush.bf16.msra.mxu0 %v1192
        %1223 = vmatpush.bf16.msra.mxu0 %v1190
        %1224 = vmatpush.bf16.msra.mxu0 %v1188
        %1225 = vmatpush.bf16.msra.mxu0 %v1186
        %1226 = vmatmul.bf16.gmra.mxu0 %v1100
        %v1227 = vpop.f32.mrf.mxu0
        %v1228 = vadd.f32 %v1134, %v1227
        %v1229 = vpop.f32.mrf.mxu0
        %v1230 = vadd.f32 %v1134, %v1229
        %1231 = vmatmul.bf16.gmra.mxu0 %v1101
        %v1232 = vpop.f32.mrf.mxu0
        %v1233 = vadd.f32 %v1134, %v1232
        %v1234 = vpop.f32.mrf.mxu0
        %v1235 = vadd.f32 %v1134, %v1234
        %1236 = vmatmul.bf16.gmra.mxu0 %v1102
        %v1237 = vpop.f32.mrf.mxu0
        %v1238 = vadd.f32 %v1134, %v1237
        %v1239 = vpop.f32.mrf.mxu0
        %v1240 = vadd.f32 %v1134, %v1239
        %1241 = vmatmul.bf16.gmra.mxu0 %v1103
        %v1242 = vpop.f32.mrf.mxu0
        %v1243 = vadd.f32 %v1134, %v1242
        %v1244 = vpop.f32.mrf.mxu0
        %v1245 = vadd.f32 %v1134, %v1244
        %1246 = vmatmul.bf16.gmra.mxu0 %v1104
        %v1247 = vpop.f32.mrf.mxu0
        %v1248 = vadd.f32 %v1134, %v1247
        %v1249 = vpop.f32.mrf.mxu0
        %v1250 = vadd.f32 %v1134, %v1249
        %1251 = vmatmul.bf16.gmra.mxu0 %v1105
        %v1252 = vpop.f32.mrf.mxu0
        %v1253 = vadd.f32 %v1134, %v1252
        %v1254 = vpop.f32.mrf.mxu0
        %v1255 = vadd.f32 %v1134, %v1254
        %1256 = vmatmul.bf16.gmra.mxu0 %v1106
        %v1257 = vpop.f32.mrf.mxu0
        %v1258 = vadd.f32 %v1134, %v1257
        %v1259 = vpop.f32.mrf.mxu0
        %v1260 = vadd.f32 %v1134, %v1259
        %1261 = vmatmul.bf16.gmra.mxu0 %v1107
        %v1262 = vpop.f32.mrf.mxu0
        %v1263 = vadd.f32 %v1134, %v1262
        %v1264 = vpop.f32.mrf.mxu0
        %v1265 = vadd.f32 %v1134, %v1264
        %1266 = vmatmul.bf16.gmra.mxu0 %v1108
        %v1267 = vpop.f32.mrf.mxu0
        %v1268 = vadd.f32 %v1134, %v1267
        %v1269 = vpop.f32.mrf.mxu0
        %v1270 = vadd.f32 %v1134, %v1269
        %1271 = vmatmul.bf16.gmra.mxu0 %v1109
        %v1272 = vpop.f32.mrf.mxu0
        %v1273 = vadd.f32 %v1134, %v1272
        %v1274 = vpop.f32.mrf.mxu0
        %v1275 = vadd.f32 %v1134, %v1274
        %1276 = vmatmul.bf16.gmra.mxu0 %v1110
        %v1277 = vpop.f32.mrf.mxu0
        %v1278 = vadd.f32 %v1134, %v1277
        %v1279 = vpop.f32.mrf.mxu0
        %v1280 = vadd.f32 %v1134, %v1279
        %1281 = vmatmul.bf16.gmra.mxu0 %v1111
        %v1282 = vpop.f32.mrf.mxu0
        %v1283 = vadd.f32 %v1134, %v1282
        %v1284 = vpop.f32.mrf.mxu0
        %v1285 = vadd.f32 %v1134, %v1284
        %1286 = vmatmul.bf16.gmra.mxu0 %v1112
        %v1287 = vpop.f32.mrf.mxu0
        %v1288 = vadd.f32 %v1134, %v1287
        %v1289 = vpop.f32.mrf.mxu0
        %v1290 = vadd.f32 %v1134, %v1289
        %1291 = vmatmul.bf16.gmra.mxu0 %v1113
        %v1292 = vpop.f32.mrf.mxu0
        %v1293 = vadd.f32 %v1134, %v1292
        %v1294 = vpop.f32.mrf.mxu0
        %v1295 = vadd.f32 %v1134, %v1294
        %1296 = vmatmul.bf16.gmra.mxu0 %v1114
        %v1297 = vpop.f32.mrf.mxu0
        %v1298 = vadd.f32 %v1134, %v1297
        %v1299 = vpop.f32.mrf.mxu0
        %v1300 = vadd.f32 %v1134, %v1299
        %1301 = vmatmul.bf16.gmra.mxu0 %v1115
        %v1302 = vpop.f32.mrf.mxu0
        %v1303 = vadd.f32 %v1134, %v1302
        %v1304 = vpop.f32.mrf.mxu0
        %v1305 = vadd.f32 %v1134, %v1304
        %1306 = vdwg.mxu0
        %1307 = vmatpush.bf16.msra.mxu0 %v1201
        %1308 = vmatpush.bf16.msra.mxu0 %v1199
        %1309 = vmatpush.bf16.msra.mxu0 %v1197
        %1310 = vmatpush.bf16.msra.mxu0 %v1195
        %1311 = vmatpush.bf16.msra.mxu0 %v1193
        %1312 = vmatpush.bf16.msra.mxu0 %v1191
        %1313 = vmatpush.bf16.msra.mxu0 %v1189
        %1314 = vmatpush.bf16.msra.mxu0 %v1187
        %1315 = vmatmul.bf16.gmra.mxu0 %v1100
        %v1316 = vpop.f32.mrf.mxu0
        %v1317 = vadd.f32 %v1135, %v1316
        %v1318 = vpop.f32.mrf.mxu0
        %v1319 = vadd.f32 %v1135, %v1318
        %1320 = vmatmul.bf16.gmra.mxu0 %v1101
        %v1321 = vpop.f32.mrf.mxu0
        %v1322 = vadd.f32 %v1135, %v1321
        %v1323 = vpop.f32.mrf.mxu0
        %v1324 = vadd.f32 %v1135, %v1323
        %1325 = vmatmul.bf16.gmra.mxu0 %v1102
        %v1326 = vpop.f32.mrf.mxu0
        %v1327 = vadd.f32 %v1135, %v1326
        %v1328 = vpop.f32.mrf.mxu0
        %v1329 = vadd.f32 %v1135, %v1328
        %1330 = vmatmul.bf16.gmra.mxu0 %v1103
        %v1331 = vpop.f32.mrf.mxu0
        %v1332 = vadd.f32 %v1135, %v1331
        %v1333 = vpop.f32.mrf.mxu0
        %v1334 = vadd.f32 %v1135, %v1333
        %1335 = vmatmul.bf16.gmra.mxu0 %v1104
        %v1336 = vpop.f32.mrf.mxu0
        %v1337 = vadd.f32 %v1135, %v1336
        %v1338 = vpop.f32.mrf.mxu0
        %v1339 = vadd.f32 %v1135, %v1338
        %1340 = vmatmul.bf16.gmra.mxu0 %v1105
        %v1341 = vpop.f32.mrf.mxu0
        %v1342 = vadd.f32 %v1135, %v1341
        %v1343 = vpop.f32.mrf.mxu0
        %v1344 = vadd.f32 %v1135, %v1343
        %1345 = vmatmul.bf16.gmra.mxu0 %v1106
        %v1346 = vpop.f32.mrf.mxu0
        %v1347 = vadd.f32 %v1135, %v1346
        %v1348 = vpop.f32.mrf.mxu0
        %v1349 = vadd.f32 %v1135, %v1348
        %1350 = vmatmul.bf16.gmra.mxu0 %v1107
        %v1351 = vpop.f32.mrf.mxu0
        %v1352 = vadd.f32 %v1135, %v1351
        %v1353 = vpop.f32.mrf.mxu0
        %v1354 = vadd.f32 %v1135, %v1353
        %1355 = vmatmul.bf16.gmra.mxu0 %v1108
        %v1356 = vpop.f32.mrf.mxu0
        %v1357 = vadd.f32 %v1135, %v1356
        %v1358 = vpop.f32.mrf.mxu0
        %v1359 = vadd.f32 %v1135, %v1358
        %1360 = vmatmul.bf16.gmra.mxu0 %v1109
        %v1361 = vpop.f32.mrf.mxu0
        %v1362 = vadd.f32 %v1135, %v1361
        %v1363 = vpop.f32.mrf.mxu0
        %v1364 = vadd.f32 %v1135, %v1363
        %1365 = vmatmul.bf16.gmra.mxu0 %v1110
        %v1366 = vpop.f32.mrf.mxu0
        %v1367 = vadd.f32 %v1135, %v1366
        %v1368 = vpop.f32.mrf.mxu0
        %v1369 = vadd.f32 %v1135, %v1368
        %1370 = vmatmul.bf16.gmra.mxu0 %v1111
        %v1371 = vpop.f32.mrf.mxu0
        %v1372 = vadd.f32 %v1135, %v1371
        %v1373 = vpop.f32.mrf.mxu0
        %v1374 = vadd.f32 %v1135, %v1373
        %1375 = vmatmul.bf16.gmra.mxu0 %v1112
        %v1376 = vpop.f32.mrf.mxu0
        %v1377 = vadd.f32 %v1135, %v1376
        %v1378 = vpop.f32.mrf.mxu0
        %v1379 = vadd.f32 %v1135, %v1378
        %1380 = vmatmul.bf16.gmra.mxu0 %v1113
        %v1381 = vpop.f32.mrf.mxu0
        %v1382 = vadd.f32 %v1135, %v1381
        %v1383 = vpop.f32.mrf.mxu0
        %v1384 = vadd.f32 %v1135, %v1383
        %1385 = vmatmul.bf16.gmra.mxu0 %v1114
        %v1386 = vpop.f32.mrf.mxu0
        %v1387 = vadd.f32 %v1135, %v1386
        %v1388 = vpop.f32.mrf.mxu0
        %v1389 = vadd.f32 %v1135, %v1388
        %1390 = vmatmul.bf16.gmra.mxu0 %v1115
        %v1391 = vpop.f32.mrf.mxu0
        %v1392 = vadd.f32 %v1135, %v1391
        %v1393 = vpop.f32.mrf.mxu0
        %v1394 = vadd.f32 %v1135, %v1393
        %1395 = vdwg.mxu0
        %v1396 = vmax.f32 %v1228, 0.0
        %v1397 = vmax.f32 %v1317, 0.0
        %v1398 = vmax.f32 %v1230, 0.0
        %v1399 = vmax.f32 %v1319, 0.0
        %v1400 = vmax.f32 %v1233, 0.0
        %v1401 = vmax.f32 %v1322, 0.0
        %v1402 = vmax.f32 %v1235, 0.0
        %v1403 = vmax.f32 %v1324, 0.0
        %v1404 = vmax.f32 %v1238, 0.0
        %v1405 = vmax.f32 %v1327, 0.0
        %v1406 = vmax.f32 %v1240, 0.0
        %v1407 = vmax.f32 %v1329, 0.0
        %v1408 = vmax.f32 %v1243, 0.0
        %v1409 = vmax.f32 %v1332, 0.0
        %v1410 = vmax.f32 %v1245, 0.0
        %v1411 = vmax.f32 %v1334, 0.0
        %v1412 = vmax.f32 %v1248, 0.0
        %v1413 = vmax.f32 %v1337, 0.0
        %v1414 = vmax.f32 %v1250, 0.0
        %v1415 = vmax.f32 %v1339, 0.0
        %v1416 = vmax.f32 %v1253, 0.0
        %v1417 = vmax.f32 %v1342, 0.0
        %v1418 = vmax.f32 %v1255, 0.0
        %v1419 = vmax.f32 %v1344, 0.0
        %v1420 = vmax.f32 %v1258, 0.0
        %v1421 = vmax.f32 %v1347, 0.0
        %v1422 = vmax.f32 %v1260, 0.0
        %v1423 = vmax.f32 %v1349, 0.0
        %v1424 = vmax.f32 %v1263, 0.0
        %v1425 = vmax.f32 %v1352, 0.0
        %v1426 = vmax.f32 %v1265, 0.0
        %v1427 = vmax.f32 %v1354, 0.0
        %v1428 = vmax.f32 %v1268, 0.0
        %v1429 = vmax.f32 %v1357, 0.0
        %v1430 = vmax.f32 %v1270, 0.0
        %v1431 = vmax.f32 %v1359, 0.0
        %v1432 = vmax.f32 %v1273, 0.0
        %v1433 = vmax.f32 %v1362, 0.0
        %v1434 = vmax.f32 %v1275, 0.0
        %v1435 = vmax.f32 %v1364, 0.0
        %v1436 = vmax.f32 %v1278, 0.0
        %v1437 = vmax.f32 %v1367, 0.0
        %v1438 = vmax.f32 %v1280, 0.0
        %v1439 = vmax.f32 %v1369, 0.0
        %v1440 = vmax.f32 %v1283, 0.0
        %v1441 = vmax.f32 %v1372, 0.0
        %v1442 = vmax.f32 %v1285, 0.0
        %v1443 = vmax.f32 %v1374, 0.0
        %v1444 = vmax.f32 %v1288, 0.0
        %v1445 = vmax.f32 %v1377, 0.0
        %v1446 = vmax.f32 %v1290, 0.0
        %v1447 = vmax.f32 %v1379, 0.0
        %v1448 = vmax.f32 %v1293, 0.0
        %v1449 = vmax.f32 %v1382, 0.0
        %v1450 = vmax.f32 %v1295, 0.0
        %v1451 = vmax.f32 %v1384, 0.0
        %v1452 = vmax.f32 %v1298, 0.0
        %v1453 = vmax.f32 %v1387, 0.0
        %v1454 = vmax.f32 %v1300, 0.0
        %v1455 = vmax.f32 %v1389, 0.0
        %v1456 = vmax.f32 %v1303, 0.0
        %v1457 = vmax.f32 %v1392, 0.0
        %v1458 = vmax.f32 %v1305, 0.0
        %v1459 = vmax.f32 %v1394, 0.0
        %v1460 = vpack.c.bf16 %v1398, %v1396
        %v1461 = vpack.c.bf16 %v1399, %v1397
        %v1462 = vpack.c.bf16 %v1402, %v1400
        %v1463 = vpack.c.bf16 %v1403, %v1401
        %v1464 = vpack.c.bf16 %v1406, %v1404
        %v1465 = vpack.c.bf16 %v1407, %v1405
        %v1466 = vpack.c.bf16 %v1410, %v1408
        %v1467 = vpack.c.bf16 %v1411, %v1409
        %v1468 = vpack.c.bf16 %v1414, %v1412
        %v1469 = vpack.c.bf16 %v1415, %v1413
        %v1470 = vpack.c.bf16 %v1418, %v1416
        %v1471 = vpack.c.bf16 %v1419, %v1417
        %v1472 = vpack.c.bf16 %v1422, %v1420
        %v1473 = vpack.c.bf16 %v1423, %v1421
        %v1474 = vpack.c.bf16 %v1426, %v1424
        %v1475 = vpack.c.bf16 %v1427, %v1425
        %v1476 = vpack.c.bf16 %v1430, %v1428
        %v1477 = vpack.c.bf16 %v1431, %v1429
        %v1478 = vpack.c.bf16 %v1434, %v1432
        %v1479 = vpack.c.bf16 %v1435, %v1433
        %v1480 = vpack.c.bf16 %v1438, %v1436
        %v1481 = vpack.c.bf16 %v1439, %v1437
        %v1482 = vpack.c.bf16 %v1442, %v1440
        %v1483 = vpack.c.bf16 %v1443, %v1441
        %v1484 = vpack.c.bf16 %v1446, %v1444
        %v1485 = vpack.c.bf16 %v1447, %v1445
        %v1486 = vpack.c.bf16 %v1450, %v1448
        %v1487 = vpack.c.bf16 %v1451, %v1449
        %v1488 = vpack.c.bf16 %v1454, %v1452
        %v1489 = vpack.c.bf16 %v1455, %v1453
        %v1490 = vpack.c.bf16 %v1458, %v1456
        %v1491 = vpack.c.bf16 %v1459, %v1457
        %v1492 = vld [vmem:[#allocation8] sm:$0xf]
        %v1493 = vld [vmem:[#allocation8 + $0x4] sm:$0xf]
        %v1494 = vld [vmem:[#allocation8 + $0x8] sm:$0xf]
        %v1495 = vld [vmem:[#allocation8 + $0xc] sm:$0xf]
        %v1496 = vld [vmem:[#allocation8 + $0x10] sm:$0xf]
        %v1497 = vld [vmem:[#allocation8 + $0x14] sm:$0xf]
        %v1498 = vld [vmem:[#allocation8 + $0x18] sm:$0xf]
        %v1499 = vld [vmem:[#allocation8 + $0x1c] sm:$0xf]
        %v1500 = vld [vmem:[#allocation8 + $0x20] sm:$0xf]
        %v1501 = vld [vmem:[#allocation8 + $0x24] sm:$0xf]
        %v1502 = vld [vmem:[#allocation8 + $0x28] sm:$0xf]
        %v1503 = vld [vmem:[#allocation8 + $0x2c] sm:$0xf]
        %v1504 = vld [vmem:[#allocation8 + $0x30] sm:$0xf]
        %v1505 = vld [vmem:[#allocation8 + $0x34] sm:$0xf]
        %v1506 = vld [vmem:[#allocation8 + $0x38] sm:$0xf]
        %v1507 = vld [vmem:[#allocation8 + $0x3c] sm:$0xf]
        %v1508 = vld [vmem:[#allocation8 + $0x40] sm:$0xf]
        %v1509 = vld [vmem:[#allocation8 + $0x44] sm:$0xf]
        %v1510 = vld [vmem:[#allocation8 + $0x48] sm:$0xf]
        %v1511 = vld [vmem:[#allocation8 + $0x4c] sm:$0xf]
        %v1512 = vld [vmem:[#allocation8 + $0x50] sm:$0xf]
        %v1513 = vld [vmem:[#allocation8 + $0x54] sm:$0xf]
        %v1514 = vld [vmem:[#allocation8 + $0x58] sm:$0xf]
        %v1515 = vld [vmem:[#allocation8 + $0x5c] sm:$0xf]
        %v1516 = vld [vmem:[#allocation8 + $0x60] sm:$0xf]
        %v1517 = vld [vmem:[#allocation8 + $0x64] sm:$0xf]
        %v1518 = vld [vmem:[#allocation8 + $0x68] sm:$0xf]
        %v1519 = vld [vmem:[#allocation8 + $0x6c] sm:$0xf]
        %v1520 = vld [vmem:[#allocation8 + $0x70] sm:$0xf]
        %v1521 = vld [vmem:[#allocation8 + $0x74] sm:$0xf]
        %v1522 = vld [vmem:[#allocation8 + $0x78] sm:$0xf]
        %v1523 = vld [vmem:[#allocation8 + $0x7c] sm:$0xf]
        %v1524 = vld [vmem:[%s6] sm:$0x1]
        %v1526 = vperm.slane %v1524, 0
        %v1560 = vunpack.c.l.b16 %v1492
        %v1561 = vunpack.c.l.b16 %v1493
        %v1562 = vunpack.c.l.b16 %v1494
        %v1563 = vunpack.c.l.b16 %v1495
        %v1564 = vunpack.c.l.b16 %v1496
        %v1565 = vunpack.c.l.b16 %v1497
        %v1566 = vunpack.c.l.b16 %v1498
        %v1567 = vunpack.c.l.b16 %v1499
        %v1568 = vunpack.c.l.b16 %v1500
        %v1569 = vunpack.c.l.b16 %v1501
        %v1570 = vunpack.c.l.b16 %v1502
        %v1571 = vunpack.c.l.b16 %v1503
        %v1572 = vunpack.c.l.b16 %v1504
        %v1573 = vunpack.c.l.b16 %v1505
        %v1574 = vunpack.c.l.b16 %v1506
        %v1575 = vunpack.c.l.b16 %v1507
        %v1576 = vunpack.c.l.b16 %v1508
        %v1577 = vunpack.c.l.b16 %v1509
        %v1578 = vunpack.c.l.b16 %v1510
        %v1579 = vunpack.c.l.b16 %v1511
        %v1580 = vunpack.c.l.b16 %v1512
        %v1581 = vunpack.c.l.b16 %v1513
        %v1582 = vunpack.c.l.b16 %v1514
        %v1583 = vunpack.c.l.b16 %v1515
        %v1584 = vunpack.c.l.b16 %v1516
        %v1585 = vunpack.c.l.b16 %v1517
        %v1586 = vunpack.c.l.b16 %v1518
        %v1587 = vunpack.c.l.b16 %v1519
        %v1588 = vunpack.c.l.b16 %v1520
        %v1589 = vunpack.c.l.b16 %v1521
        %v1590 = vunpack.c.l.b16 %v1522
        %v1591 = vunpack.c.l.b16 %v1523
        %v1592 = vpack.c.b16 %v1561, %v1560
        %v1593 = vpack.c.b16 %v1563, %v1562
        %v1594 = vpack.c.b16 %v1565, %v1564
        %v1595 = vpack.c.b16 %v1567, %v1566
        %v1596 = vpack.c.b16 %v1569, %v1568
        %v1597 = vpack.c.b16 %v1571, %v1570
        %v1598 = vpack.c.b16 %v1573, %v1572
        %v1599 = vpack.c.b16 %v1575, %v1574
        %v1600 = vpack.c.b16 %v1577, %v1576
        %v1601 = vpack.c.b16 %v1579, %v1578
        %v1602 = vpack.c.b16 %v1581, %v1580
        %v1603 = vpack.c.b16 %v1583, %v1582
        %v1604 = vpack.c.b16 %v1585, %v1584
        %v1605 = vpack.c.b16 %v1587, %v1586
        %v1606 = vpack.c.b16 %v1589, %v1588
        %v1607 = vpack.c.b16 %v1591, %v1590
        %1624 = vmatpush.bf16.msra.mxu0 %v1599
        %1625 = vmatpush.bf16.msra.mxu0 %v1598
        %1626 = vmatpush.bf16.msra.mxu0 %v1597
        %1627 = vmatpush.bf16.msra.mxu0 %v1596
        %1628 = vmatpush.bf16.msra.mxu0 %v1595
        %1629 = vmatpush.bf16.msra.mxu0 %v1594
        %1630 = vmatpush.bf16.msra.mxu0 %v1593
        %1631 = vmatpush.bf16.msra.mxu0 %v1592
        %1632 = vmatmul.bf16.gmra.mxu0 %v1460
        %v1633 = vpop.f32.mrf.mxu0
        %v1634 = vadd.f32 %v1526, %v1633
        %v1635 = vpop.f32.mrf.mxu0
        %v1636 = vadd.f32 %v1526, %v1635
        %1637 = vmatmul.bf16.gmra.mxu0 %v1462
        %v1638 = vpop.f32.mrf.mxu0
        %v1639 = vadd.f32 %v1526, %v1638
        %v1640 = vpop.f32.mrf.mxu0
        %v1641 = vadd.f32 %v1526, %v1640
        %1642 = vmatmul.bf16.gmra.mxu0 %v1464
        %v1643 = vpop.f32.mrf.mxu0
        %v1644 = vadd.f32 %v1526, %v1643
        %v1645 = vpop.f32.mrf.mxu0
        %v1646 = vadd.f32 %v1526, %v1645
        %1647 = vmatmul.bf16.gmra.mxu0 %v1466
        %v1648 = vpop.f32.mrf.mxu0
        %v1649 = vadd.f32 %v1526, %v1648
        %v1650 = vpop.f32.mrf.mxu0
        %v1651 = vadd.f32 %v1526, %v1650
        %1652 = vmatmul.bf16.gmra.mxu0 %v1468
        %v1653 = vpop.f32.mrf.mxu0
        %v1654 = vadd.f32 %v1526, %v1653
        %v1655 = vpop.f32.mrf.mxu0
        %v1656 = vadd.f32 %v1526, %v1655
        %1657 = vmatmul.bf16.gmra.mxu0 %v1470
        %v1658 = vpop.f32.mrf.mxu0
        %v1659 = vadd.f32 %v1526, %v1658
        %v1660 = vpop.f32.mrf.mxu0
        %v1661 = vadd.f32 %v1526, %v1660
        %1662 = vmatmul.bf16.gmra.mxu0 %v1472
        %v1663 = vpop.f32.mrf.mxu0
        %v1664 = vadd.f32 %v1526, %v1663
        %v1665 = vpop.f32.mrf.mxu0
        %v1666 = vadd.f32 %v1526, %v1665
        %1667 = vmatmul.bf16.gmra.mxu0 %v1474
        %v1668 = vpop.f32.mrf.mxu0
        %v1669 = vadd.f32 %v1526, %v1668
        %v1670 = vpop.f32.mrf.mxu0
        %v1671 = vadd.f32 %v1526, %v1670
        %1672 = vmatmul.bf16.gmra.mxu0 %v1476
        %v1673 = vpop.f32.mrf.mxu0
        %v1674 = vadd.f32 %v1526, %v1673
        %v1675 = vpop.f32.mrf.mxu0
        %v1676 = vadd.f32 %v1526, %v1675
        %1677 = vmatmul.bf16.gmra.mxu0 %v1478
        %v1678 = vpop.f32.mrf.mxu0
        %v1679 = vadd.f32 %v1526, %v1678
        %v1680 = vpop.f32.mrf.mxu0
        %v1681 = vadd.f32 %v1526, %v1680
        %1682 = vmatmul.bf16.gmra.mxu0 %v1480
        %v1683 = vpop.f32.mrf.mxu0
        %v1684 = vadd.f32 %v1526, %v1683
        %v1685 = vpop.f32.mrf.mxu0
        %v1686 = vadd.f32 %v1526, %v1685
        %1687 = vmatmul.bf16.gmra.mxu0 %v1482
        %v1688 = vpop.f32.mrf.mxu0
        %v1689 = vadd.f32 %v1526, %v1688
        %v1690 = vpop.f32.mrf.mxu0
        %v1691 = vadd.f32 %v1526, %v1690
        %1692 = vmatmul.bf16.gmra.mxu0 %v1484
        %v1693 = vpop.f32.mrf.mxu0
        %v1694 = vadd.f32 %v1526, %v1693
        %v1695 = vpop.f32.mrf.mxu0
        %v1696 = vadd.f32 %v1526, %v1695
        %1697 = vmatmul.bf16.gmra.mxu0 %v1486
        %v1698 = vpop.f32.mrf.mxu0
        %v1699 = vadd.f32 %v1526, %v1698
        %v1700 = vpop.f32.mrf.mxu0
        %v1701 = vadd.f32 %v1526, %v1700
        %1702 = vmatmul.bf16.gmra.mxu0 %v1488
        %v1703 = vpop.f32.mrf.mxu0
        %v1704 = vadd.f32 %v1526, %v1703
        %v1705 = vpop.f32.mrf.mxu0
        %v1706 = vadd.f32 %v1526, %v1705
        %1707 = vmatmul.bf16.gmra.mxu0 %v1490
        %v1708 = vpop.f32.mrf.mxu0
        %v1709 = vadd.f32 %v1526, %v1708
        %v1710 = vpop.f32.mrf.mxu0
        %v1711 = vadd.f32 %v1526, %v1710
        %1712 = vdwg.mxu0
        %1713 = vmatpush.bf16.msra.mxu0 %v1607
        %1714 = vmatpush.bf16.msra.mxu0 %v1606
        %1715 = vmatpush.bf16.msra.mxu0 %v1605
        %1716 = vmatpush.bf16.msra.mxu0 %v1604
        %1717 = vmatpush.bf16.msra.mxu0 %v1603
        %1718 = vmatpush.bf16.msra.mxu0 %v1602
        %1719 = vmatpush.bf16.msra.mxu0 %v1601
        %1720 = vmatpush.bf16.msra.mxu0 %v1600
        %1721 = vmatmul.bf16.gmra.mxu0 %v1461
        %v1722 = vpop.f32.mrf.mxu0
        %v1723 = vadd.f32 %v1634, %v1722
        %v1724 = vpop.f32.mrf.mxu0
        %v1725 = vadd.f32 %v1636, %v1724
        %1726 = vmatmul.bf16.gmra.mxu0 %v1463
        %v1727 = vpop.f32.mrf.mxu0
        %v1728 = vadd.f32 %v1639, %v1727
        %v1729 = vpop.f32.mrf.mxu0
        %v1730 = vadd.f32 %v1641, %v1729
        %1731 = vmatmul.bf16.gmra.mxu0 %v1465
        %v1732 = vpop.f32.mrf.mxu0
        %v1733 = vadd.f32 %v1644, %v1732
        %v1734 = vpop.f32.mrf.mxu0
        %v1735 = vadd.f32 %v1646, %v1734
        %1736 = vmatmul.bf16.gmra.mxu0 %v1467
        %v1737 = vpop.f32.mrf.mxu0
        %v1738 = vadd.f32 %v1649, %v1737
        %v1739 = vpop.f32.mrf.mxu0
        %v1740 = vadd.f32 %v1651, %v1739
        %1741 = vmatmul.bf16.gmra.mxu0 %v1469
        %v1742 = vpop.f32.mrf.mxu0
        %v1743 = vadd.f32 %v1654, %v1742
        %v1744 = vpop.f32.mrf.mxu0
        %v1745 = vadd.f32 %v1656, %v1744
        %1746 = vmatmul.bf16.gmra.mxu0 %v1471
        %v1747 = vpop.f32.mrf.mxu0
        %v1748 = vadd.f32 %v1659, %v1747
        %v1749 = vpop.f32.mrf.mxu0
        %v1750 = vadd.f32 %v1661, %v1749
        %1751 = vmatmul.bf16.gmra.mxu0 %v1473
        %v1752 = vpop.f32.mrf.mxu0
        %v1753 = vadd.f32 %v1664, %v1752
        %v1754 = vpop.f32.mrf.mxu0
        %v1755 = vadd.f32 %v1666, %v1754
        %1756 = vmatmul.bf16.gmra.mxu0 %v1475
        %v1757 = vpop.f32.mrf.mxu0
        %v1758 = vadd.f32 %v1669, %v1757
        %v1759 = vpop.f32.mrf.mxu0
        %v1760 = vadd.f32 %v1671, %v1759
        %1761 = vmatmul.bf16.gmra.mxu0 %v1477
        %v1762 = vpop.f32.mrf.mxu0
        %v1763 = vadd.f32 %v1674, %v1762
        %v1764 = vpop.f32.mrf.mxu0
        %v1765 = vadd.f32 %v1676, %v1764
        %1766 = vmatmul.bf16.gmra.mxu0 %v1479
        %v1767 = vpop.f32.mrf.mxu0
        %v1768 = vadd.f32 %v1679, %v1767
        %v1769 = vpop.f32.mrf.mxu0
        %v1770 = vadd.f32 %v1681, %v1769
        %1771 = vmatmul.bf16.gmra.mxu0 %v1481
        %v1772 = vpop.f32.mrf.mxu0
        %v1773 = vadd.f32 %v1684, %v1772
        %v1774 = vpop.f32.mrf.mxu0
        %v1775 = vadd.f32 %v1686, %v1774
        %1776 = vmatmul.bf16.gmra.mxu0 %v1483
        %v1777 = vpop.f32.mrf.mxu0
        %v1778 = vadd.f32 %v1689, %v1777
        %v1779 = vpop.f32.mrf.mxu0
        %v1780 = vadd.f32 %v1691, %v1779
        %1781 = vmatmul.bf16.gmra.mxu0 %v1485
        %v1782 = vpop.f32.mrf.mxu0
        %v1783 = vadd.f32 %v1694, %v1782
        %v1784 = vpop.f32.mrf.mxu0
        %v1785 = vadd.f32 %v1696, %v1784
        %1786 = vmatmul.bf16.gmra.mxu0 %v1487
        %v1787 = vpop.f32.mrf.mxu0
        %v1788 = vadd.f32 %v1699, %v1787
        %v1789 = vpop.f32.mrf.mxu0
        %v1790 = vadd.f32 %v1701, %v1789
        %1791 = vmatmul.bf16.gmra.mxu0 %v1489
        %v1792 = vpop.f32.mrf.mxu0
        %v1793 = vadd.f32 %v1704, %v1792
        %v1794 = vpop.f32.mrf.mxu0
        %v1795 = vadd.f32 %v1706, %v1794
        %1796 = vmatmul.bf16.gmra.mxu0 %v1491
        %v1797 = vpop.f32.mrf.mxu0
        %v1798 = vadd.f32 %v1709, %v1797
        %v1799 = vpop.f32.mrf.mxu0
        %v1800 = vadd.f32 %v1711, %v1799
        %1801 = vdwg.mxu0
        %v1802 = vadd.f32 %v349, %v1723
        %v1803 = vadd.f32 %v350, %v1725
        %v1804 = vadd.f32 %v351, %v1728
        %v1805 = vadd.f32 %v352, %v1730
        %v1806 = vadd.f32 %v353, %v1733
        %v1807 = vadd.f32 %v354, %v1735
        %v1808 = vadd.f32 %v355, %v1738
        %v1809 = vadd.f32 %v356, %v1740
        %v1810 = vadd.f32 %v357, %v1743
        %v1811 = vadd.f32 %v358, %v1745
        %v1812 = vadd.f32 %v359, %v1748
        %v1813 = vadd.f32 %v360, %v1750
        %v1814 = vadd.f32 %v361, %v1753
        %v1815 = vadd.f32 %v362, %v1755
        %v1816 = vadd.f32 %v363, %v1758
        %v1817 = vadd.f32 %v364, %v1760
        %v1818 = vadd.f32 %v365, %v1763
        %v1819 = vadd.f32 %v366, %v1765
        %v1820 = vadd.f32 %v367, %v1768
        %v1821 = vadd.f32 %v368, %v1770
        %v1822 = vadd.f32 %v369, %v1773
        %v1823 = vadd.f32 %v370, %v1775
        %v1824 = vadd.f32 %v371, %v1778
        %v1825 = vadd.f32 %v372, %v1780
        %v1826 = vadd.f32 %v373, %v1783
        %v1827 = vadd.f32 %v374, %v1785
        %v1828 = vadd.f32 %v375, %v1788
        %v1829 = vadd.f32 %v376, %v1790
        %v1830 = vadd.f32 %v377, %v1793
        %v1831 = vadd.f32 %v378, %v1795
        %v1832 = vadd.f32 %v379, %v1798
        %v1833 = vadd.f32 %v380, %v1800
        %1834 = vst [vmem:[%s346] sm:$0xff] %v1802
        %1835 = vst [vmem:[%s346 + $0x8] sm:$0xff] %v1803
        %1836 = vst [vmem:[%s346 + $0x10] sm:$0xff] %v1804
        %1837 = vst [vmem:[%s346 + $0x18] sm:$0xff] %v1805
        %1838 = vst [vmem:[%s346 + $0x20] sm:$0xff] %v1806
        %1839 = vst [vmem:[%s346 + $0x28] sm:$0xff] %v1807
        %1840 = vst [vmem:[%s346 + $0x30] sm:$0xff] %v1808
        %1841 = vst [vmem:[%s346 + $0x38] sm:$0xff] %v1809
        %1842 = vst [vmem:[%s346 + $0x40] sm:$0xff] %v1810
        %1843 = vst [vmem:[%s346 + $0x48] sm:$0xff] %v1811
        %1844 = vst [vmem:[%s346 + $0x50] sm:$0xff] %v1812
        %1845 = vst [vmem:[%s346 + $0x58] sm:$0xff] %v1813
        %1846 = vst [vmem:[%s346 + $0x60] sm:$0xff] %v1814
        %1847 = vst [vmem:[%s346 + $0x68] sm:$0xff] %v1815
        %1848 = vst [vmem:[%s346 + $0x70] sm:$0xff] %v1816
        %1849 = vst [vmem:[%s346 + $0x78] sm:$0xff] %v1817
        %1850 = vst [vmem:[%s346 + $0x80] sm:$0xff] %v1818
        %1851 = vst [vmem:[%s346 + $0x88] sm:$0xff] %v1819
        %1852 = vst [vmem:[%s346 + $0x90] sm:$0xff] %v1820
        %1853 = vst [vmem:[%s346 + $0x98] sm:$0xff] %v1821
        %1854 = vst [vmem:[%s346 + $0xa0] sm:$0xff] %v1822
        %1855 = vst [vmem:[%s346 + $0xa8] sm:$0xff] %v1823
        %1856 = vst [vmem:[%s346 + $0xb0] sm:$0xff] %v1824
        %1857 = vst [vmem:[%s346 + $0xb8] sm:$0xff] %v1825
        %1858 = vst [vmem:[%s346 + $0xc0] sm:$0xff] %v1826
        %1859 = vst [vmem:[%s346 + $0xc8] sm:$0xff] %v1827
        %1860 = vst [vmem:[%s346 + $0xd0] sm:$0xff] %v1828
        %1861 = vst [vmem:[%s346 + $0xd8] sm:$0xff] %v1829
        %1862 = vst [vmem:[%s346 + $0xe0] sm:$0xff] %v1830
        %1863 = vst [vmem:[%s346 + $0xe8] sm:$0xff] %v1831
        %1864 = vst [vmem:[%s346 + $0xf0] sm:$0xff] %v1832
        %1865 = vst [vmem:[%s346 + $0xf8] sm:$0xff] %v1833
        %s1866 = sand.u32 %s186, 1
        %s1867 = scalar_lea.sflag [#allocation4], %s1866
        %s1868 = sand.u32 %s186, 1
        %s1869 = smul.addr %s1868, 256
        %s1870 = scalar_lea.vmem [#allocation10], %s1869
        // Predicated region
        $region65: #{tpu_custom_call.1} parent=47 // pred_check
          %p1871 = pneg %p196
        $region66: #{tpu_custom_call.1} parent=47 // pred_check_branch
          %1873 = sbr.rel (%p1871) target = $region68
        $region67: #{tpu_custom_call.1} parent=47 // pred_region
          %s1874 = smul.u32 32, %s26
          %1876 = vsyncadd %s1867, 0
          %s1877 = smul.addr %s1874, 8
          %s1878 = scalar_lea.hbm %s7, %s1877
          %s1879 = sshll.u32 %s1870, 4
          %s1880 = int_to_ptr.vmem [resolvable:$true] %s1879
          %s1881 = sshll.u32 %s1878, 4
          %s1882 = int_to_ptr.hbm [resolvable:$true] %s1881
          %1887 = dma.vmem_to_hbm [thread:$0]  %s1880, 4096, %s1882, %s1867, 128, 128, 8
        $region68: #{tpu_custom_call.1} parent=47 // pred_fallthru
          _
      $region48: #{tpu_custom_call.1} parent=5 // pred_fallthru
        _
      %p1888 = scmp.le.s32.totalorder 2, %s21
      // Predicated region
      $region69: #{tpu_custom_call.1} parent=5 // pred_check
        %p1889 = pneg %p1888
      $region70: #{tpu_custom_call.1} parent=5 // pred_check_branch
        %1891 = sbr.rel (%p1889) target = $region72
      $region71: #{tpu_custom_call.1} parent=5 // pred_region
        %s1892 = ssub.s32 %s21, 2
        // Predicated region
        $region73: #{tpu_custom_call.1} parent=71 // pred_check
          %p1893 = pneg %p202
        $region74: #{tpu_custom_call.1} parent=71 // pred_check_branch
          %1895 = sbr.rel (%p1893) target = $region76
        $region75: #{tpu_custom_call.1} parent=71 // pred_region
          %s1896 = sand.u32 %s187, 1
          %s1897 = scalar_lea.sflag [#allocation4], %s1896
          %s1898 = sand.u32 %s187, 1
          %s1899 = smul.addr %s1898, 256
          %s1900 = scalar_lea.vmem [#allocation10], %s1899
          %1902 = dma.done %s1897, 4096
        $region76: #{tpu_custom_call.1} parent=71 // pred_fallthru
          _
      $region72: #{tpu_custom_call.1} parent=5 // pred_fallthru
        _
    $region6: #{tpu_custom_call.1} parent=1 // loop_footer
      %s25 = sadd.s32 1, %s21
    $region7: #{tpu_custom_call.1} parent=1 // loop_footer_branch
      %20 = sbr.rel target = $region3
    $region8: #{tpu_custom_call.1} parent=1 // loop_exit
      _
    %1903 = vsyncpa [#allocation3], 1
    %s1904 = scalar_lea.sflag [#allocation3], 1
    %1905 = vsyncpa %s1904, 1
    %1906 = vsyncpa [#allocation6], 1
    %1907 = vsyncpa [#allocation9], 1
    %1908 = vsyncpa [#allocation4], 1
    %s1909 = scalar_lea.sflag [#allocation4], 1
    %1910 = vsyncpa %s1909, 1

// kernel: tpu_custom_call.1
$region0: #{tpu_custom_call.1}
  #allocation0 [shape = 'u32[]', space=smem, size = 0x4, offset = 0x4, fixed_abs, tag = 'smem constant byte address 0x4 - core index']
  #allocation1 [shape = 'u32[72,128]{1,0:T(1,128)}', space=vmem, size = 0x9000, scoped, tag = 'internal scratch']
  %s0 = inlined_call_operand.hbm [shape: f32[512,128], index: 0, kind: input, shape index: {}]
  %s1 = inlined_call_operand.hbm [shape: f32[1,128], index: 1, kind: input, shape index: {}]
  %s2 = inlined_call_operand.vmem [shape: f32[1,128], index: 2, kind: input, shape index: {}]
  %s3 = inlined_call_operand.hbm [shape: bf16[128,256], index: 3, kind: input, shape index: {}]
  %s4 = inlined_call_operand.vmem [shape: f32[1,256], index: 4, kind: input, shape index: {}]
  %s5 = inlined_call_operand.hbm [shape: bf16[256,128], index: 5, kind: input, shape index: {}]
  %s6 = inlined_call_operand.vmem [shape: f32[1,128], index: 6, kind: input, shape index: {}]
  %s7 = inlined_call_operand.hbm [shape: f32[512,128], index: 7, kind: output, shape index: {}]
  %s8 = sld [smem:[#allocation0]]
  $region77: #{tpu_custom_call.1} parent=0
    _
  %s10 = ssub.s32 1, %s8
  %s11 = scalar_select 0, %s10, %s8
  $region1: #{tpu_custom_call.1} parent=0
    #allocation2 [shape = 'u8[262144]{0}', space=vmem, size = 0x40000, scoped, tag = 'input window, operand 0']
    #allocation3 [shape = 's32[2]{0}', space=sflag, size = 0x8, scoped, tag = 'scoped memory for tpu_custom_call.1']
    #allocation4 [shape = 's32[2]{0}', space=sflag, size = 0x8, scoped, tag = 'scoped memory for tpu_custom_call.1']
    #allocation5 [shape = 'u8[512]{0}', space=vmem, size = 0x400, scoped, tag = 'input window, operand 1, single buffered']
    #allocation6 [shape = 's32[1]{0}', space=sflag, size = 0x4, scoped, tag = 'scoped memory for tpu_custom_call.1']
    #allocation7 [shape = 'u8[65536]{0}', space=vmem, size = 0x10000, scoped, tag = 'input window, operand 3, single buffered']
    #allocation8 [shape = 'u8[65536]{0}', space=vmem, size = 0x10000, scoped, tag = 'input window, operand 5, single buffered']
    #allocation9 [shape = 's32[1]{0}', space=sflag, size = 0x4, scoped, tag = 'scoped memory for tpu_custom_call.1']
    #allocation10 [shape = 'u8[262144]{0}', space=vmem, size = 0x40000, scoped, tag = 'output window, operand 0']
    %12 = vsyncpa [#allocation3], 0
    %s13 = scalar_lea.sflag [#allocation3], 1
    %14 = vsyncpa %s13, 0
    %15 = vsyncpa [#allocation6], 0
    %16 = vsyncpa [#allocation9], 0
    %17 = vsyncpa [#allocation4], 0
    %s18 = scalar_lea.sflag [#allocation4], 1
    %19 = vsyncpa %s18, 0
    loop: start=0, step=1, limit=4
    $region2: #{tpu_custom_call.1} parent=1 // loop_pre_header
      _
    $region3: #{tpu_custom_call.1} parent=1 // loop_header
      %s21 = sphi 0, %s25
      %p22 = scmp.ge.s32.totalorder %s21, 4
      %s31 = sphi 0, %s33
      %s34 = sphi 0, %s31
      %s35 = sphi 0, %s34
      %s51 = sphi 0, %s35
      %s55 = sphi 0, %s55
      %s57 = sphi 0, %s55
      %s58 = sphi 0, %s57
      %s72 = sphi 0, %s58
      %s76 = sphi 0, %s76
      %s78 = sphi 0, %s76
      %s79 = sphi 0, %s78
      %s93 = sphi 0, %s79
      %s97 = sphi 0, %s97
      %s99 = sphi 0, %s97
      %s100 = sphi 0, %s99
      %s114 = sphi 0, %s100
      %s118 = sphi 0, %s118
      %s120 = sphi 0, %s118
      %s121 = sphi 0, %s120
      %s135 = sphi 0, %s121
      %s139 = sphi 0, %s139
      %s141 = sphi 0, %s139
      %s142 = sphi 0, %s141
      %s156 = sphi 0, %s142
      %s160 = sphi 0, %s160
      %s162 = sphi 0, %s160
      %s163 = sphi 0, %s162
      %s177 = sphi 0, %s163
      %s183 = sphi 0, %s185
      %s186 = sphi 0, %s183
      %s187 = sphi 0, %s186
      %s203 = sphi 0, %s187
    $region4: #{tpu_custom_call.1} parent=1 // loop_header_branch
      %24 = sbr.rel (%p22) target = $region8
    $region5: #{tpu_custom_call.1} parent=1 // loop_body
      %s26 = ssub.s32 %s21, 1
      %s27 = ssub.s32 %s21, 2
      %s28 = sadd.s32 %s21, 1
      %s29 = ssub.s32 %s21, %s28
      %p30 = scmp.eq.s32.totalorder %s29, 0
      %s32 = sadd.s32 %s31, 1
      %s33 = scalar_select %p30, %s31, %s32
      %p36 = pneg %p30
      %p37 = scmp.eq.s32.totalorder %s21, 1
      %p38 = por %p36, %p37
      %p39 = scmp.ne.s32.totalorder %s31, %s34
      %p40 = scmp.eq.s32.totalorder %s21, 0
      %p41 = por %p39, %p40
      %p42 = scmp.ne.s32.totalorder %s31, %s34
      %p43 = scmp.eq.s32.totalorder %s26, 1
      %p44 = por %p42, %p43
      %p45 = scmp.ne.s32.totalorder %s34, %s35
      %p46 = scmp.eq.s32.totalorder %s26, 0
      %p47 = por %p45, %p46
      %p48 = scmp.ne.s32.totalorder %s34, %s35
      %p49 = scmp.eq.s32.totalorder %s27, 1
      %p50 = por %p48, %p49
      %p52 = scmp.ne.s32.totalorder %s35, %s51
      %p53 = scmp.eq.s32.totalorder %s27, 0
      %p54 = por %p52, %p53
      %s56 = sadd.s32 %s55, 1
      %p59 = scmp.eq.s32.totalorder %s21, 1
      %p60 = scmp.ne.s32.totalorder %s55, %s57
      %p61 = scmp.eq.s32.totalorder %s21, 0
      %p62 = por %p60, %p61
      %p63 = scmp.ne.s32.totalorder %s55, %s57
      %p64 = scmp.eq.s32.totalorder %s26, 1
      %p65 = por %p63, %p64
      %p66 = scmp.ne.s32.totalorder %s57, %s58
      %p67 = scmp.eq.s32.totalorder %s26, 0
      %p68 = por %p66, %p67
      %p69 = scmp.ne.s32.totalorder %s57, %s58
      %p70 = scmp.eq.s32.totalorder %s27, 1
      %p71 = por %p69, %p70
      %p73 = scmp.ne.s32.totalorder %s58, %s72
      %p74 = scmp.eq.s32.totalorder %s27, 0
      %p75 = por %p73, %p74
      %s77 = sadd.s32 %s76, 1
      %p80 = scmp.eq.s32.totalorder %s21, 1
      %p81 = scmp.ne.s32.totalorder %s76, %s78
      %p82 = scmp.eq.s32.totalorder %s21, 0
      %p83 = por %p81, %p82
      %p84 = scmp.ne.s32.totalorder %s76, %s78
      %p85 = scmp.eq.s32.totalorder %s26, 1
      %p86 = por %p84, %p85
      %p87 = scmp.ne.s32.totalorder %s78, %s79
      %p88 = scmp.eq.s32.totalorder %s26, 0
      %p89 = por %p87, %p88
      %p90 = scmp.ne.s32.totalorder %s78, %s79
      %p91 = scmp.eq.s32.totalorder %s27, 1
      %p92 = por %p90, %p91
      %p94 = scmp.ne.s32.totalorder %s79, %s93
      %p95 = scmp.eq.s32.totalorder %s27, 0
      %p96 = por %p94, %p95
      %s98 = sadd.s32 %s97, 1
      %p101 = scmp.eq.s32.totalorder %s21, 1
      %p102 = scmp.ne.s32.totalorder %s97, %s99
      %p103 = scmp.eq.s32.totalorder %s21, 0
      %p104 = por %p102, %p103
      %p105 = scmp.ne.s32.totalorder %s97, %s99
      %p106 = scmp.eq.s32.totalorder %s26, 1
      %p107 = por %p105, %p106
      %p108 = scmp.ne.s32.totalorder %s99, %s100
      %p109 = scmp.eq.s32.totalorder %s26, 0
      %p110 = por %p108, %p109
      %p111 = scmp.ne.s32.totalorder %s99, %s100
      %p112 = scmp.eq.s32.totalorder %s27, 1
      %p113 = por %p111, %p112
      %p115 = scmp.ne.s32.totalorder %s100, %s114
      %p116 = scmp.eq.s32.totalorder %s27, 0
      %p117 = por %p115, %p116
      %s119 = sadd.s32 %s118, 1
      %p122 = scmp.eq.s32.totalorder %s21, 1
      %p123 = scmp.ne.s32.totalorder %s118, %s120
      %p124 = scmp.eq.s32.totalorder %s21, 0
      %p125 = por %p123, %p124
      %p126 = scmp.ne.s32.totalorder %s118, %s120
      %p127 = scmp.eq.s32.totalorder %s26, 1
      %p128 = por %p126, %p127
      %p129 = scmp.ne.s32.totalorder %s120, %s121
      %p130 = scmp.eq.s32.totalorder %s26, 0
      %p131 = por %p129, %p130
      %p132 = scmp.ne.s32.totalorder %s120, %s121
      %p133 = scmp.eq.s32.totalorder %s27, 1
      %p134 = por %p132, %p133
      %p136 = scmp.ne.s32.totalorder %s121, %s135
      %p137 = scmp.eq.s32.totalorder %s27, 0
      %p138 = por %p136, %p137
      %s140 = sadd.s32 %s139, 1
      %p143 = scmp.eq.s32.totalorder %s21, 1
      %p144 = scmp.ne.s32.totalorder %s139, %s141
      %p145 = scmp.eq.s32.totalorder %s21, 0
      %p146 = por %p144, %p145
      %p147 = scmp.ne.s32.totalorder %s139, %s141
      %p148 = scmp.eq.s32.totalorder %s26, 1
      %p149 = por %p147, %p148
      %p150 = scmp.ne.s32.totalorder %s141, %s142
      %p151 = scmp.eq.s32.totalorder %s26, 0
      %p152 = por %p150, %p151
      %p153 = scmp.ne.s32.totalorder %s141, %s142
      %p154 = scmp.eq.s32.totalorder %s27, 1
      %p155 = por %p153, %p154
      %p157 = scmp.ne.s32.totalorder %s142, %s156
      %p158 = scmp.eq.s32.totalorder %s27, 0
      %p159 = por %p157, %p158
      %s161 = sadd.s32 %s160, 1
      %p164 = scmp.eq.s32.totalorder %s21, 1
      %p165 = scmp.ne.s32.totalorder %s160, %s162
      %p166 = scmp.eq.s32.totalorder %s21, 0
      %p167 = por %p165, %p166
      %p168 = scmp.ne.s32.totalorder %s160, %s162
      %p169 = scmp.eq.s32.totalorder %s26, 1
      %p170 = por %p168, %p169
      %p171 = scmp.ne.s32.totalorder %s162, %s163
      %p172 = scmp.eq.s32.totalorder %s26, 0
      %p173 = por %p171, %p172
      %p174 = scmp.ne.s32.totalorder %s162, %s163
      %p175 = scmp.eq.s32.totalorder %s27, 1
      %p176 = por %p174, %p175
      %p178 = scmp.ne.s32.totalorder %s163, %s177
      %p179 = scmp.eq.s32.totalorder %s27, 0
      %p180 = por %p178, %p179
      %s181 = ssub.s32 %s21, %s28
      %p182 = scmp.eq.s32.totalorder %s181, 0
      %s184 = sadd.s32 %s183, 1
      %s185 = scalar_select %p182, %s183, %s184
      %p188 = pneg %p182
      %p189 = scmp.eq.s32.totalorder %s21, 1
      %p190 = por %p188, %p189
      %p191 = scmp.ne.s32.totalorder %s183, %s186
      %p192 = scmp.eq.s32.totalorder %s21, 0
      %p193 = por %p191, %p192
      %p194 = scmp.ne.s32.totalorder %s183, %s186
      %p195 = scmp.eq.s32.totalorder %s26, 1
      %p196 = por %p194, %p195
      %p197 = scmp.ne.s32.totalorder %s186, %s187
      %p198 = scmp.eq.s32.totalorder %s26, 0
      %p199 = por %p197, %p198
      %p200 = scmp.ne.s32.totalorder %s186, %s187
      %p201 = scmp.eq.s32.totalorder %s27, 1
      %p202 = por %p200, %p201
      %p204 = scmp.ne.s32.totalorder %s187, %s203
      %p205 = scmp.eq.s32.totalorder %s27, 0
      %p206 = por %p204, %p205
      %p207 = scmp.le.s32.totalorder 1, %s21
      %p208 = scmp.lt.s32.totalorder %s21, 3
      %p209 = pnand %p207, %p208
      %p210 = pneg %p209
      // Predicated region
      $region9: #{tpu_custom_call.1} parent=5 // pred_check
        _
      $region10: #{tpu_custom_call.1} parent=5 // pred_check_branch
        %212 = sbr.rel (%p209) target = $region12
      $region11: #{tpu_custom_call.1} parent=5 // pred_region
        %s213 = ssub.s32 %s21, 1
        // Predicated region
        $region13: #{tpu_custom_call.1} parent=11 // pred_check
          %p214 = pneg %p68
        $region14: #{tpu_custom_call.1} parent=11 // pred_check_branch
          %216 = sbr.rel (%p214) target = $region16
        $region15: #{tpu_custom_call.1} parent=11 // pred_region
          %218 = vsyncadd [#allocation6], 0
          %s220 = sshll.u32 %s1, 4
          %s221 = int_to_ptr.hbm [resolvable:$true] %s220
          %s222 = sshll.u32 [#allocation5], 4
          %s223 = int_to_ptr.vmem [resolvable:$true] %s222
          %225 = dma.hbm_to_vmem [thread:$0]  %s221, 16, %s223, [#allocation6]
        $region16: #{tpu_custom_call.1} parent=11 // pred_fallthru
          _
        // Predicated region
        $region17: #{tpu_custom_call.1} parent=11 // pred_check
          %p226 = pneg %p89
        $region18: #{tpu_custom_call.1} parent=11 // pred_check_branch
          %228 = sbr.rel (%p226) target = $region20
        $region19: #{tpu_custom_call.1} parent=11 // pred_region
          _
        $region20: #{tpu_custom_call.1} parent=11 // pred_fallthru
          _
        // Predicated region
        $region21: #{tpu_custom_call.1} parent=11 // pred_check
          %p229 = pneg %p110
        $region22: #{tpu_custom_call.1} parent=11 // pred_check_branch
          %231 = sbr.rel (%p229) target = $region24
        $region23: #{tpu_custom_call.1} parent=11 // pred_region
          %233 = vsyncadd [#allocation6], 0
          %s234 = sshll.u32 %s3, 4
          %s235 = int_to_ptr.hbm [resolvable:$true] %s234
          %s236 = sshll.u32 [#allocation7], 4
          %s237 = int_to_ptr.vmem [resolvable:$true] %s236
          %242 = dma.hbm_to_vmem [thread:$0]  %s235, 2048, %s237, [#allocation6], 128, 128, 8
        $region24: #{tpu_custom_call.1} parent=11 // pred_fallthru
          _
        // Predicated region
        $region25: #{tpu_custom_call.1} parent=11 // pred_check
          %p243 = pneg %p131
        $region26: #{tpu_custom_call.1} parent=11 // pred_check_branch
          %245 = sbr.rel (%p243) target = $region28
        $region27: #{tpu_custom_call.1} parent=11 // pred_region
          _
        $region28: #{tpu_custom_call.1} parent=11 // pred_fallthru
          _
        // Predicated region
        $region29: #{tpu_custom_call.1} parent=11 // pred_check
          %p246 = pneg %p152
        $region30: #{tpu_custom_call.1} parent=11 // pred_check_branch
          %248 = sbr.rel (%p246) target = $region32
        $region31: #{tpu_custom_call.1} parent=11 // pred_region
          %250 = vsyncadd [#allocation9], 0
          %s251 = sshll.u32 %s5, 4
          %s252 = int_to_ptr.hbm [resolvable:$true] %s251
          %s253 = sshll.u32 [#allocation8], 4
          %s254 = int_to_ptr.vmem [resolvable:$true] %s253
          %259 = dma.hbm_to_vmem [thread:$0]  %s252, 2048, %s254, [#allocation9], 64, 64, 4
        $region32: #{tpu_custom_call.1} parent=11 // pred_fallthru
          _
        // Predicated region
        $region33: #{tpu_custom_call.1} parent=11 // pred_check
          %p260 = pneg %p173
        $region34: #{tpu_custom_call.1} parent=11 // pred_check_branch
          %262 = sbr.rel (%p260) target = $region36
        $region35: #{tpu_custom_call.1} parent=11 // pred_region
          _
        $region36: #{tpu_custom_call.1} parent=11 // pred_fallthru
          _
      $region12: #{tpu_custom_call.1} parent=5 // pred_fallthru
        _
      %p263 = scmp.lt.s32.totalorder %s21, 2
      // Predicated region
      $region37: #{tpu_custom_call.1} parent=5 // pred_check
        %p264 = pneg %p263
      $region38: #{tpu_custom_call.1} parent=5 // pred_check_branch
        %266 = sbr.rel (%p264) target = $region40
      $region39: #{tpu_custom_call.1} parent=5 // pred_region
        // Predicated region
        $region41: #{tpu_custom_call.1} parent=39 // pred_check
          %p267 = pneg %p41
        $region42: #{tpu_custom_call.1} parent=39 // pred_check_branch
          %269 = sbr.rel (%p267) target = $region44
        $region43: #{tpu_custom_call.1} parent=39 // pred_region
          %s270 = sand.u32 %s31, 1
          %s271 = scalar_lea.sflag [#allocation3], %s270
          %s272 = sand.u32 %s31, 1
          %s273 = smul.addr %s272, 256
          %s274 = scalar_lea.vmem [#allocation2], %s273
          %s275 = smul.u32 32, %s21
          %277 = vsyncadd %s271, 0
          %s278 = smul.addr %s275, 8
          %s279 = scalar_lea.hbm %s0, %s278
          %s280 = sshll.u32 %s279, 4
          %s281 = int_to_ptr.hbm [resolvable:$true] %s280
          %s282 = sshll.u32 %s274, 4
          %s283 = int_to_ptr.vmem [resolvable:$true] %s282
          %288 = dma.hbm_to_vmem [thread:$0]  %s281, 4096, %s283, %s271, 128, 128, 8
        $region44: #{tpu_custom_call.1} parent=39 // pred_fallthru
          _
      $region40: #{tpu_custom_call.1} parent=5 // pred_fallthru
        _
      %p289 = scmp.le.s32.totalorder 1, %s21
      %p290 = scmp.lt.s32.totalorder %s21, 3
      %p291 = pnand %p289, %p290
      %p292 = pneg %p291
      // Predicated region
      $region45: #{tpu_custom_call.1} parent=5 // pred_check
        _
      $region46: #{tpu_custom_call.1} parent=5 // pred_check_branch
        %294 = sbr.rel (%p291) target = $region48
      $region47: #{tpu_custom_call.1} parent=5 // pred_region
        %s295 = ssub.s32 %s21, 1
        %s296 = sand.u32 %s34, 1
        %s297 = scalar_lea.sflag [#allocation3], %s296
        %s298 = sand.u32 %s34, 1
        %s299 = smul.addr %s298, 256
        %s300 = scalar_lea.vmem [#allocation2], %s299
        // Predicated region
        $region49: #{tpu_custom_call.1} parent=47 // pred_check
          %p301 = pneg %p47
        $region50: #{tpu_custom_call.1} parent=47 // pred_check_branch
          %303 = sbr.rel (%p301) target = $region52
        $region51: #{tpu_custom_call.1} parent=47 // pred_region
          %305 = dma.done %s297, 4096
        $region52: #{tpu_custom_call.1} parent=47 // pred_fallthru
          _
        // Predicated region
        $region53: #{tpu_custom_call.1} parent=47 // pred_check
          %p306 = pneg %p68
        $region54: #{tpu_custom_call.1} parent=47 // pred_check_branch
          %308 = sbr.rel (%p306) target = $region56
        $region55: #{tpu_custom_call.1} parent=47 // pred_region
          %310 = dma.done [#allocation6], 16
        $region56: #{tpu_custom_call.1} parent=47 // pred_fallthru
          _
        // Predicated region
        $region57: #{tpu_custom_call.1} parent=47 // pred_check
          %p311 = pneg %p110
        $region58: #{tpu_custom_call.1} parent=47 // pred_check_branch
          %313 = sbr.rel (%p311) target = $region60
        $region59: #{tpu_custom_call.1} parent=47 // pred_region
          %315 = dma.done [#allocation6], 2048
        $region60: #{tpu_custom_call.1} parent=47 // pred_fallthru
          _
        // Predicated region
        $region61: #{tpu_custom_call.1} parent=47 // pred_check
          %p316 = pneg %p152
        $region62: #{tpu_custom_call.1} parent=47 // pred_check_branch
          %318 = sbr.rel (%p316) target = $region64
        $region63: #{tpu_custom_call.1} parent=47 // pred_region
          %320 = dma.done [#allocation9], 2048
        $region64: #{tpu_custom_call.1} parent=47 // pred_fallthru
          _
        %s321 = sand.u32 %s34, 1
        %s322 = scalar_lea.sflag [#allocation3], %s321
        %s323 = sand.u32 %s34, 1
        %s324 = smul.addr %s323, 256
        %s325 = scalar_lea.vmem [#allocation2], %s324
        %p326 = pneg %p47
        %p327 = pneg %p44
        %p328 = pneg %p68
        %p329 = pneg %p65
        %p330 = pneg %p89
        %p331 = pneg %p86
        %p332 = pneg %p110
        %p333 = pneg %p107
        %p334 = pneg %p131
        %p335 = pneg %p128
        %p336 = pneg %p152
        %p337 = pneg %p149
        %p338 = pneg %p173
        %p339 = pneg %p170
        %p340 = pneg %p199
        %p341 = pneg %p196
        %s342 = sand.u32 %s186, 1
        %s343 = scalar_lea.sflag [#allocation4], %s342
        %s344 = sand.u32 %s186, 1
        %s345 = smul.addr %s344, 256
        %s346 = scalar_lea.vmem [#allocation10], %s345
        %s347 = smul.u32 32, %s26
        %s348 = smul.u32 32, %s26
        %v349 = vld [vmem:[%s300] sm:$0xff]
        %v350 = vld [vmem:[%s300 + $0x8] sm:$0xff]
        %v351 = vld [vmem:[%s300 + $0x10] sm:$0xff]
        %v352 = vld [vmem:[%s300 + $0x18] sm:$0xff]
        %v353 = vld [vmem:[%s300 + $0x20] sm:$0xff]
        %v354 = vld [vmem:[%s300 + $0x28] sm:$0xff]
        %v355 = vld [vmem:[%s300 + $0x30] sm:$0xff]
        %v356 = vld [vmem:[%s300 + $0x38] sm:$0xff]
        %v357 = vld [vmem:[%s300 + $0x40] sm:$0xff]
        %v358 = vld [vmem:[%s300 + $0x48] sm:$0xff]
        %v359 = vld [vmem:[%s300 + $0x50] sm:$0xff]
        %v360 = vld [vmem:[%s300 + $0x58] sm:$0xff]
        %v361 = vld [vmem:[%s300 + $0x60] sm:$0xff]
        %v362 = vld [vmem:[%s300 + $0x68] sm:$0xff]
        %v363 = vld [vmem:[%s300 + $0x70] sm:$0xff]
        %v364 = vld [vmem:[%s300 + $0x78] sm:$0xff]
        %v365 = vld [vmem:[%s300 + $0x80] sm:$0xff]
        %v366 = vld [vmem:[%s300 + $0x88] sm:$0xff]
        %v367 = vld [vmem:[%s300 + $0x90] sm:$0xff]
        %v368 = vld [vmem:[%s300 + $0x98] sm:$0xff]
        %v369 = vld [vmem:[%s300 + $0xa0] sm:$0xff]
        %v370 = vld [vmem:[%s300 + $0xa8] sm:$0xff]
        %v371 = vld [vmem:[%s300 + $0xb0] sm:$0xff]
        %v372 = vld [vmem:[%s300 + $0xb8] sm:$0xff]
        %v373 = vld [vmem:[%s300 + $0xc0] sm:$0xff]
        %v374 = vld [vmem:[%s300 + $0xc8] sm:$0xff]
        %v375 = vld [vmem:[%s300 + $0xd0] sm:$0xff]
        %v376 = vld [vmem:[%s300 + $0xd8] sm:$0xff]
        %v377 = vld [vmem:[%s300 + $0xe0] sm:$0xff]
        %v378 = vld [vmem:[%s300 + $0xe8] sm:$0xff]
        %v379 = vld [vmem:[%s300 + $0xf0] sm:$0xff]
        %v380 = vld [vmem:[%s300 + $0xf8] sm:$0xff]
        %381 = vadd.xlane.f32.xlu0 %v349
        %v382 = vpop.xlane.xlu0 %381
        %383 = vadd.xlane.f32.xlu0 %v350
        %v384 = vpop.xlane.xlu0 %383
        %385 = vadd.xlane.f32.xlu0 %v351
        %v386 = vpop.xlane.xlu0 %385
        %387 = vadd.xlane.f32.xlu0 %v352
        %v388 = vpop.xlane.xlu0 %387
        %389 = vadd.xlane.f32.xlu0 %v353
        %v390 = vpop.xlane.xlu0 %389
        %391 = vadd.xlane.f32.xlu0 %v354
        %v392 = vpop.xlane.xlu0 %391
        %393 = vadd.xlane.f32.xlu0 %v355
        %v394 = vpop.xlane.xlu0 %393
        %395 = vadd.xlane.f32.xlu0 %v356
        %v396 = vpop.xlane.xlu0 %395
        %397 = vadd.xlane.f32.xlu0 %v357
        %v398 = vpop.xlane.xlu0 %397
        %399 = vadd.xlane.f32.xlu0 %v358
        %v400 = vpop.xlane.xlu0 %399
        %401 = vadd.xlane.f32.xlu0 %v359
        %v402 = vpop.xlane.xlu0 %401
        %403 = vadd.xlane.f32.xlu0 %v360
        %v404 = vpop.xlane.xlu0 %403
        %405 = vadd.xlane.f32.xlu0 %v361
        %v406 = vpop.xlane.xlu0 %405
        %407 = vadd.xlane.f32.xlu0 %v362
        %v408 = vpop.xlane.xlu0 %407
        %409 = vadd.xlane.f32.xlu0 %v363
        %v410 = vpop.xlane.xlu0 %409
        %411 = vadd.xlane.f32.xlu0 %v364
        %v412 = vpop.xlane.xlu0 %411
        %413 = vadd.xlane.f32.xlu0 %v365
        %v414 = vpop.xlane.xlu0 %413
        %415 = vadd.xlane.f32.xlu0 %v366
        %v416 = vpop.xlane.xlu0 %415
        %417 = vadd.xlane.f32.xlu0 %v367
        %v418 = vpop.xlane.xlu0 %417
        %419 = vadd.xlane.f32.xlu0 %v368
        %v420 = vpop.xlane.xlu0 %419
        %421 = vadd.xlane.f32.xlu0 %v369
        %v422 = vpop.xlane.xlu0 %421
        %423 = vadd.xlane.f32.xlu0 %v370
        %v424 = vpop.xlane.xlu0 %423
        %425 = vadd.xlane.f32.xlu0 %v371
        %v426 = vpop.xlane.xlu0 %425
        %427 = vadd.xlane.f32.xlu0 %v372
        %v428 = vpop.xlane.xlu0 %427
        %429 = vadd.xlane.f32.xlu0 %v373
        %v430 = vpop.xlane.xlu0 %429
        %431 = vadd.xlane.f32.xlu0 %v374
        %v432 = vpop.xlane.xlu0 %431
        %433 = vadd.xlane.f32.xlu0 %v375
        %v434 = vpop.xlane.xlu0 %433
        %435 = vadd.xlane.f32.xlu0 %v376
        %v436 = vpop.xlane.xlu0 %435
        %437 = vadd.xlane.f32.xlu0 %v377
        %v438 = vpop.xlane.xlu0 %437
        %439 = vadd.xlane.f32.xlu0 %v378
        %v440 = vpop.xlane.xlu0 %439
        %441 = vadd.xlane.f32.xlu0 %v379
        %v442 = vpop.xlane.xlu0 %441
        %443 = vadd.xlane.f32.xlu0 %v380
        %v444 = vpop.xlane.xlu0 %443
        %v445 = vrcp.pop 128.0
        %v446 = vmul.f32 128.0, %v445
        %v447 = vsub.f32 1.0, %v446
        %v448 = vmul.f32 %v445, %v447
        %v449 = vadd.f32 %v445, %v448
        %vm450 = vweird.f32 %v445
        %v451 = vsel %vm450, %v445, %v449
        %v452 = vmul.f32 %v382, %v451
        %v453 = vmul.f32 %v384, %v451
        %v454 = vmul.f32 %v386, %v451
        %v455 = vmul.f32 %v388, %v451
        %v456 = vmul.f32 %v390, %v451
        %v457 = vmul.f32 %v392, %v451
        %v458 = vmul.f32 %v394, %v451
        %v459 = vmul.f32 %v396, %v451
        %v460 = vmul.f32 %v398, %v451
        %v461 = vmul.f32 %v400, %v451
        %v462 = vmul.f32 %v402, %v451
        %v463 = vmul.f32 %v404, %v451
        %v464 = vmul.f32 %v406, %v451
        %v465 = vmul.f32 %v408, %v451
        %v466 = vmul.f32 %v410, %v451
        %v467 = vmul.f32 %v412, %v451
        %v468 = vmul.f32 %v414, %v451
        %v469 = vmul.f32 %v416, %v451
        %v470 = vmul.f32 %v418, %v451
        %v471 = vmul.f32 %v420, %v451
        %v472 = vmul.f32 %v422, %v451
        %v473 = vmul.f32 %v424, %v451
        %v474 = vmul.f32 %v426, %v451
        %v475 = vmul.f32 %v428, %v451
        %v476 = vmul.f32 %v430, %v451
        %v477 = vmul.f32 %v432, %v451
        %v478 = vmul.f32 %v434, %v451
        %v479 = vmul.f32 %v436, %v451
        %v480 = vmul.f32 %v438, %v451
        %v481 = vmul.f32 %v440, %v451
        %v482 = vmul.f32 %v442, %v451
        %v483 = vmul.f32 %v444, %v451
        %v484 = vsub.f32 %v349, %v452
        %v485 = vsub.f32 %v350, %v453
        %v486 = vsub.f32 %v351, %v454
        %v487 = vsub.f32 %v352, %v455
        %v488 = vsub.f32 %v353, %v456
        %v489 = vsub.f32 %v354, %v457
        %v490 = vsub.f32 %v355, %v458
        %v491 = vsub.f32 %v356, %v459
        %v492 = vsub.f32 %v357, %v460
        %v493 = vsub.f32 %v358, %v461
        %v494 = vsub.f32 %v359, %v462
        %v495 = vsub.f32 %v360, %v463
        %v496 = vsub.f32 %v361, %v464
        %v497 = vsub.f32 %v362, %v465
        %v498 = vsub.f32 %v363, %v466
        %v499 = vsub.f32 %v364, %v467
        %v500 = vsub.f32 %v365, %v468
        %v501 = vsub.f32 %v366, %v469
        %v502 = vsub.f32 %v367, %v470
        %v503 = vsub.f32 %v368, %v471
        %v504 = vsub.f32 %v369, %v472
        %v505 = vsub.f32 %v370, %v473
        %v506 = vsub.f32 %v371, %v474
        %v507 = vsub.f32 %v372, %v475
        %v508 = vsub.f32 %v373, %v476
        %v509 = vsub.f32 %v374, %v477
        %v510 = vsub.f32 %v375, %v478
        %v511 = vsub.f32 %v376, %v479
        %v512 = vsub.f32 %v377, %v480
        %v513 = vsub.f32 %v378, %v481
        %v514 = vsub.f32 %v379, %v482
        %v515 = vsub.f32 %v380, %v483
        %v516 = vmul.f32 %v484, %v484
        %v517 = vmul.f32 %v485, %v485
        %v518 = vmul.f32 %v486, %v486
        %v519 = vmul.f32 %v487, %v487
        %v520 = vmul.f32 %v488, %v488
        %v521 = vmul.f32 %v489, %v489
        %v522 = vmul.f32 %v490, %v490
        %v523 = vmul.f32 %v491, %v491
        %v524 = vmul.f32 %v492, %v492
        %v525 = vmul.f32 %v493, %v493
        %v526 = vmul.f32 %v494, %v494
        %v527 = vmul.f32 %v495, %v495
        %v528 = vmul.f32 %v496, %v496
        %v529 = vmul.f32 %v497, %v497
        %v530 = vmul.f32 %v498, %v498
        %v531 = vmul.f32 %v499, %v499
        %v532 = vmul.f32 %v500, %v500
        %v533 = vmul.f32 %v501, %v501
        %v534 = vmul.f32 %v502, %v502
        %v535 = vmul.f32 %v503, %v503
        %v536 = vmul.f32 %v504, %v504
        %v537 = vmul.f32 %v505, %v505
        %v538 = vmul.f32 %v506, %v506
        %v539 = vmul.f32 %v507, %v507
        %v540 = vmul.f32 %v508, %v508
        %v541 = vmul.f32 %v509, %v509
        %v542 = vmul.f32 %v510, %v510
        %v543 = vmul.f32 %v511, %v511
        %v544 = vmul.f32 %v512, %v512
        %v545 = vmul.f32 %v513, %v513
        %v546 = vmul.f32 %v514, %v514
        %v547 = vmul.f32 %v515, %v515
        %548 = vadd.xlane.f32.xlu0 %v516
        %v549 = vpop.xlane.xlu0 %548
        %550 = vadd.xlane.f32.xlu0 %v517
        %v551 = vpop.xlane.xlu0 %550
        %552 = vadd.xlane.f32.xlu0 %v518
        %v553 = vpop.xlane.xlu0 %552
        %554 = vadd.xlane.f32.xlu0 %v519
        %v555 = vpop.xlane.xlu0 %554
        %556 = vadd.xlane.f32.xlu0 %v520
        %v557 = vpop.xlane.xlu0 %556
        %558 = vadd.xlane.f32.xlu0 %v521
        %v559 = vpop.xlane.xlu0 %558
        %560 = vadd.xlane.f32.xlu0 %v522
        %v561 = vpop.xlane.xlu0 %560
        %562 = vadd.xlane.f32.xlu0 %v523
        %v563 = vpop.xlane.xlu0 %562
        %564 = vadd.xlane.f32.xlu0 %v524
        %v565 = vpop.xlane.xlu0 %564
        %566 = vadd.xlane.f32.xlu0 %v525
        %v567 = vpop.xlane.xlu0 %566
        %568 = vadd.xlane.f32.xlu0 %v526
        %v569 = vpop.xlane.xlu0 %568
        %570 = vadd.xlane.f32.xlu0 %v527
        %v571 = vpop.xlane.xlu0 %570
        %572 = vadd.xlane.f32.xlu0 %v528
        %v573 = vpop.xlane.xlu0 %572
        %574 = vadd.xlane.f32.xlu0 %v529
        %v575 = vpop.xlane.xlu0 %574
        %576 = vadd.xlane.f32.xlu0 %v530
        %v577 = vpop.xlane.xlu0 %576
        %578 = vadd.xlane.f32.xlu0 %v531
        %v579 = vpop.xlane.xlu0 %578
        %580 = vadd.xlane.f32.xlu0 %v532
        %v581 = vpop.xlane.xlu0 %580
        %582 = vadd.xlane.f32.xlu0 %v533
        %v583 = vpop.xlane.xlu0 %582
        %584 = vadd.xlane.f32.xlu0 %v534
        %v585 = vpop.xlane.xlu0 %584
        %586 = vadd.xlane.f32.xlu0 %v535
        %v587 = vpop.xlane.xlu0 %586
        %588 = vadd.xlane.f32.xlu0 %v536
        %v589 = vpop.xlane.xlu0 %588
        %590 = vadd.xlane.f32.xlu0 %v537
        %v591 = vpop.xlane.xlu0 %590
        %592 = vadd.xlane.f32.xlu0 %v538
        %v593 = vpop.xlane.xlu0 %592
        %594 = vadd.xlane.f32.xlu0 %v539
        %v595 = vpop.xlane.xlu0 %594
        %596 = vadd.xlane.f32.xlu0 %v540
        %v597 = vpop.xlane.xlu0 %596
        %598 = vadd.xlane.f32.xlu0 %v541
        %v599 = vpop.xlane.xlu0 %598
        %600 = vadd.xlane.f32.xlu0 %v542
        %v601 = vpop.xlane.xlu0 %600
        %602 = vadd.xlane.f32.xlu0 %v543
        %v603 = vpop.xlane.xlu0 %602
        %604 = vadd.xlane.f32.xlu0 %v544
        %v605 = vpop.xlane.xlu0 %604
        %606 = vadd.xlane.f32.xlu0 %v545
        %v607 = vpop.xlane.xlu0 %606
        %608 = vadd.xlane.f32.xlu0 %v546
        %v609 = vpop.xlane.xlu0 %608
        %610 = vadd.xlane.f32.xlu0 %v547
        %v611 = vpop.xlane.xlu0 %610
        %v612 = vmul.f32 %v549, %v451
        %v613 = vmul.f32 %v551, %v451
        %v614 = vmul.f32 %v553, %v451
        %v615 = vmul.f32 %v555, %v451
        %v616 = vmul.f32 %v557, %v451
        %v617 = vmul.f32 %v559, %v451
        %v618 = vmul.f32 %v561, %v451
        %v619 = vmul.f32 %v563, %v451
        %v620 = vmul.f32 %v565, %v451
        %v621 = vmul.f32 %v567, %v451
        %v622 = vmul.f32 %v569, %v451
        %v623 = vmul.f32 %v571, %v451
        %v624 = vmul.f32 %v573, %v451
        %v625 = vmul.f32 %v575, %v451
        %v626 = vmul.f32 %v577, %v451
        %v627 = vmul.f32 %v579, %v451
        %v628 = vmul.f32 %v581, %v451
        %v629 = vmul.f32 %v583, %v451
        %v630 = vmul.f32 %v585, %v451
        %v631 = vmul.f32 %v587, %v451
        %v632 = vmul.f32 %v589, %v451
        %v633 = vmul.f32 %v591, %v451
        %v634 = vmul.f32 %v593, %v451
        %v635 = vmul.f32 %v595, %v451
        %v636 = vmul.f32 %v597, %v451
        %v637 = vmul.f32 %v599, %v451
        %v638 = vmul.f32 %v601, %v451
        %v639 = vmul.f32 %v603, %v451
        %v640 = vmul.f32 %v605, %v451
        %v641 = vmul.f32 %v607, %v451
        %v642 = vmul.f32 %v609, %v451
        %v643 = vmul.f32 %v611, %v451
        %v644 = vadd.f32 %v612, 1e-06
        %v645 = vadd.f32 %v613, 1e-06
        %v646 = vadd.f32 %v614, 1e-06
        %v647 = vadd.f32 %v615, 1e-06
        %v648 = vadd.f32 %v616, 1e-06
        %v649 = vadd.f32 %v617, 1e-06
        %v650 = vadd.f32 %v618, 1e-06
        %v651 = vadd.f32 %v619, 1e-06
        %v652 = vadd.f32 %v620, 1e-06
        %v653 = vadd.f32 %v621, 1e-06
        %v654 = vadd.f32 %v622, 1e-06
        %v655 = vadd.f32 %v623, 1e-06
        %v656 = vadd.f32 %v624, 1e-06
        %v657 = vadd.f32 %v625, 1e-06
        %v658 = vadd.f32 %v626, 1e-06
        %v659 = vadd.f32 %v627, 1e-06
        %v660 = vadd.f32 %v628, 1e-06
        %v661 = vadd.f32 %v629, 1e-06
        %v662 = vadd.f32 %v630, 1e-06
        %v663 = vadd.f32 %v631, 1e-06
        %v664 = vadd.f32 %v632, 1e-06
        %v665 = vadd.f32 %v633, 1e-06
        %v666 = vadd.f32 %v634, 1e-06
        %v667 = vadd.f32 %v635, 1e-06
        %v668 = vadd.f32 %v636, 1e-06
        %v669 = vadd.f32 %v637, 1e-06
        %v670 = vadd.f32 %v638, 1e-06
        %v671 = vadd.f32 %v639, 1e-06
        %v672 = vadd.f32 %v640, 1e-06
        %v673 = vadd.f32 %v641, 1e-06
        %v674 = vadd.f32 %v642, 1e-06
        %v675 = vadd.f32 %v643, 1e-06
        %v676 = vrsqrt.pop %v644
        %v677 = vmul.f32 %v676, %v644
        %v678 = vmul.f32 %v677, %v676
        %v679 = vmul.f32 0.5, %v678
        %v680 = vsub.f32 1.5, %v679
        %v681 = vmul.f32 %v676, %v680
        %vm682 = vweird.f32 %v644
        %vm683 = vweird.f32 %v676
        %vm684 = vmor %vm682, %vm683
        %v685 = vsel %vm684, %v676, %v681
        %v686 = vrsqrt.pop %v645
        %v687 = vmul.f32 %v686, %v645
        %v688 = vmul.f32 %v687, %v686
        %v689 = vmul.f32 0.5, %v688
        %v690 = vsub.f32 1.5, %v689
        %v691 = vmul.f32 %v686, %v690
        %vm692 = vweird.f32 %v645
        %vm693 = vweird.f32 %v686
        %vm694 = vmor %vm692, %vm693
        %v695 = vsel %vm694, %v686, %v691
        %v696 = vrsqrt.pop %v646
        %v697 = vmul.f32 %v696, %v646
        %v698 = vmul.f32 %v697, %v696
        %v699 = vmul.f32 0.5, %v698
        %v700 = vsub.f32 1.5, %v699
        %v701 = vmul.f32 %v696, %v700
        %vm702 = vweird.f32 %v646
        %vm703 = vweird.f32 %v696
        %vm704 = vmor %vm702, %vm703
        %v705 = vsel %vm704, %v696, %v701
        %v706 = vrsqrt.pop %v647
        %v707 = vmul.f32 %v706, %v647
        %v708 = vmul.f32 %v707, %v706
        %v709 = vmul.f32 0.5, %v708
        %v710 = vsub.f32 1.5, %v709
        %v711 = vmul.f32 %v706, %v710
        %vm712 = vweird.f32 %v647
        %vm713 = vweird.f32 %v706
        %vm714 = vmor %vm712, %vm713
        %v715 = vsel %vm714, %v706, %v711
        %v716 = vrsqrt.pop %v648
        %v717 = vmul.f32 %v716, %v648
        %v718 = vmul.f32 %v717, %v716
        %v719 = vmul.f32 0.5, %v718
        %v720 = vsub.f32 1.5, %v719
        %v721 = vmul.f32 %v716, %v720
        %vm722 = vweird.f32 %v648
        %vm723 = vweird.f32 %v716
        %vm724 = vmor %vm722, %vm723
        %v725 = vsel %vm724, %v716, %v721
        %v726 = vrsqrt.pop %v649
        %v727 = vmul.f32 %v726, %v649
        %v728 = vmul.f32 %v727, %v726
        %v729 = vmul.f32 0.5, %v728
        %v730 = vsub.f32 1.5, %v729
        %v731 = vmul.f32 %v726, %v730
        %vm732 = vweird.f32 %v649
        %vm733 = vweird.f32 %v726
        %vm734 = vmor %vm732, %vm733
        %v735 = vsel %vm734, %v726, %v731
        %v736 = vrsqrt.pop %v650
        %v737 = vmul.f32 %v736, %v650
        %v738 = vmul.f32 %v737, %v736
        %v739 = vmul.f32 0.5, %v738
        %v740 = vsub.f32 1.5, %v739
        %v741 = vmul.f32 %v736, %v740
        %vm742 = vweird.f32 %v650
        %vm743 = vweird.f32 %v736
        %vm744 = vmor %vm742, %vm743
        %v745 = vsel %vm744, %v736, %v741
        %v746 = vrsqrt.pop %v651
        %v747 = vmul.f32 %v746, %v651
        %v748 = vmul.f32 %v747, %v746
        %v749 = vmul.f32 0.5, %v748
        %v750 = vsub.f32 1.5, %v749
        %v751 = vmul.f32 %v746, %v750
        %vm752 = vweird.f32 %v651
        %vm753 = vweird.f32 %v746
        %vm754 = vmor %vm752, %vm753
        %v755 = vsel %vm754, %v746, %v751
        %v756 = vrsqrt.pop %v652
        %v757 = vmul.f32 %v756, %v652
        %v758 = vmul.f32 %v757, %v756
        %v759 = vmul.f32 0.5, %v758
        %v760 = vsub.f32 1.5, %v759
        %v761 = vmul.f32 %v756, %v760
        %vm762 = vweird.f32 %v652
        %vm763 = vweird.f32 %v756
        %vm764 = vmor %vm762, %vm763
        %v765 = vsel %vm764, %v756, %v761
        %v766 = vrsqrt.pop %v653
        %v767 = vmul.f32 %v766, %v653
        %v768 = vmul.f32 %v767, %v766
        %v769 = vmul.f32 0.5, %v768
        %v770 = vsub.f32 1.5, %v769
        %v771 = vmul.f32 %v766, %v770
        %vm772 = vweird.f32 %v653
        %vm773 = vweird.f32 %v766
        %vm774 = vmor %vm772, %vm773
        %v775 = vsel %vm774, %v766, %v771
        %v776 = vrsqrt.pop %v654
        %v777 = vmul.f32 %v776, %v654
        %v778 = vmul.f32 %v777, %v776
        %v779 = vmul.f32 0.5, %v778
        %v780 = vsub.f32 1.5, %v779
        %v781 = vmul.f32 %v776, %v780
        %vm782 = vweird.f32 %v654
        %vm783 = vweird.f32 %v776
        %vm784 = vmor %vm782, %vm783
        %v785 = vsel %vm784, %v776, %v781
        %v786 = vrsqrt.pop %v655
        %v787 = vmul.f32 %v786, %v655
        %v788 = vmul.f32 %v787, %v786
        %v789 = vmul.f32 0.5, %v788
        %v790 = vsub.f32 1.5, %v789
        %v791 = vmul.f32 %v786, %v790
        %vm792 = vweird.f32 %v655
        %vm793 = vweird.f32 %v786
        %vm794 = vmor %vm792, %vm793
        %v795 = vsel %vm794, %v786, %v791
        %v796 = vrsqrt.pop %v656
        %v797 = vmul.f32 %v796, %v656
        %v798 = vmul.f32 %v797, %v796
        %v799 = vmul.f32 0.5, %v798
        %v800 = vsub.f32 1.5, %v799
        %v801 = vmul.f32 %v796, %v800
        %vm802 = vweird.f32 %v656
        %vm803 = vweird.f32 %v796
        %vm804 = vmor %vm802, %vm803
        %v805 = vsel %vm804, %v796, %v801
        %v806 = vrsqrt.pop %v657
        %v807 = vmul.f32 %v806, %v657
        %v808 = vmul.f32 %v807, %v806
        %v809 = vmul.f32 0.5, %v808
        %v810 = vsub.f32 1.5, %v809
        %v811 = vmul.f32 %v806, %v810
        %vm812 = vweird.f32 %v657
        %vm813 = vweird.f32 %v806
        %vm814 = vmor %vm812, %vm813
        %v815 = vsel %vm814, %v806, %v811
        %v816 = vrsqrt.pop %v658
        %v817 = vmul.f32 %v816, %v658
        %v818 = vmul.f32 %v817, %v816
        %v819 = vmul.f32 0.5, %v818
        %v820 = vsub.f32 1.5, %v819
        %v821 = vmul.f32 %v816, %v820
        %vm822 = vweird.f32 %v658
        %vm823 = vweird.f32 %v816
        %vm824 = vmor %vm822, %vm823
        %v825 = vsel %vm824, %v816, %v821
        %v826 = vrsqrt.pop %v659
        %v827 = vmul.f32 %v826, %v659
        %v828 = vmul.f32 %v827, %v826
        %v829 = vmul.f32 0.5, %v828
        %v830 = vsub.f32 1.5, %v829
        %v831 = vmul.f32 %v826, %v830
        %vm832 = vweird.f32 %v659
        %vm833 = vweird.f32 %v826
        %vm834 = vmor %vm832, %vm833
        %v835 = vsel %vm834, %v826, %v831
        %v836 = vrsqrt.pop %v660
        %v837 = vmul.f32 %v836, %v660
        %v838 = vmul.f32 %v837, %v836
        %v839 = vmul.f32 0.5, %v838
        %v840 = vsub.f32 1.5, %v839
        %v841 = vmul.f32 %v836, %v840
        %vm842 = vweird.f32 %v660
        %vm843 = vweird.f32 %v836
        %vm844 = vmor %vm842, %vm843
        %v845 = vsel %vm844, %v836, %v841
        %v846 = vrsqrt.pop %v661
        %v847 = vmul.f32 %v846, %v661
        %v848 = vmul.f32 %v847, %v846
        %v849 = vmul.f32 0.5, %v848
        %v850 = vsub.f32 1.5, %v849
        %v851 = vmul.f32 %v846, %v850
        %vm852 = vweird.f32 %v661
        %vm853 = vweird.f32 %v846
        %vm854 = vmor %vm852, %vm853
        %v855 = vsel %vm854, %v846, %v851
        %v856 = vrsqrt.pop %v662
        %v857 = vmul.f32 %v856, %v662
        %v858 = vmul.f32 %v857, %v856
        %v859 = vmul.f32 0.5, %v858
        %v860 = vsub.f32 1.5, %v859
        %v861 = vmul.f32 %v856, %v860
        %vm862 = vweird.f32 %v662
        %vm863 = vweird.f32 %v856
        %vm864 = vmor %vm862, %vm863
        %v865 = vsel %vm864, %v856, %v861
        %v866 = vrsqrt.pop %v663
        %v867 = vmul.f32 %v866, %v663
        %v868 = vmul.f32 %v867, %v866
        %v869 = vmul.f32 0.5, %v868
        %v870 = vsub.f32 1.5, %v869
        %v871 = vmul.f32 %v866, %v870
        %vm872 = vweird.f32 %v663
        %vm873 = vweird.f32 %v866
        %vm874 = vmor %vm872, %vm873
        %v875 = vsel %vm874, %v866, %v871
        %v876 = vrsqrt.pop %v664
        %v877 = vmul.f32 %v876, %v664
        %v878 = vmul.f32 %v877, %v876
        %v879 = vmul.f32 0.5, %v878
        %v880 = vsub.f32 1.5, %v879
        %v881 = vmul.f32 %v876, %v880
        %vm882 = vweird.f32 %v664
        %vm883 = vweird.f32 %v876
        %vm884 = vmor %vm882, %vm883
        %v885 = vsel %vm884, %v876, %v881
        %v886 = vrsqrt.pop %v665
        %v887 = vmul.f32 %v886, %v665
        %v888 = vmul.f32 %v887, %v886
        %v889 = vmul.f32 0.5, %v888
        %v890 = vsub.f32 1.5, %v889
        %v891 = vmul.f32 %v886, %v890
        %vm892 = vweird.f32 %v665
        %vm893 = vweird.f32 %v886
        %vm894 = vmor %vm892, %vm893
        %v895 = vsel %vm894, %v886, %v891
        %v896 = vrsqrt.pop %v666
        %v897 = vmul.f32 %v896, %v666
        %v898 = vmul.f32 %v897, %v896
        %v899 = vmul.f32 0.5, %v898
        %v900 = vsub.f32 1.5, %v899
        %v901 = vmul.f32 %v896, %v900
        %vm902 = vweird.f32 %v666
        %vm903 = vweird.f32 %v896
        %vm904 = vmor %vm902, %vm903
        %v905 = vsel %vm904, %v896, %v901
        %v906 = vrsqrt.pop %v667
        %v907 = vmul.f32 %v906, %v667
        %v908 = vmul.f32 %v907, %v906
        %v909 = vmul.f32 0.5, %v908
        %v910 = vsub.f32 1.5, %v909
        %v911 = vmul.f32 %v906, %v910
        %vm912 = vweird.f32 %v667
        %vm913 = vweird.f32 %v906
        %vm914 = vmor %vm912, %vm913
        %v915 = vsel %vm914, %v906, %v911
        %v916 = vrsqrt.pop %v668
        %v917 = vmul.f32 %v916, %v668
        %v918 = vmul.f32 %v917, %v916
        %v919 = vmul.f32 0.5, %v918
        %v920 = vsub.f32 1.5, %v919
        %v921 = vmul.f32 %v916, %v920
        %vm922 = vweird.f32 %v668
        %vm923 = vweird.f32 %v916
        %vm924 = vmor %vm922, %vm923
        %v925 = vsel %vm924, %v916, %v921
        %v926 = vrsqrt.pop %v669
        %v927 = vmul.f32 %v926, %v669
        %v928 = vmul.f32 %v927, %v926
        %v929 = vmul.f32 0.5, %v928
        %v930 = vsub.f32 1.5, %v929
        %v931 = vmul.f32 %v926, %v930
        %vm932 = vweird.f32 %v669
        %vm933 = vweird.f32 %v926
        %vm934 = vmor %vm932, %vm933
        %v935 = vsel %vm934, %v926, %v931
        %v936 = vrsqrt.pop %v670
        %v937 = vmul.f32 %v936, %v670
        %v938 = vmul.f32 %v937, %v936
        %v939 = vmul.f32 0.5, %v938
        %v940 = vsub.f32 1.5, %v939
        %v941 = vmul.f32 %v936, %v940
        %vm942 = vweird.f32 %v670
        %vm943 = vweird.f32 %v936
        %vm944 = vmor %vm942, %vm943
        %v945 = vsel %vm944, %v936, %v941
        %v946 = vrsqrt.pop %v671
        %v947 = vmul.f32 %v946, %v671
        %v948 = vmul.f32 %v947, %v946
        %v949 = vmul.f32 0.5, %v948
        %v950 = vsub.f32 1.5, %v949
        %v951 = vmul.f32 %v946, %v950
        %vm952 = vweird.f32 %v671
        %vm953 = vweird.f32 %v946
        %vm954 = vmor %vm952, %vm953
        %v955 = vsel %vm954, %v946, %v951
        %v956 = vrsqrt.pop %v672
        %v957 = vmul.f32 %v956, %v672
        %v958 = vmul.f32 %v957, %v956
        %v959 = vmul.f32 0.5, %v958
        %v960 = vsub.f32 1.5, %v959
        %v961 = vmul.f32 %v956, %v960
        %vm962 = vweird.f32 %v672
        %vm963 = vweird.f32 %v956
        %vm964 = vmor %vm962, %vm963
        %v965 = vsel %vm964, %v956, %v961
        %v966 = vrsqrt.pop %v673
        %v967 = vmul.f32 %v966, %v673
        %v968 = vmul.f32 %v967, %v966
        %v969 = vmul.f32 0.5, %v968
        %v970 = vsub.f32 1.5, %v969
        %v971 = vmul.f32 %v966, %v970
        %vm972 = vweird.f32 %v673
        %vm973 = vweird.f32 %v966
        %vm974 = vmor %vm972, %vm973
        %v975 = vsel %vm974, %v966, %v971
        %v976 = vrsqrt.pop %v674
        %v977 = vmul.f32 %v976, %v674
        %v978 = vmul.f32 %v977, %v976
        %v979 = vmul.f32 0.5, %v978
        %v980 = vsub.f32 1.5, %v979
        %v981 = vmul.f32 %v976, %v980
        %vm982 = vweird.f32 %v674
        %vm983 = vweird.f32 %v976
        %vm984 = vmor %vm982, %vm983
        %v985 = vsel %vm984, %v976, %v981
        %v986 = vrsqrt.pop %v675
        %v987 = vmul.f32 %v986, %v675
        %v988 = vmul.f32 %v987, %v986
        %v989 = vmul.f32 0.5, %v988
        %v990 = vsub.f32 1.5, %v989
        %v991 = vmul.f32 %v986, %v990
        %vm992 = vweird.f32 %v675
        %vm993 = vweird.f32 %v986
        %vm994 = vmor %vm992, %vm993
        %v995 = vsel %vm994, %v986, %v991
        %v996 = vmul.f32 %v484, %v685
        %v997 = vmul.f32 %v485, %v695
        %v998 = vmul.f32 %v486, %v705
        %v999 = vmul.f32 %v487, %v715
        %v1000 = vmul.f32 %v488, %v725
        %v1001 = vmul.f32 %v489, %v735
        %v1002 = vmul.f32 %v490, %v745
        %v1003 = vmul.f32 %v491, %v755
        %v1004 = vmul.f32 %v492, %v765
        %v1005 = vmul.f32 %v493, %v775
        %v1006 = vmul.f32 %v494, %v785
        %v1007 = vmul.f32 %v495, %v795
        %v1008 = vmul.f32 %v496, %v805
        %v1009 = vmul.f32 %v497, %v815
        %v1010 = vmul.f32 %v498, %v825
        %v1011 = vmul.f32 %v499, %v835
        %v1012 = vmul.f32 %v500, %v845
        %v1013 = vmul.f32 %v501, %v855
        %v1014 = vmul.f32 %v502, %v865
        %v1015 = vmul.f32 %v503, %v875
        %v1016 = vmul.f32 %v504, %v885
        %v1017 = vmul.f32 %v505, %v895
        %v1018 = vmul.f32 %v506, %v905
        %v1019 = vmul.f32 %v507, %v915
        %v1020 = vmul.f32 %v508, %v925
        %v1021 = vmul.f32 %v509, %v935
        %v1022 = vmul.f32 %v510, %v945
        %v1023 = vmul.f32 %v511, %v955
        %v1024 = vmul.f32 %v512, %v965
        %v1025 = vmul.f32 %v513, %v975
        %v1026 = vmul.f32 %v514, %v985
        %v1027 = vmul.f32 %v515, %v995
        %v1028 = vld [vmem:[#allocation5] sm:$0x1]
        %v1030 = vperm.slane %v1028, 0
        %v1032 = vmul.f32 %v996, %v1030
        %v1033 = vmul.f32 %v997, %v1030
        %v1034 = vmul.f32 %v998, %v1030
        %v1035 = vmul.f32 %v999, %v1030
        %v1036 = vmul.f32 %v1000, %v1030
        %v1037 = vmul.f32 %v1001, %v1030
        %v1038 = vmul.f32 %v1002, %v1030
        %v1039 = vmul.f32 %v1003, %v1030
        %v1040 = vmul.f32 %v1004, %v1030
        %v1041 = vmul.f32 %v1005, %v1030
        %v1042 = vmul.f32 %v1006, %v1030
        %v1043 = vmul.f32 %v1007, %v1030
        %v1044 = vmul.f32 %v1008, %v1030
        %v1045 = vmul.f32 %v1009, %v1030
        %v1046 = vmul.f32 %v1010, %v1030
        %v1047 = vmul.f32 %v1011, %v1030
        %v1048 = vmul.f32 %v1012, %v1030
        %v1049 = vmul.f32 %v1013, %v1030
        %v1050 = vmul.f32 %v1014, %v1030
        %v1051 = vmul.f32 %v1015, %v1030
        %v1052 = vmul.f32 %v1016, %v1030
        %v1053 = vmul.f32 %v1017, %v1030
        %v1054 = vmul.f32 %v1018, %v1030
        %v1055 = vmul.f32 %v1019, %v1030
        %v1056 = vmul.f32 %v1020, %v1030
        %v1057 = vmul.f32 %v1021, %v1030
        %v1058 = vmul.f32 %v1022, %v1030
        %v1059 = vmul.f32 %v1023, %v1030
        %v1060 = vmul.f32 %v1024, %v1030
        %v1061 = vmul.f32 %v1025, %v1030
        %v1062 = vmul.f32 %v1026, %v1030
        %v1063 = vmul.f32 %v1027, %v1030
        %v1064 = vld [vmem:[%s2] sm:$0x1]
        %v1066 = vperm.slane %v1064, 0
        %v1068 = vadd.f32 %v1032, %v1066
        %v1069 = vadd.f32 %v1033, %v1066
        %v1070 = vadd.f32 %v1034, %v1066
        %v1071 = vadd.f32 %v1035, %v1066
        %v1072 = vadd.f32 %v1036, %v1066
        %v1073 = vadd.f32 %v1037, %v1066
        %v1074 = vadd.f32 %v1038, %v1066
        %v1075 = vadd.f32 %v1039, %v1066
        %v1076 = vadd.f32 %v1040, %v1066
        %v1077 = vadd.f32 %v1041, %v1066
        %v1078 = vadd.f32 %v1042, %v1066
        %v1079 = vadd.f32 %v1043, %v1066
        %v1080 = vadd.f32 %v1044, %v1066
        %v1081 = vadd.f32 %v1045, %v1066
        %v1082 = vadd.f32 %v1046, %v1066
        %v1083 = vadd.f32 %v1047, %v1066
        %v1084 = vadd.f32 %v1048, %v1066
        %v1085 = vadd.f32 %v1049, %v1066
        %v1086 = vadd.f32 %v1050, %v1066
        %v1087 = vadd.f32 %v1051, %v1066
        %v1088 = vadd.f32 %v1052, %v1066
        %v1089 = vadd.f32 %v1053, %v1066
        %v1090 = vadd.f32 %v1054, %v1066
        %v1091 = vadd.f32 %v1055, %v1066
        %v1092 = vadd.f32 %v1056, %v1066
        %v1093 = vadd.f32 %v1057, %v1066
        %v1094 = vadd.f32 %v1058, %v1066
        %v1095 = vadd.f32 %v1059, %v1066
        %v1096 = vadd.f32 %v1060, %v1066
        %v1097 = vadd.f32 %v1061, %v1066
        %v1098 = vadd.f32 %v1062, %v1066
        %v1099 = vadd.f32 %v1063, %v1066
        %v1100 = vpack.c.bf16 %v1069, %v1068
        %v1101 = vpack.c.bf16 %v1071, %v1070
        %v1102 = vpack.c.bf16 %v1073, %v1072
        %v1103 = vpack.c.bf16 %v1075, %v1074
        %v1104 = vpack.c.bf16 %v1077, %v1076
        %v1105 = vpack.c.bf16 %v1079, %v1078
        %v1106 = vpack.c.bf16 %v1081, %v1080
        %v1107 = vpack.c.bf16 %v1083, %v1082
        %v1108 = vpack.c.bf16 %v1085, %v1084
        %v1109 = vpack.c.bf16 %v1087, %v1086
        %v1110 = vpack.c.bf16 %v1089, %v1088
        %v1111 = vpack.c.bf16 %v1091, %v1090
        %v1112 = vpack.c.bf16 %v1093, %v1092
        %v1113 = vpack.c.bf16 %v1095, %v1094
        %v1114 = vpack.c.bf16 %v1097, %v1096
        %v1115 = vpack.c.bf16 %v1099, %v1098
        %v1116 = vld [vmem:[#allocation7] sm:$0xff]
        %v1117 = vld [vmem:[#allocation7 + $0x8] sm:$0xff]
        %v1118 = vld [vmem:[#allocation7 + $0x10] sm:$0xff]
        %v1119 = vld [vmem:[#allocation7 + $0x18] sm:$0xff]
        %v1120 = vld [vmem:[#allocation7 + $0x20] sm:$0xff]
        %v1121 = vld [vmem:[#allocation7 + $0x28] sm:$0xff]
        %v1122 = vld [vmem:[#allocation7 + $0x30] sm:$0xff]
        %v1123 = vld [vmem:[#allocation7 + $0x38] sm:$0xff]
        %v1124 = vld [vmem:[#allocation7 + $0x40] sm:$0xff]
        %v1125 = vld [vmem:[#allocation7 + $0x48] sm:$0xff]
        %v1126 = vld [vmem:[#allocation7 + $0x50] sm:$0xff]
        %v1127 = vld [vmem:[#allocation7 + $0x58] sm:$0xff]
        %v1128 = vld [vmem:[#allocation7 + $0x60] sm:$0xff]
        %v1129 = vld [vmem:[#allocation7 + $0x68] sm:$0xff]
        %v1130 = vld [vmem:[#allocation7 + $0x70] sm:$0xff]
        %v1131 = vld [vmem:[#allocation7 + $0x78] sm:$0xff]
        %v1132 = vld [vmem:[%s4] sm:$0x3]
        %v1134 = vperm.slane %v1132, 0
        %v1135 = vperm.slane %v1132, 1
        %v1154 = vunpack.c.l.b16 %v1116
        %v1155 = vunpack.c.h.b16 %v1116
        %v1156 = vunpack.c.l.b16 %v1117
        %v1157 = vunpack.c.h.b16 %v1117
        %v1158 = vunpack.c.l.b16 %v1118
        %v1159 = vunpack.c.h.b16 %v1118
        %v1160 = vunpack.c.l.b16 %v1119
        %v1161 = vunpack.c.h.b16 %v1119
        %v1162 = vunpack.c.l.b16 %v1120
        %v1163 = vunpack.c.h.b16 %v1120
        %v1164 = vunpack.c.l.b16 %v1121
        %v1165 = vunpack.c.h.b16 %v1121
        %v1166 = vunpack.c.l.b16 %v1122
        %v1167 = vunpack.c.h.b16 %v1122
        %v1168 = vunpack.c.l.b16 %v1123
        %v1169 = vunpack.c.h.b16 %v1123
        %v1170 = vunpack.c.l.b16 %v1124
        %v1171 = vunpack.c.h.b16 %v1124
        %v1172 = vunpack.c.l.b16 %v1125
        %v1173 = vunpack.c.h.b16 %v1125
        %v1174 = vunpack.c.l.b16 %v1126
        %v1175 = vunpack.c.h.b16 %v1126
        %v1176 = vunpack.c.l.b16 %v1127
        %v1177 = vunpack.c.h.b16 %v1127
        %v1178 = vunpack.c.l.b16 %v1128
        %v1179 = vunpack.c.h.b16 %v1128
        %v1180 = vunpack.c.l.b16 %v1129
        %v1181 = vunpack.c.h.b16 %v1129
        %v1182 = vunpack.c.l.b16 %v1130
        %v1183 = vunpack.c.h.b16 %v1130
        %v1184 = vunpack.c.l.b16 %v1131
        %v1185 = vunpack.c.h.b16 %v1131
        %v1186 = vpack.c.b16 %v1156, %v1154
        %v1187 = vpack.c.b16 %v1157, %v1155
        %v1188 = vpack.c.b16 %v1160, %v1158
        %v1189 = vpack.c.b16 %v1161, %v1159
        %v1190 = vpack.c.b16 %v1164, %v1162
        %v1191 = vpack.c.b16 %v1165, %v1163
        %v1192 = vpack.c.b16 %v1168, %v1166
        %v1193 = vpack.c.b16 %v1169, %v1167
        %v1194 = vpack.c.b16 %v1172, %v1170
        %v1195 = vpack.c.b16 %v1173, %v1171
        %v1196 = vpack.c.b16 %v1176, %v1174
        %v1197 = vpack.c.b16 %v1177, %v1175
        %v1198 = vpack.c.b16 %v1180, %v1178
        %v1199 = vpack.c.b16 %v1181, %v1179
        %v1200 = vpack.c.b16 %v1184, %v1182
        %v1201 = vpack.c.b16 %v1185, %v1183
        %1218 = vmatpush.bf16.msra.mxu0 %v1200
        %1219 = vmatpush.bf16.msra.mxu0 %v1198
        %1220 = vmatpush.bf16.msra.mxu0 %v1196
        %1221 = vmatpush.bf16.msra.mxu0 %v1194
        %1222 = vmatpush.bf16.msra.mxu0 %v1192
        %1223 = vmatpush.bf16.msra.mxu0 %v1190
        %1224 = vmatpush.bf16.msra.mxu0 %v1188
        %1225 = vmatpush.bf16.msra.mxu0 %v1186
        %1226 = vmatmul.bf16.gmra.mxu0 %v1100
        %v1227 = vpop.f32.mrf.mxu0
        %v1228 = vadd.f32 %v1134, %v1227
        %v1229 = vpop.f32.mrf.mxu0
        %v1230 = vadd.f32 %v1134, %v1229
        %1231 = vmatmul.bf16.gmra.mxu0 %v1101
        %v1232 = vpop.f32.mrf.mxu0
        %v1233 = vadd.f32 %v1134, %v1232
        %v1234 = vpop.f32.mrf.mxu0
        %v1235 = vadd.f32 %v1134, %v1234
        %1236 = vmatmul.bf16.gmra.mxu0 %v1102
        %v1237 = vpop.f32.mrf.mxu0
        %v1238 = vadd.f32 %v1134, %v1237
        %v1239 = vpop.f32.mrf.mxu0
        %v1240 = vadd.f32 %v1134, %v1239
        %1241 = vmatmul.bf16.gmra.mxu0 %v1103
        %v1242 = vpop.f32.mrf.mxu0
        %v1243 = vadd.f32 %v1134, %v1242
        %v1244 = vpop.f32.mrf.mxu0
        %v1245 = vadd.f32 %v1134, %v1244
        %1246 = vmatmul.bf16.gmra.mxu0 %v1104
        %v1247 = vpop.f32.mrf.mxu0
        %v1248 = vadd.f32 %v1134, %v1247
        %v1249 = vpop.f32.mrf.mxu0
        %v1250 = vadd.f32 %v1134, %v1249
        %1251 = vmatmul.bf16.gmra.mxu0 %v1105
        %v1252 = vpop.f32.mrf.mxu0
        %v1253 = vadd.f32 %v1134, %v1252
        %v1254 = vpop.f32.mrf.mxu0
        %v1255 = vadd.f32 %v1134, %v1254
        %1256 = vmatmul.bf16.gmra.mxu0 %v1106
        %v1257 = vpop.f32.mrf.mxu0
        %v1258 = vadd.f32 %v1134, %v1257
        %v1259 = vpop.f32.mrf.mxu0
        %v1260 = vadd.f32 %v1134, %v1259
        %1261 = vmatmul.bf16.gmra.mxu0 %v1107
        %v1262 = vpop.f32.mrf.mxu0
        %v1263 = vadd.f32 %v1134, %v1262
        %v1264 = vpop.f32.mrf.mxu0
        %v1265 = vadd.f32 %v1134, %v1264
        %1266 = vmatmul.bf16.gmra.mxu0 %v1108
        %v1267 = vpop.f32.mrf.mxu0
        %v1268 = vadd.f32 %v1134, %v1267
        %v1269 = vpop.f32.mrf.mxu0
        %v1270 = vadd.f32 %v1134, %v1269
        %1271 = vmatmul.bf16.gmra.mxu0 %v1109
        %v1272 = vpop.f32.mrf.mxu0
        %v1273 = vadd.f32 %v1134, %v1272
        %v1274 = vpop.f32.mrf.mxu0
        %v1275 = vadd.f32 %v1134, %v1274
        %1276 = vmatmul.bf16.gmra.mxu0 %v1110
        %v1277 = vpop.f32.mrf.mxu0
        %v1278 = vadd.f32 %v1134, %v1277
        %v1279 = vpop.f32.mrf.mxu0
        %v1280 = vadd.f32 %v1134, %v1279
        %1281 = vmatmul.bf16.gmra.mxu0 %v1111
        %v1282 = vpop.f32.mrf.mxu0
        %v1283 = vadd.f32 %v1134, %v1282
        %v1284 = vpop.f32.mrf.mxu0
        %v1285 = vadd.f32 %v1134, %v1284
        %1286 = vmatmul.bf16.gmra.mxu0 %v1112
        %v1287 = vpop.f32.mrf.mxu0
        %v1288 = vadd.f32 %v1134, %v1287
        %v1289 = vpop.f32.mrf.mxu0
        %v1290 = vadd.f32 %v1134, %v1289
        %1291 = vmatmul.bf16.gmra.mxu0 %v1113
        %v1292 = vpop.f32.mrf.mxu0
        %v1293 = vadd.f32 %v1134, %v1292
        %v1294 = vpop.f32.mrf.mxu0
        %v1295 = vadd.f32 %v1134, %v1294
        %1296 = vmatmul.bf16.gmra.mxu0 %v1114
        %v1297 = vpop.f32.mrf.mxu0
        %v1298 = vadd.f32 %v1134, %v1297
        %v1299 = vpop.f32.mrf.mxu0
        %v1300 = vadd.f32 %v1134, %v1299
        %1301 = vmatmul.bf16.gmra.mxu0 %v1115
        %v1302 = vpop.f32.mrf.mxu0
        %v1303 = vadd.f32 %v1134, %v1302
        %v1304 = vpop.f32.mrf.mxu0
        %v1305 = vadd.f32 %v1134, %v1304
        %1306 = vdwg.mxu0
        %1307 = vmatpush.bf16.msra.mxu0 %v1201
        %1308 = vmatpush.bf16.msra.mxu0 %v1199
        %1309 = vmatpush.bf16.msra.mxu0 %v1197
        %1310 = vmatpush.bf16.msra.mxu0 %v1195
        %1311 = vmatpush.bf16.msra.mxu0 %v1193
        %1312 = vmatpush.bf16.msra.mxu0 %v1191
        %1313 = vmatpush.bf16.msra.mxu0 %v1189
        %1314 = vmatpush.bf16.msra.mxu0 %v1187
        %1315 = vmatmul.bf16.gmra.mxu0 %v1100
        %v1316 = vpop.f32.mrf.mxu0
        %v1317 = vadd.f32 %v1135, %v1316
        %v1318 = vpop.f32.mrf.mxu0
        %v1319 = vadd.f32 %v1135, %v1318
        %1320 = vmatmul.bf16.gmra.mxu0 %v1101
        %v1321 = vpop.f32.mrf.mxu0
        %v1322 = vadd.f32 %v1135, %v1321
        %v1323 = vpop.f32.mrf.mxu0
        %v1324 = vadd.f32 %v1135, %v1323
        %1325 = vmatmul.bf16.gmra.mxu0 %v1102
        %v1326 = vpop.f32.mrf.mxu0
        %v1327 = vadd.f32 %v1135, %v1326
        %v1328 = vpop.f32.mrf.mxu0
        %v1329 = vadd.f32 %v1135, %v1328
        %1330 = vmatmul.bf16.gmra.mxu0 %v1103
        %v1331 = vpop.f32.mrf.mxu0
        %v1332 = vadd.f32 %v1135, %v1331
        %v1333 = vpop.f32.mrf.mxu0
        %v1334 = vadd.f32 %v1135, %v1333
        %1335 = vmatmul.bf16.gmra.mxu0 %v1104
        %v1336 = vpop.f32.mrf.mxu0
        %v1337 = vadd.f32 %v1135, %v1336
        %v1338 = vpop.f32.mrf.mxu0
        %v1339 = vadd.f32 %v1135, %v1338
        %1340 = vmatmul.bf16.gmra.mxu0 %v1105
        %v1341 = vpop.f32.mrf.mxu0
        %v1342 = vadd.f32 %v1135, %v1341
        %v1343 = vpop.f32.mrf.mxu0
        %v1344 = vadd.f32 %v1135, %v1343
        %1345 = vmatmul.bf16.gmra.mxu0 %v1106
        %v1346 = vpop.f32.mrf.mxu0
        %v1347 = vadd.f32 %v1135, %v1346
        %v1348 = vpop.f32.mrf.mxu0
        %v1349 = vadd.f32 %v1135, %v1348
        %1350 = vmatmul.bf16.gmra.mxu0 %v1107
        %v1351 = vpop.f32.mrf.mxu0
        %v1352 = vadd.f32 %v1135, %v1351
        %v1353 = vpop.f32.mrf.mxu0
        %v1354 = vadd.f32 %v1135, %v1353
        %1355 = vmatmul.bf16.gmra.mxu0 %v1108
        %v1356 = vpop.f32.mrf.mxu0
        %v1357 = vadd.f32 %v1135, %v1356
        %v1358 = vpop.f32.mrf.mxu0
        %v1359 = vadd.f32 %v1135, %v1358
        %1360 = vmatmul.bf16.gmra.mxu0 %v1109
        %v1361 = vpop.f32.mrf.mxu0
        %v1362 = vadd.f32 %v1135, %v1361
        %v1363 = vpop.f32.mrf.mxu0
        %v1364 = vadd.f32 %v1135, %v1363
        %1365 = vmatmul.bf16.gmra.mxu0 %v1110
        %v1366 = vpop.f32.mrf.mxu0
        %v1367 = vadd.f32 %v1135, %v1366
        %v1368 = vpop.f32.mrf.mxu0
        %v1369 = vadd.f32 %v1135, %v1368
        %1370 = vmatmul.bf16.gmra.mxu0 %v1111
        %v1371 = vpop.f32.mrf.mxu0
        %v1372 = vadd.f32 %v1135, %v1371
        %v1373 = vpop.f32.mrf.mxu0
        %v1374 = vadd.f32 %v1135, %v1373
        %1375 = vmatmul.bf16.gmra.mxu0 %v1112
        %v1376 = vpop.f32.mrf.mxu0
        %v1377 = vadd.f32 %v1135, %v1376
        %v1378 = vpop.f32.mrf.mxu0
        %v1379 = vadd.f32 %v1135, %v1378
        %1380 = vmatmul.bf16.gmra.mxu0 %v1113
        %v1381 = vpop.f32.mrf.mxu0
        %v1382 = vadd.f32 %v1135, %v1381
        %v1383 = vpop.f32.mrf.mxu0
        %v1384 = vadd.f32 %v1135, %v1383
        %1385 = vmatmul.bf16.gmra.mxu0 %v1114
        %v1386 = vpop.f32.mrf.mxu0
        %v1387 = vadd.f32 %v1135, %v1386
        %v1388 = vpop.f32.mrf.mxu0
        %v1389 = vadd.f32 %v1135, %v1388
        %1390 = vmatmul.bf16.gmra.mxu0 %v1115
        %v1391 = vpop.f32.mrf.mxu0
        %v1392 = vadd.f32 %v1135, %v1391
        %v1393 = vpop.f32.mrf.mxu0
        %v1394 = vadd.f32 %v1135, %v1393
        %1395 = vdwg.mxu0
        %v1396 = vmax.f32 %v1228, 0.0
        %v1397 = vmax.f32 %v1317, 0.0
        %v1398 = vmax.f32 %v1230, 0.0
        %v1399 = vmax.f32 %v1319, 0.0
        %v1400 = vmax.f32 %v1233, 0.0
        %v1401 = vmax.f32 %v1322, 0.0
        %v1402 = vmax.f32 %v1235, 0.0
        %v1403 = vmax.f32 %v1324, 0.0
        %v1404 = vmax.f32 %v1238, 0.0
        %v1405 = vmax.f32 %v1327, 0.0
        %v1406 = vmax.f32 %v1240, 0.0
        %v1407 = vmax.f32 %v1329, 0.0
        %v1408 = vmax.f32 %v1243, 0.0
        %v1409 = vmax.f32 %v1332, 0.0
        %v1410 = vmax.f32 %v1245, 0.0
        %v1411 = vmax.f32 %v1334, 0.0
        %v1412 = vmax.f32 %v1248, 0.0
        %v1413 = vmax.f32 %v1337, 0.0
        %v1414 = vmax.f32 %v1250, 0.0
        %v1415 = vmax.f32 %v1339, 0.0
        %v1416 = vmax.f32 %v1253, 0.0
        %v1417 = vmax.f32 %v1342, 0.0
        %v1418 = vmax.f32 %v1255, 0.0
        %v1419 = vmax.f32 %v1344, 0.0
        %v1420 = vmax.f32 %v1258, 0.0
        %v1421 = vmax.f32 %v1347, 0.0
        %v1422 = vmax.f32 %v1260, 0.0
        %v1423 = vmax.f32 %v1349, 0.0
        %v1424 = vmax.f32 %v1263, 0.0
        %v1425 = vmax.f32 %v1352, 0.0
        %v1426 = vmax.f32 %v1265, 0.0
        %v1427 = vmax.f32 %v1354, 0.0
        %v1428 = vmax.f32 %v1268, 0.0
        %v1429 = vmax.f32 %v1357, 0.0
        %v1430 = vmax.f32 %v1270, 0.0
        %v1431 = vmax.f32 %v1359, 0.0
        %v1432 = vmax.f32 %v1273, 0.0
        %v1433 = vmax.f32 %v1362, 0.0
        %v1434 = vmax.f32 %v1275, 0.0
        %v1435 = vmax.f32 %v1364, 0.0
        %v1436 = vmax.f32 %v1278, 0.0
        %v1437 = vmax.f32 %v1367, 0.0
        %v1438 = vmax.f32 %v1280, 0.0
        %v1439 = vmax.f32 %v1369, 0.0
        %v1440 = vmax.f32 %v1283, 0.0
        %v1441 = vmax.f32 %v1372, 0.0
        %v1442 = vmax.f32 %v1285, 0.0
        %v1443 = vmax.f32 %v1374, 0.0
        %v1444 = vmax.f32 %v1288, 0.0
        %v1445 = vmax.f32 %v1377, 0.0
        %v1446 = vmax.f32 %v1290, 0.0
        %v1447 = vmax.f32 %v1379, 0.0
        %v1448 = vmax.f32 %v1293, 0.0
        %v1449 = vmax.f32 %v1382, 0.0
        %v1450 = vmax.f32 %v1295, 0.0
        %v1451 = vmax.f32 %v1384, 0.0
        %v1452 = vmax.f32 %v1298, 0.0
        %v1453 = vmax.f32 %v1387, 0.0
        %v1454 = vmax.f32 %v1300, 0.0
        %v1455 = vmax.f32 %v1389, 0.0
        %v1456 = vmax.f32 %v1303, 0.0
        %v1457 = vmax.f32 %v1392, 0.0
        %v1458 = vmax.f32 %v1305, 0.0
        %v1459 = vmax.f32 %v1394, 0.0
        %v1460 = vpack.c.bf16 %v1398, %v1396
        %v1461 = vpack.c.bf16 %v1399, %v1397
        %v1462 = vpack.c.bf16 %v1402, %v1400
        %v1463 = vpack.c.bf16 %v1403, %v1401
        %v1464 = vpack.c.bf16 %v1406, %v1404
        %v1465 = vpack.c.bf16 %v1407, %v1405
        %v1466 = vpack.c.bf16 %v1410, %v1408
        %v1467 = vpack.c.bf16 %v1411, %v1409
        %v1468 = vpack.c.bf16 %v1414, %v1412
        %v1469 = vpack.c.bf16 %v1415, %v1413
        %v1470 = vpack.c.bf16 %v1418, %v1416
        %v1471 = vpack.c.bf16 %v1419, %v1417
        %v1472 = vpack.c.bf16 %v1422, %v1420
        %v1473 = vpack.c.bf16 %v1423, %v1421
        %v1474 = vpack.c.bf16 %v1426, %v1424
        %v1475 = vpack.c.bf16 %v1427, %v1425
        %v1476 = vpack.c.bf16 %v1430, %v1428
        %v1477 = vpack.c.bf16 %v1431, %v1429
        %v1478 = vpack.c.bf16 %v1434, %v1432
        %v1479 = vpack.c.bf16 %v1435, %v1433
        %v1480 = vpack.c.bf16 %v1438, %v1436
        %v1481 = vpack.c.bf16 %v1439, %v1437
        %v1482 = vpack.c.bf16 %v1442, %v1440
        %v1483 = vpack.c.bf16 %v1443, %v1441
        %v1484 = vpack.c.bf16 %v1446, %v1444
        %v1485 = vpack.c.bf16 %v1447, %v1445
        %v1486 = vpack.c.bf16 %v1450, %v1448
        %v1487 = vpack.c.bf16 %v1451, %v1449
        %v1488 = vpack.c.bf16 %v1454, %v1452
        %v1489 = vpack.c.bf16 %v1455, %v1453
        %v1490 = vpack.c.bf16 %v1458, %v1456
        %v1491 = vpack.c.bf16 %v1459, %v1457
        %v1492 = vld [vmem:[#allocation8] sm:$0xf]
        %v1493 = vld [vmem:[#allocation8 + $0x4] sm:$0xf]
        %v1494 = vld [vmem:[#allocation8 + $0x8] sm:$0xf]
        %v1495 = vld [vmem:[#allocation8 + $0xc] sm:$0xf]
        %v1496 = vld [vmem:[#allocation8 + $0x10] sm:$0xf]
        %v1497 = vld [vmem:[#allocation8 + $0x14] sm:$0xf]
        %v1498 = vld [vmem:[#allocation8 + $0x18] sm:$0xf]
        %v1499 = vld [vmem:[#allocation8 + $0x1c] sm:$0xf]
        %v1500 = vld [vmem:[#allocation8 + $0x20] sm:$0xf]
        %v1501 = vld [vmem:[#allocation8 + $0x24] sm:$0xf]
        %v1502 = vld [vmem:[#allocation8 + $0x28] sm:$0xf]
        %v1503 = vld [vmem:[#allocation8 + $0x2c] sm:$0xf]
        %v1504 = vld [vmem:[#allocation8 + $0x30] sm:$0xf]
        %v1505 = vld [vmem:[#allocation8 + $0x34] sm:$0xf]
        %v1506 = vld [vmem:[#allocation8 + $0x38] sm:$0xf]
        %v1507 = vld [vmem:[#allocation8 + $0x3c] sm:$0xf]
        %v1508 = vld [vmem:[#allocation8 + $0x40] sm:$0xf]
        %v1509 = vld [vmem:[#allocation8 + $0x44] sm:$0xf]
        %v1510 = vld [vmem:[#allocation8 + $0x48] sm:$0xf]
        %v1511 = vld [vmem:[#allocation8 + $0x4c] sm:$0xf]
        %v1512 = vld [vmem:[#allocation8 + $0x50] sm:$0xf]
        %v1513 = vld [vmem:[#allocation8 + $0x54] sm:$0xf]
        %v1514 = vld [vmem:[#allocation8 + $0x58] sm:$0xf]
        %v1515 = vld [vmem:[#allocation8 + $0x5c] sm:$0xf]
        %v1516 = vld [vmem:[#allocation8 + $0x60] sm:$0xf]
        %v1517 = vld [vmem:[#allocation8 + $0x64] sm:$0xf]
        %v1518 = vld [vmem:[#allocation8 + $0x68] sm:$0xf]
        %v1519 = vld [vmem:[#allocation8 + $0x6c] sm:$0xf]
        %v1520 = vld [vmem:[#allocation8 + $0x70] sm:$0xf]
        %v1521 = vld [vmem:[#allocation8 + $0x74] sm:$0xf]
        %v1522 = vld [vmem:[#allocation8 + $0x78] sm:$0xf]
        %v1523 = vld [vmem:[#allocation8 + $0x7c] sm:$0xf]
        %v1524 = vld [vmem:[%s6] sm:$0x1]
        %v1526 = vperm.slane %v1524, 0
        %v1560 = vunpack.c.l.b16 %v1492
        %v1561 = vunpack.c.l.b16 %v1493
        %v1562 = vunpack.c.l.b16 %v1494
        %v1563 = vunpack.c.l.b16 %v1495
        %v1564 = vunpack.c.l.b16 %v1496
        %v1565 = vunpack.c.l.b16 %v1497
        %v1566 = vunpack.c.l.b16 %v1498
        %v1567 = vunpack.c.l.b16 %v1499
        %v1568 = vunpack.c.l.b16 %v1500
        %v1569 = vunpack.c.l.b16 %v1501
        %v1570 = vunpack.c.l.b16 %v1502
        %v1571 = vunpack.c.l.b16 %v1503
        %v1572 = vunpack.c.l.b16 %v1504
        %v1573 = vunpack.c.l.b16 %v1505
        %v1574 = vunpack.c.l.b16 %v1506
        %v1575 = vunpack.c.l.b16 %v1507
        %v1576 = vunpack.c.l.b16 %v1508
        %v1577 = vunpack.c.l.b16 %v1509
        %v1578 = vunpack.c.l.b16 %v1510
        %v1579 = vunpack.c.l.b16 %v1511
        %v1580 = vunpack.c.l.b16 %v1512
        %v1581 = vunpack.c.l.b16 %v1513
        %v1582 = vunpack.c.l.b16 %v1514
        %v1583 = vunpack.c.l.b16 %v1515
        %v1584 = vunpack.c.l.b16 %v1516
        %v1585 = vunpack.c.l.b16 %v1517
        %v1586 = vunpack.c.l.b16 %v1518
        %v1587 = vunpack.c.l.b16 %v1519
        %v1588 = vunpack.c.l.b16 %v1520
        %v1589 = vunpack.c.l.b16 %v1521
        %v1590 = vunpack.c.l.b16 %v1522
        %v1591 = vunpack.c.l.b16 %v1523
        %v1592 = vpack.c.b16 %v1561, %v1560
        %v1593 = vpack.c.b16 %v1563, %v1562
        %v1594 = vpack.c.b16 %v1565, %v1564
        %v1595 = vpack.c.b16 %v1567, %v1566
        %v1596 = vpack.c.b16 %v1569, %v1568
        %v1597 = vpack.c.b16 %v1571, %v1570
        %v1598 = vpack.c.b16 %v1573, %v1572
        %v1599 = vpack.c.b16 %v1575, %v1574
        %v1600 = vpack.c.b16 %v1577, %v1576
        %v1601 = vpack.c.b16 %v1579, %v1578
        %v1602 = vpack.c.b16 %v1581, %v1580
        %v1603 = vpack.c.b16 %v1583, %v1582
        %v1604 = vpack.c.b16 %v1585, %v1584
        %v1605 = vpack.c.b16 %v1587, %v1586
        %v1606 = vpack.c.b16 %v1589, %v1588
        %v1607 = vpack.c.b16 %v1591, %v1590
        %1624 = vmatpush.bf16.msra.mxu0 %v1599
        %1625 = vmatpush.bf16.msra.mxu0 %v1598
        %1626 = vmatpush.bf16.msra.mxu0 %v1597
        %1627 = vmatpush.bf16.msra.mxu0 %v1596
        %1628 = vmatpush.bf16.msra.mxu0 %v1595
        %1629 = vmatpush.bf16.msra.mxu0 %v1594
        %1630 = vmatpush.bf16.msra.mxu0 %v1593
        %1631 = vmatpush.bf16.msra.mxu0 %v1592
        %1632 = vmatmul.bf16.gmra.mxu0 %v1460
        %v1633 = vpop.f32.mrf.mxu0
        %v1634 = vadd.f32 %v1526, %v1633
        %v1635 = vpop.f32.mrf.mxu0
        %v1636 = vadd.f32 %v1526, %v1635
        %1637 = vmatmul.bf16.gmra.mxu0 %v1462
        %v1638 = vpop.f32.mrf.mxu0
        %v1639 = vadd.f32 %v1526, %v1638
        %v1640 = vpop.f32.mrf.mxu0
        %v1641 = vadd.f32 %v1526, %v1640
        %1642 = vmatmul.bf16.gmra.mxu0 %v1464
        %v1643 = vpop.f32.mrf.mxu0
        %v1644 = vadd.f32 %v1526, %v1643
        %v1645 = vpop.f32.mrf.mxu0
        %v1646 = vadd.f32 %v1526, %v1645
        %1647 = vmatmul.bf16.gmra.mxu0 %v1466
        %v1648 = vpop.f32.mrf.mxu0
        %v1649 = vadd.f32 %v1526, %v1648
        %v1650 = vpop.f32.mrf.mxu0
        %v1651 = vadd.f32 %v1526, %v1650
        %1652 = vmatmul.bf16.gmra.mxu0 %v1468
        %v1653 = vpop.f32.mrf.mxu0
        %v1654 = vadd.f32 %v1526, %v1653
        %v1655 = vpop.f32.mrf.mxu0
        %v1656 = vadd.f32 %v1526, %v1655
        %1657 = vmatmul.bf16.gmra.mxu0 %v1470
        %v1658 = vpop.f32.mrf.mxu0
        %v1659 = vadd.f32 %v1526, %v1658
        %v1660 = vpop.f32.mrf.mxu0
        %v1661 = vadd.f32 %v1526, %v1660
        %1662 = vmatmul.bf16.gmra.mxu0 %v1472
        %v1663 = vpop.f32.mrf.mxu0
        %v1664 = vadd.f32 %v1526, %v1663
        %v1665 = vpop.f32.mrf.mxu0
        %v1666 = vadd.f32 %v1526, %v1665
        %1667 = vmatmul.bf16.gmra.mxu0 %v1474
        %v1668 = vpop.f32.mrf.mxu0
        %v1669 = vadd.f32 %v1526, %v1668
        %v1670 = vpop.f32.mrf.mxu0
        %v1671 = vadd.f32 %v1526, %v1670
        %1672 = vmatmul.bf16.gmra.mxu0 %v1476
        %v1673 = vpop.f32.mrf.mxu0
        %v1674 = vadd.f32 %v1526, %v1673
        %v1675 = vpop.f32.mrf.mxu0
        %v1676 = vadd.f32 %v1526, %v1675
        %1677 = vmatmul.bf16.gmra.mxu0 %v1478
        %v1678 = vpop.f32.mrf.mxu0
        %v1679 = vadd.f32 %v1526, %v1678
        %v1680 = vpop.f32.mrf.mxu0
        %v1681 = vadd.f32 %v1526, %v1680
        %1682 = vmatmul.bf16.gmra.mxu0 %v1480
        %v1683 = vpop.f32.mrf.mxu0
        %v1684 = vadd.f32 %v1526, %v1683
        %v1685 = vpop.f32.mrf.mxu0
        %v1686 = vadd.f32 %v1526, %v1685
        %1687 = vmatmul.bf16.gmra.mxu0 %v1482
        %v1688 = vpop.f32.mrf.mxu0
        %v1689 = vadd.f32 %v1526, %v1688
        %v1690 = vpop.f32.mrf.mxu0
        %v1691 = vadd.f32 %v1526, %v1690
        %1692 = vmatmul.bf16.gmra.mxu0 %v1484
        %v1693 = vpop.f32.mrf.mxu0
        %v1694 = vadd.f32 %v1526, %v1693
        %v1695 = vpop.f32.mrf.mxu0
        %v1696 = vadd.f32 %v1526, %v1695
        %1697 = vmatmul.bf16.gmra.mxu0 %v1486
        %v1698 = vpop.f32.mrf.mxu0
        %v1699 = vadd.f32 %v1526, %v1698
        %v1700 = vpop.f32.mrf.mxu0
        %v1701 = vadd.f32 %v1526, %v1700
        %1702 = vmatmul.bf16.gmra.mxu0 %v1488
        %v1703 = vpop.f32.mrf.mxu0
        %v1704 = vadd.f32 %v1526, %v1703
        %v1705 = vpop.f32.mrf.mxu0
        %v1706 = vadd.f32 %v1526, %v1705
        %1707 = vmatmul.bf16.gmra.mxu0 %v1490
        %v1708 = vpop.f32.mrf.mxu0
        %v1709 = vadd.f32 %v1526, %v1708
        %v1710 = vpop.f32.mrf.mxu0
        %v1711 = vadd.f32 %v1526, %v1710
        %1712 = vdwg.mxu0
        %1713 = vmatpush.bf16.msra.mxu0 %v1607
        %1714 = vmatpush.bf16.msra.mxu0 %v1606
        %1715 = vmatpush.bf16.msra.mxu0 %v1605
        %1716 = vmatpush.bf16.msra.mxu0 %v1604
        %1717 = vmatpush.bf16.msra.mxu0 %v1603
        %1718 = vmatpush.bf16.msra.mxu0 %v1602
        %1719 = vmatpush.bf16.msra.mxu0 %v1601
        %1720 = vmatpush.bf16.msra.mxu0 %v1600
        %1721 = vmatmul.bf16.gmra.mxu0 %v1461
        %v1722 = vpop.f32.mrf.mxu0
        %v1723 = vadd.f32 %v1634, %v1722
        %v1724 = vpop.f32.mrf.mxu0
        %v1725 = vadd.f32 %v1636, %v1724
        %1726 = vmatmul.bf16.gmra.mxu0 %v1463
        %v1727 = vpop.f32.mrf.mxu0
        %v1728 = vadd.f32 %v1639, %v1727
        %v1729 = vpop.f32.mrf.mxu0
        %v1730 = vadd.f32 %v1641, %v1729
        %1731 = vmatmul.bf16.gmra.mxu0 %v1465
        %v1732 = vpop.f32.mrf.mxu0
        %v1733 = vadd.f32 %v1644, %v1732
        %v1734 = vpop.f32.mrf.mxu0
        %v1735 = vadd.f32 %v1646, %v1734
        %1736 = vmatmul.bf16.gmra.mxu0 %v1467
        %v1737 = vpop.f32.mrf.mxu0
        %v1738 = vadd.f32 %v1649, %v1737
        %v1739 = vpop.f32.mrf.mxu0
        %v1740 = vadd.f32 %v1651, %v1739
        %1741 = vmatmul.bf16.gmra.mxu0 %v1469
        %v1742 = vpop.f32.mrf.mxu0
        %v1743 = vadd.f32 %v1654, %v1742
        %v1744 = vpop.f32.mrf.mxu0
        %v1745 = vadd.f32 %v1656, %v1744
        %1746 = vmatmul.bf16.gmra.mxu0 %v1471
        %v1747 = vpop.f32.mrf.mxu0
        %v1748 = vadd.f32 %v1659, %v1747
        %v1749 = vpop.f32.mrf.mxu0
        %v1750 = vadd.f32 %v1661, %v1749
        %1751 = vmatmul.bf16.gmra.mxu0 %v1473
        %v1752 = vpop.f32.mrf.mxu0
        %v1753 = vadd.f32 %v1664, %v1752
        %v1754 = vpop.f32.mrf.mxu0
        %v1755 = vadd.f32 %v1666, %v1754
        %1756 = vmatmul.bf16.gmra.mxu0 %v1475
        %v1757 = vpop.f32.mrf.mxu0
        %v1758 = vadd.f32 %v1669, %v1757
        %v1759 = vpop.f32.mrf.mxu0
        %v1760 = vadd.f32 %v1671, %v1759
        %1761 = vmatmul.bf16.gmra.mxu0 %v1477
        %v1762 = vpop.f32.mrf.mxu0
        %v1763 = vadd.f32 %v1674, %v1762
        %v1764 = vpop.f32.mrf.mxu0
        %v1765 = vadd.f32 %v1676, %v1764
        %1766 = vmatmul.bf16.gmra.mxu0 %v1479
        %v1767 = vpop.f32.mrf.mxu0
        %v1768 = vadd.f32 %v1679, %v1767
        %v1769 = vpop.f32.mrf.mxu0
        %v1770 = vadd.f32 %v1681, %v1769
        %1771 = vmatmul.bf16.gmra.mxu0 %v1481
        %v1772 = vpop.f32.mrf.mxu0
        %v1773 = vadd.f32 %v1684, %v1772
        %v1774 = vpop.f32.mrf.mxu0
        %v1775 = vadd.f32 %v1686, %v1774
        %1776 = vmatmul.bf16.gmra.mxu0 %v1483
        %v1777 = vpop.f32.mrf.mxu0
        %v1778 = vadd.f32 %v1689, %v1777
        %v1779 = vpop.f32.mrf.mxu0
        %v1780 = vadd.f32 %v1691, %v1779
        %1781 = vmatmul.bf16.gmra.mxu0 %v1485
        %v1782 = vpop.f32.mrf.mxu0
        %v1783 = vadd.f32 %v1694, %v1782
        %v1784 = vpop.f32.mrf.mxu0
        %v1785 = vadd.f32 %v1696, %v1784
        %1786 = vmatmul.bf16.gmra.mxu0 %v1487
        %v1787 = vpop.f32.mrf.mxu0
        %v1788 = vadd.f32 %v1699, %v1787
        %v1789 = vpop.f32.mrf.mxu0
        %v1790 = vadd.f32 %v1701, %v1789
        %1791 = vmatmul.bf16.gmra.mxu0 %v1489
        %v1792 = vpop.f32.mrf.mxu0
        %v1793 = vadd.f32 %v1704, %v1792
        %v1794 = vpop.f32.mrf.mxu0
        %v1795 = vadd.f32 %v1706, %v1794
        %1796 = vmatmul.bf16.gmra.mxu0 %v1491
        %v1797 = vpop.f32.mrf.mxu0
        %v1798 = vadd.f32 %v1709, %v1797
        %v1799 = vpop.f32.mrf.mxu0
        %v1800 = vadd.f32 %v1711, %v1799
        %1801 = vdwg.mxu0
        %v1802 = vadd.f32 %v349, %v1723
        %v1803 = vadd.f32 %v350, %v1725
        %v1804 = vadd.f32 %v351, %v1728
        %v1805 = vadd.f32 %v352, %v1730
        %v1806 = vadd.f32 %v353, %v1733
        %v1807 = vadd.f32 %v354, %v1735
        %v1808 = vadd.f32 %v355, %v1738
        %v1809 = vadd.f32 %v356, %v1740
        %v1810 = vadd.f32 %v357, %v1743
        %v1811 = vadd.f32 %v358, %v1745
        %v1812 = vadd.f32 %v359, %v1748
        %v1813 = vadd.f32 %v360, %v1750
        %v1814 = vadd.f32 %v361, %v1753
        %v1815 = vadd.f32 %v362, %v1755
        %v1816 = vadd.f32 %v363, %v1758
        %v1817 = vadd.f32 %v364, %v1760
        %v1818 = vadd.f32 %v365, %v1763
        %v1819 = vadd.f32 %v366, %v1765
        %v1820 = vadd.f32 %v367, %v1768
        %v1821 = vadd.f32 %v368, %v1770
        %v1822 = vadd.f32 %v369, %v1773
        %v1823 = vadd.f32 %v370, %v1775
        %v1824 = vadd.f32 %v371, %v1778
        %v1825 = vadd.f32 %v372, %v1780
        %v1826 = vadd.f32 %v373, %v1783
        %v1827 = vadd.f32 %v374, %v1785
        %v1828 = vadd.f32 %v375, %v1788
        %v1829 = vadd.f32 %v376, %v1790
        %v1830 = vadd.f32 %v377, %v1793
        %v1831 = vadd.f32 %v378, %v1795
        %v1832 = vadd.f32 %v379, %v1798
        %v1833 = vadd.f32 %v380, %v1800
        %1834 = vst [vmem:[%s346] sm:$0xff] %v1802
        %1835 = vst [vmem:[%s346 + $0x8] sm:$0xff] %v1803
        %1836 = vst [vmem:[%s346 + $0x10] sm:$0xff] %v1804
        %1837 = vst [vmem:[%s346 + $0x18] sm:$0xff] %v1805
        %1838 = vst [vmem:[%s346 + $0x20] sm:$0xff] %v1806
        %1839 = vst [vmem:[%s346 + $0x28] sm:$0xff] %v1807
        %1840 = vst [vmem:[%s346 + $0x30] sm:$0xff] %v1808
        %1841 = vst [vmem:[%s346 + $0x38] sm:$0xff] %v1809
        %1842 = vst [vmem:[%s346 + $0x40] sm:$0xff] %v1810
        %1843 = vst [vmem:[%s346 + $0x48] sm:$0xff] %v1811
        %1844 = vst [vmem:[%s346 + $0x50] sm:$0xff] %v1812
        %1845 = vst [vmem:[%s346 + $0x58] sm:$0xff] %v1813
        %1846 = vst [vmem:[%s346 + $0x60] sm:$0xff] %v1814
        %1847 = vst [vmem:[%s346 + $0x68] sm:$0xff] %v1815
        %1848 = vst [vmem:[%s346 + $0x70] sm:$0xff] %v1816
        %1849 = vst [vmem:[%s346 + $0x78] sm:$0xff] %v1817
        %1850 = vst [vmem:[%s346 + $0x80] sm:$0xff] %v1818
        %1851 = vst [vmem:[%s346 + $0x88] sm:$0xff] %v1819
        %1852 = vst [vmem:[%s346 + $0x90] sm:$0xff] %v1820
        %1853 = vst [vmem:[%s346 + $0x98] sm:$0xff] %v1821
        %1854 = vst [vmem:[%s346 + $0xa0] sm:$0xff] %v1822
        %1855 = vst [vmem:[%s346 + $0xa8] sm:$0xff] %v1823
        %1856 = vst [vmem:[%s346 + $0xb0] sm:$0xff] %v1824
        %1857 = vst [vmem:[%s346 + $0xb8] sm:$0xff] %v1825
        %1858 = vst [vmem:[%s346 + $0xc0] sm:$0xff] %v1826
        %1859 = vst [vmem:[%s346 + $0xc8] sm:$0xff] %v1827
        %1860 = vst [vmem:[%s346 + $0xd0] sm:$0xff] %v1828
        %1861 = vst [vmem:[%s346 + $0xd8] sm:$0xff] %v1829
        %1862 = vst [vmem:[%s346 + $0xe0] sm:$0xff] %v1830
        %1863 = vst [vmem:[%s346 + $0xe8] sm:$0xff] %v1831
        %1864 = vst [vmem:[%s346 + $0xf0] sm:$0xff] %v1832
        %1865 = vst [vmem:[%s346 + $0xf8] sm:$0xff] %v1833
        %s1866 = sand.u32 %s186, 1
        %s1867 = scalar_lea.sflag [#allocation4], %s1866
        %s1868 = sand.u32 %s186, 1
        %s1869 = smul.addr %s1868, 256
        %s1870 = scalar_lea.vmem [#allocation10], %s1869
        // Predicated region
        $region65: #{tpu_custom_call.1} parent=47 // pred_check
          %p1871 = pneg %p196
        $region66: #{tpu_custom_call.1} parent=47 // pred_check_branch
          %1873 = sbr.rel (%p1871) target = $region68
        $region67: #{tpu_custom_call.1} parent=47 // pred_region
          %s1874 = smul.u32 32, %s26
          %1876 = vsyncadd %s1867, 0
          %s1877 = smul.addr %s1874, 8
          %s1878 = scalar_lea.hbm %s7, %s1877
          %s1879 = sshll.u32 %s1870, 4
          %s1880 = int_to_ptr.vmem [resolvable:$true] %s1879
          %s1881 = sshll.u32 %s1878, 4
          %s1882 = int_to_ptr.hbm [resolvable:$true] %s1881
          %1887 = dma.vmem_to_hbm [thread:$0]  %s1880, 4096, %s1882, %s1867, 128, 128, 8
        $region68: #{tpu_custom_call.1} parent=47 // pred_fallthru
          _
      $region48: #{tpu_custom_call.1} parent=5 // pred_fallthru
        _
      %p1888 = scmp.le.s32.totalorder 2, %s21
      // Predicated region
      $region69: #{tpu_custom_call.1} parent=5 // pred_check
        %p1889 = pneg %p1888
      $region70: #{tpu_custom_call.1} parent=5 // pred_check_branch
        %1891 = sbr.rel (%p1889) target = $region72
      $region71: #{tpu_custom_call.1} parent=5 // pred_region
        %s1892 = ssub.s32 %s21, 2
        // Predicated region
        $region73: #{tpu_custom_call.1} parent=71 // pred_check
          %p1893 = pneg %p202
        $region74: #{tpu_custom_call.1} parent=71 // pred_check_branch
          %1895 = sbr.rel (%p1893) target = $region76
        $region75: #{tpu_custom_call.1} parent=71 // pred_region
          %s1896 = sand.u32 %s187, 1
          %s1897 = scalar_lea.sflag [#allocation4], %s1896
          %s1898 = sand.u32 %s187, 1
          %s1899 = smul.addr %s1898, 256
          %s1900 = scalar_lea.vmem [#allocation10], %s1899
          %1902 = dma.done %s1897, 4096
        $region76: #{tpu_custom_call.1} parent=71 // pred_fallthru
          _
      $region72: #{tpu_custom_call.1} parent=5 // pred_fallthru
        _
    $region6: #{tpu_custom_call.1} parent=1 // loop_footer
      %s25 = sadd.s32 1, %s21
    $region7: #{tpu_custom_call.1} parent=1 // loop_footer_branch
      %20 = sbr.rel target = $region3
    $region8: #{tpu_custom_call.1} parent=1 // loop_exit
      _
    %1903 = vsyncpa [#allocation3], 1
    %s1904 = scalar_lea.sflag [#allocation3], 1
    %1905 = vsyncpa %s1904, 1
    %1906 = vsyncpa [#allocation6], 1
    %1907 = vsyncpa [#allocation9], 1
    %1908 = vsyncpa [#allocation4], 1
    %s1909 = scalar_lea.sflag [#allocation4], 1
    %1910 = vsyncpa %s1909, 1

</llo_original>
